<compile_context>
chip_gen: v7x
topology: tpu7x:2x2x1
jax: 0.10.0
libtpu: 0.0.40
codegen_flags: <defaults>
</compile_context>

<pallas_src>
import jax
import jax.numpy as jnp
from jax.experimental import pallas as pl
from jax.experimental.pallas import tpu as pltpu


# --------------------------------------------------------------------------
# Network geometry (fixed by the PyTorch module: fc1 expects 16*5*5 inputs).
# --------------------------------------------------------------------------
IN_C, IN_H, IN_W = 3, 32, 32
K = 5
C1 = 6
H1, W1 = IN_H - K + 1, IN_W - K + 1          # 28, 28
P1H, P1W = H1 // 2, W1 // 2                  # 14, 14
C2 = 16
H2, W2 = P1H - K + 1, P1W - K + 1            # 10, 10
P2H, P2W = H2 // 2, W2 // 2                  # 5, 5
F1, F2, F3 = 120, 84, 2


# --------------------------------------------------------------------------
# Fused Pallas kernel: full CNet forward for one image per grid step.
# Activation layout: rows = spatial height, lanes = width*channels.
# --------------------------------------------------------------------------
def _cnet_fused_kernel(x_ref, bw1_ref, b1_ref, pr1_ref, pc1_ref,
                       bw2_ref, b2_ref, pr2_ref, pc2_ref,
                       wf1_ref, bf1_ref, wf2_ref, bf2_ref,
                       wf3_ref, bf3_ref,
                       out_ref, p1_ref, p2_ref):
    f32 = jnp.float32

    # ---- conv1 + bias + ReLU  ->  a1[oh, ow*C1 + oc], shape (28, 168) ----
    a1 = jnp.dot(x_ref[0, 0:H1, :], bw1_ref[0], preferred_element_type=f32)
    for i in range(1, K):
        a1 = a1 + jnp.dot(x_ref[0, i:i + H1, :], bw1_ref[i],
                          preferred_element_type=f32)
    a1 = jnp.maximum(a1 + b1_ref[...], 0.0)

    # ---- 2x2 max-pool #1: rows via left selection, lanes via right ----
    h1 = jnp.maximum(jnp.dot(pr1_ref[0], a1, preferred_element_type=f32),
                     jnp.dot(pr1_ref[1], a1, preferred_element_type=f32))
    p1_ref[...] = jnp.maximum(
        jnp.dot(h1, pc1_ref[0], preferred_element_type=f32),
        jnp.dot(h1, pc1_ref[1], preferred_element_type=f32))      # (14, 84)

    # ---- conv2 + bias + ReLU -> a2[oh, ow*C2 + oc], shape (10, 160) ----
    a2 = jnp.dot(p1_ref[0:H2, :], bw2_ref[0], preferred_element_type=f32)
    for i in range(1, K):
        a2 = a2 + jnp.dot(p1_ref[i:i + H2, :], bw2_ref[i],
                          preferred_element_type=f32)
    a2 = jnp.maximum(a2 + b2_ref[...], 0.0)

    # ---- 2x2 max-pool #2 -> (5, 80) ----
    h2 = jnp.maximum(jnp.dot(pr2_ref[0], a2, preferred_element_type=f32),
                     jnp.dot(pr2_ref[1], a2, preferred_element_type=f32))
    p2_ref[...] = jnp.maximum(
        jnp.dot(h2, pc2_ref[0], preferred_element_type=f32),
        jnp.dot(h2, pc2_ref[1], preferred_element_type=f32))      # (5, 80)

    # ---- fc1 (+ReLU); torch.flatten(C,H,W) order folded into wf1 packing ----
    f1 = bf1_ref[...]
    for h in range(P2H):
        f1 = f1 + jnp.dot(p2_ref[h:h + 1, :], wf1_ref[h],
                          preferred_element_type=f32)
    f1 = jnp.maximum(f1, 0.0)                                     # (1, 120)

    # ---- fc2 (+ReLU), fc3 ----
    f2 = jnp.maximum(
        jnp.dot(f1, wf2_ref[...], preferred_element_type=f32) + bf2_ref[...],
        0.0)                                                      # (1, 84)
    out_ref[0] = (jnp.dot(f2, wf3_ref[...], preferred_element_type=f32)
                  + bf3_ref[...])                                 # (1, 2)


# --------------------------------------------------------------------------
# One-time weight packing (done OUTSIDE the jitted forward).
# --------------------------------------------------------------------------
def _band_conv_weights(w, w_in):
    """(OC, IC, K, K) conv weight -> (K, w_in*IC, ow*OC) block-banded matrices.

    band[i, w*IC + c, ow*OC + oc] == w[oc, c, i, w - ow]  for 0 <= w-ow < K,
    so  out[oh, ow*OC+oc] = sum_i x[oh+i, :] @ band[i]  is the valid conv.
    """
    n_oc, n_ic, kh, kw = w.shape
    ow_n = w_in - kw + 1
    wt = jnp.transpose(w.astype(jnp.float32), (2, 3, 1, 0))       # (kh,kw,ic,oc)
    wi = jnp.arange(w_in)[:, None]
    owi = jnp.arange(ow_n)[None, :]
    j = wi - owi                                                  # (w_in, ow_n)
    valid = ((j >= 0) & (j < kw)).astype(jnp.float32)
    jc = jnp.clip(j, 0, kw - 1)
    band = wt[:, jc]                                              # (kh,w_in,ow_n,ic,oc)
    band = band * valid[None, :, :, None, None]
    band = jnp.transpose(band, (0, 1, 3, 2, 4))                   # (kh,w_in,ic,ow_n,oc)
    return band.reshape(kh, w_in * n_ic, ow_n * n_oc)


def _pool_selectors(n_in, n_ch):
    """2x2 max-pool as selection matmuls: rows (left) and lanes (right)."""
    n_out = n_in // 2
    src = jnp.arange(n_in)[:, None]
    dst = jnp.arange(n_out)[None, :]
    even = (src == 2 * dst).astype(jnp.float32)                   # (n_in, n_out)
    odd = (src == 2 * dst + 1).astype(jnp.float32)
    eye = jnp.eye(n_ch, dtype=jnp.float32)
    rows = jnp.stack([even.T, odd.T])                             # (2, n_out, n_in)
    cols = jnp.stack([jnp.kron(even, eye), jnp.kron(odd, eye)])   # (2, n_in*ch, n_out*ch)
    return rows, cols


def pack_params(p):
    """Repack PyTorch-layout params into kernel-ready matrices (call once)."""
    f32 = jnp.float32
    bw1 = _band_conv_weights(p["conv1_w"], IN_W)                  # (5, 96, 168)
    bw2 = _band_conv_weights(p["conv2_w"], P1W)                   # (5, 84, 160)
    b1 = jnp.tile(p["conv1_b"].astype(f32), W1)[None, :]          # (1, 168)
    b2 = jnp.tile(p["conv2_b"].astype(f32), W2)[None, :]          # (1, 160)
    pr1, pc1 = _pool_selectors(W1, C1)                            # (2,14,28), (2,168,84)
    pr2, pc2 = _pool_selectors(W2, C2)                            # (2,5,10),  (2,160,80)
    # fc1: flat index in torch order is c*25 + h*5 + w; our lanes are w*16+c.
    wf1 = (p["fc1_w"].astype(f32).reshape(F1, C2, P2H, P2W)
           .transpose(2, 3, 1, 0).reshape(P2H, P2W * C2, F1))     # (5, 80, 120)
    bf1 = p["fc1_b"].astype(f32)[None, :]
    wf2 = p["fc2_w"].astype(f32).T                                # (120, 84)
    bf2 = p["fc2_b"].astype(f32)[None, :]
    wf3 = p["fc3_w"].astype(f32).T                                # (84, 2)
    bf3 = p["fc3_b"].astype(f32)[None, :]
    return (bw1, b1, pr1, pc1, bw2, b2, pr2, pc2,
            wf1, bf1, wf2, bf2, wf3, bf3)


# --------------------------------------------------------------------------
# Forward pass: one fused pallas_call, grid over the batch (parallel).
# --------------------------------------------------------------------------
def _const_index_map(ndim):
    return lambda b: (0,) * ndim


def _resident_spec(arr):
    # Same block every grid step -> weight stays resident in VMEM.
    return pl.BlockSpec(arr.shape, _const_index_map(arr.ndim))


def cnet_forward(packed, x):
    B = x.shape[0]
    # NCHW -> (B, H, W*C) with lane index w*C + c (cheap layout op in XLA).
    xw = x.astype(jnp.float32).transpose(0, 2, 3, 1).reshape(B, IN_H, IN_W * IN_C)

    in_specs = [pl.BlockSpec((1, IN_H, IN_W * IN_C), lambda b: (b, 0, 0))]
    in_specs += [_resident_spec(w) for w in packed]

    out = pl.pallas_call(
        _cnet_fused_kernel,
        out_shape=jax.ShapeDtypeStruct((B, 1, F3), jnp.float32),
        grid=(B,),
        in_specs=in_specs,
        out_specs=pl.BlockSpec((1, 1, F3), lambda b: (b, 0, 0)),
        scratch_shapes=[pltpu.VMEM((P1H, P1W * C1), jnp.float32),
                        pltpu.VMEM((P2H, P2W * C2), jnp.float32)],
        compiler_params=pltpu.CompilerParams(
            dimension_semantics=("parallel",)),
    )(xw, *packed)
    return out.reshape(B, F3)


# --------------------------------------------------------------------------
# Parameters (PyTorch-style U(-1/sqrt(fan_in), 1/sqrt(fan_in)) init)
# --------------------------------------------------------------------------
def init_params(key):
    ks = jax.random.split(key, 10)

    def u(k, shape, fan_in):
        bound = 1.0 / float(fan_in) ** 0.5
        return jax.random.uniform(k, shape, jnp.float32, -bound, bound)

    return {
        "conv1_w": u(ks[0], (C1, IN_C, K, K), IN_C * K * K),
        "conv1_b": u(ks[1], (C1,), IN_C * K * K),
        "conv2_w": u(ks[2], (C2, C1, K, K), C1 * K * K),
        "conv2_b": u(ks[3], (C2,), C1 * K * K),
        "fc1_w":   u(ks[4], (F1, C2 * P2H * P2W), C2 * P2H * P2W),
        "fc1_b":   u(ks[5], (F1,), C2 * P2H * P2W),
        "fc2_w":   u(ks[6], (F2, F1), F1),
        "fc2_b":   u(ks[7], (F2,), F1),
        "fc3_w":   u(ks[8], (F3, F2), F2),
        "fc3_b":   u(ks[9], (F3,), F2),
    }


# --------------------------------------------------------------------------
# Main
# --------------------------------------------------------------------------
if __name__ == "__main__":
    key = jax.random.PRNGKey(0)
    x_key, p_key = jax.random.split(key)

    # 32x32 spatial is required by fc1's 16*5*5 input dimension.
    x = jax.random.normal(x_key, (2, IN_C, IN_H, IN_W), dtype=jnp.float32)
    params = init_params(p_key)
    packed = pack_params(params)          # one-time repack, outside jit

    fwd = jax.jit(cnet_forward)
    out = jax.block_until_ready(fwd(packed, x))

    assert out.shape == (2, F3), out.shape
    assert out.dtype == jnp.float32, out.dtype
    print("KERNEL_OK")
</pallas_src>

<mosaic_0001>
module attributes {stable_mosaic.version = 11 : i64} {
  func.func @_cnet_fused_kernel(%arg0: i32, %arg1: memref<1x32x96xf32, #tpu.memory_space<vmem>>, %arg2: memref<5x96x168xf32, #tpu.memory_space<vmem>>, %arg3: memref<1x168xf32, #tpu.memory_space<vmem>>, %arg4: memref<2x14x28xf32, #tpu.memory_space<vmem>>, %arg5: memref<2x168x84xf32, #tpu.memory_space<vmem>>, %arg6: memref<5x84x160xf32, #tpu.memory_space<vmem>>, %arg7: memref<1x160xf32, #tpu.memory_space<vmem>>, %arg8: memref<2x5x10xf32, #tpu.memory_space<vmem>>, %arg9: memref<2x160x80xf32, #tpu.memory_space<vmem>>, %arg10: memref<5x80x120xf32, #tpu.memory_space<vmem>>, %arg11: memref<1x120xf32, #tpu.memory_space<vmem>>, %arg12: memref<120x84xf32, #tpu.memory_space<vmem>>, %arg13: memref<1x84xf32, #tpu.memory_space<vmem>>, %arg14: memref<84x2xf32, #tpu.memory_space<vmem>>, %arg15: memref<1x2xf32, #tpu.memory_space<vmem>>, %arg16: memref<1x1x2xf32, #tpu.memory_space<vmem>>, %arg17: memref<14x84xf32, #tpu.memory_space<vmem>>, %arg18: memref<5x80xf32, #tpu.memory_space<vmem>>) attributes {dimension_semantics = [#tpu.dimension_semantics<parallel>], iteration_bounds = array<i64: 2>, scalar_prefetch = 0 : i64, scratch_operands = 2 : i64, tpu.core_type = #tpu.core_type<tc>, window_params = [{transform_indices = @transform_0, window_bounds = array<i64: 1, 32, 96>}, {pipeline_mode = #tpu.pipeline_mode<synchronous>, transform_indices = @transform_1, window_bounds = array<i64: 5, 96, 168>}, {pipeline_mode = #tpu.pipeline_mode<synchronous>, transform_indices = @transform_2, window_bounds = array<i64: 1, 168>}, {pipeline_mode = #tpu.pipeline_mode<synchronous>, transform_indices = @transform_3, window_bounds = array<i64: 2, 14, 28>}, {pipeline_mode = #tpu.pipeline_mode<synchronous>, transform_indices = @transform_4, window_bounds = array<i64: 2, 168, 84>}, {pipeline_mode = #tpu.pipeline_mode<synchronous>, transform_indices = @transform_5, window_bounds = array<i64: 5, 84, 160>}, {pipeline_mode = #tpu.pipeline_mode<synchronous>, transform_indices = @transform_6, window_bounds = array<i64: 1, 160>}, {pipeline_mode = #tpu.pipeline_mode<synchronous>, transform_indices = @transform_7, window_bounds = array<i64: 2, 5, 10>}, {pipeline_mode = #tpu.pipeline_mode<synchronous>, transform_indices = @transform_8, window_bounds = array<i64: 2, 160, 80>}, {pipeline_mode = #tpu.pipeline_mode<synchronous>, transform_indices = @transform_9, window_bounds = array<i64: 5, 80, 120>}, {pipeline_mode = #tpu.pipeline_mode<synchronous>, transform_indices = @transform_10, window_bounds = array<i64: 1, 120>}, {pipeline_mode = #tpu.pipeline_mode<synchronous>, transform_indices = @transform_11, window_bounds = array<i64: 120, 84>}, {pipeline_mode = #tpu.pipeline_mode<synchronous>, transform_indices = @transform_12, window_bounds = array<i64: 1, 84>}, {pipeline_mode = #tpu.pipeline_mode<synchronous>, transform_indices = @transform_13, window_bounds = array<i64: 84, 2>}, {pipeline_mode = #tpu.pipeline_mode<synchronous>, transform_indices = @transform_14, window_bounds = array<i64: 1, 2>}, {transform_indices = @transform_15, window_bounds = array<i64: 1, 1, 2>}]} {
    %c0 = arith.constant 0 : index
    %c0_0 = arith.constant 0 : index
    %c0_1 = arith.constant 0 : index
    %0 = vector.load %arg1[%c0, %c0_0, %c0_1] : memref<1x32x96xf32, #tpu.memory_space<vmem>>, vector<1x28x96xf32>
    %1 = vector.shape_cast %0 : vector<1x28x96xf32> to vector<28x96xf32>
    %c0_2 = arith.constant 0 : index
    %c0_3 = arith.constant 0 : index
    %c0_4 = arith.constant 0 : index
    %2 = vector.load %arg2[%c0_2, %c0_3, %c0_4] : memref<5x96x168xf32, #tpu.memory_space<vmem>>, vector<1x96x168xf32>
    %3 = vector.shape_cast %2 : vector<1x96x168xf32> to vector<96x168xf32>
    %cst = arith.constant dense<0.000000e+00> : vector<28x168xf32>
    %4 = tpu.matmul %1, %3, %cst {dimension_numbers = #tpu.dot_dimension_numbers<[1], [0], [0], [1], [0, 0, 1, 1], [], []>} : vector<28x96xf32>, vector<96x168xf32>, vector<28x168xf32> -> vector<28x168xf32>
    %c0_5 = arith.constant 0 : index
    %c1 = arith.constant 1 : index
    %c0_6 = arith.constant 0 : index
    %5 = vector.load %arg1[%c0_5, %c1, %c0_6] : memref<1x32x96xf32, #tpu.memory_space<vmem>>, vector<1x28x96xf32>
    %6 = vector.shape_cast %5 : vector<1x28x96xf32> to vector<28x96xf32>
    %c1_7 = arith.constant 1 : index
    %c0_8 = arith.constant 0 : index
    %c0_9 = arith.constant 0 : index
    %7 = vector.load %arg2[%c1_7, %c0_8, %c0_9] : memref<5x96x168xf32, #tpu.memory_space<vmem>>, vector<1x96x168xf32>
    %8 = vector.shape_cast %7 : vector<1x96x168xf32> to vector<96x168xf32>
    %cst_10 = arith.constant dense<0.000000e+00> : vector<28x168xf32>
    %9 = tpu.matmul %6, %8, %cst_10 {dimension_numbers = #tpu.dot_dimension_numbers<[1], [0], [0], [1], [0, 0, 1, 1], [], []>} : vector<28x96xf32>, vector<96x168xf32>, vector<28x168xf32> -> vector<28x168xf32>
    %10 = arith.addf %4, %9 : vector<28x168xf32>
    %c0_11 = arith.constant 0 : index
    %c2 = arith.constant 2 : index
    %c0_12 = arith.constant 0 : index
    %11 = vector.load %arg1[%c0_11, %c2, %c0_12] : memref<1x32x96xf32, #tpu.memory_space<vmem>>, vector<1x28x96xf32>
    %12 = vector.shape_cast %11 : vector<1x28x96xf32> to vector<28x96xf32>
    %c2_13 = arith.constant 2 : index
    %c0_14 = arith.constant 0 : index
    %c0_15 = arith.constant 0 : index
    %13 = vector.load %arg2[%c2_13, %c0_14, %c0_15] : memref<5x96x168xf32, #tpu.memory_space<vmem>>, vector<1x96x168xf32>
    %14 = vector.shape_cast %13 : vector<1x96x168xf32> to vector<96x168xf32>
    %cst_16 = arith.constant dense<0.000000e+00> : vector<28x168xf32>
    %15 = tpu.matmul %12, %14, %cst_16 {dimension_numbers = #tpu.dot_dimension_numbers<[1], [0], [0], [1], [0, 0, 1, 1], [], []>} : vector<28x96xf32>, vector<96x168xf32>, vector<28x168xf32> -> vector<28x168xf32>
    %16 = arith.addf %10, %15 : vector<28x168xf32>
    %c0_17 = arith.constant 0 : index
    %c3 = arith.constant 3 : index
    %c0_18 = arith.constant 0 : index
    %17 = vector.load %arg1[%c0_17, %c3, %c0_18] : memref<1x32x96xf32, #tpu.memory_space<vmem>>, vector<1x28x96xf32>
    %18 = vector.shape_cast %17 : vector<1x28x96xf32> to vector<28x96xf32>
    %c3_19 = arith.constant 3 : index
    %c0_20 = arith.constant 0 : index
    %c0_21 = arith.constant 0 : index
    %19 = vector.load %arg2[%c3_19, %c0_20, %c0_21] : memref<5x96x168xf32, #tpu.memory_space<vmem>>, vector<1x96x168xf32>
    %20 = vector.shape_cast %19 : vector<1x96x168xf32> to vector<96x168xf32>
    %cst_22 = arith.constant dense<0.000000e+00> : vector<28x168xf32>
    %21 = tpu.matmul %18, %20, %cst_22 {dimension_numbers = #tpu.dot_dimension_numbers<[1], [0], [0], [1], [0, 0, 1, 1], [], []>} : vector<28x96xf32>, vector<96x168xf32>, vector<28x168xf32> -> vector<28x168xf32>
    %22 = arith.addf %16, %21 : vector<28x168xf32>
    %c0_23 = arith.constant 0 : index
    %c4 = arith.constant 4 : index
    %c0_24 = arith.constant 0 : index
    %23 = vector.load %arg1[%c0_23, %c4, %c0_24] : memref<1x32x96xf32, #tpu.memory_space<vmem>>, vector<1x28x96xf32>
    %24 = vector.shape_cast %23 : vector<1x28x96xf32> to vector<28x96xf32>
    %c4_25 = arith.constant 4 : index
    %c0_26 = arith.constant 0 : index
    %c0_27 = arith.constant 0 : index
    %25 = vector.load %arg2[%c4_25, %c0_26, %c0_27] : memref<5x96x168xf32, #tpu.memory_space<vmem>>, vector<1x96x168xf32>
    %26 = vector.shape_cast %25 : vector<1x96x168xf32> to vector<96x168xf32>
    %cst_28 = arith.constant dense<0.000000e+00> : vector<28x168xf32>
    %27 = tpu.matmul %24, %26, %cst_28 {dimension_numbers = #tpu.dot_dimension_numbers<[1], [0], [0], [1], [0, 0, 1, 1], [], []>} : vector<28x96xf32>, vector<96x168xf32>, vector<28x168xf32> -> vector<28x168xf32>
    %28 = arith.addf %22, %27 : vector<28x168xf32>
    %c0_29 = arith.constant 0 : index
    %c0_30 = arith.constant 0 : index
    %29 = vector.load %arg3[%c0_29, %c0_30] : memref<1x168xf32, #tpu.memory_space<vmem>>, vector<1x168xf32>
    %30 = vector.broadcast %29 : vector<1x168xf32> to vector<28x168xf32>
    %31 = arith.addf %28, %30 : vector<28x168xf32>
    %cst_31 = arith.constant 0.000000e+00 : f32
    %32 = vector.broadcast %cst_31 : f32 to vector<28x168xf32>
    %33 = arith.maximumf %31, %32 : vector<28x168xf32>
    %c0_32 = arith.constant 0 : index
    %c0_33 = arith.constant 0 : index
    %c0_34 = arith.constant 0 : index
    %34 = vector.load %arg4[%c0_32, %c0_33, %c0_34] : memref<2x14x28xf32, #tpu.memory_space<vmem>>, vector<1x14x28xf32>
    %35 = vector.shape_cast %34 : vector<1x14x28xf32> to vector<14x28xf32>
    %cst_35 = arith.constant dense<0.000000e+00> : vector<14x168xf32>
    %36 = tpu.matmul %35, %33, %cst_35 {dimension_numbers = #tpu.dot_dimension_numbers<[1], [0], [0], [1], [0, 0, 1, 1], [], []>} : vector<14x28xf32>, vector<28x168xf32>, vector<14x168xf32> -> vector<14x168xf32>
    %c1_36 = arith.constant 1 : index
    %c0_37 = arith.constant 0 : index
    %c0_38 = arith.constant 0 : index
    %37 = vector.load %arg4[%c1_36, %c0_37, %c0_38] : memref<2x14x28xf32, #tpu.memory_space<vmem>>, vector<1x14x28xf32>
    %38 = vector.shape_cast %37 : vector<1x14x28xf32> to vector<14x28xf32>
    %cst_39 = arith.constant dense<0.000000e+00> : vector<14x168xf32>
    %39 = tpu.matmul %38, %33, %cst_39 {dimension_numbers = #tpu.dot_dimension_numbers<[1], [0], [0], [1], [0, 0, 1, 1], [], []>} : vector<14x28xf32>, vector<28x168xf32>, vector<14x168xf32> -> vector<14x168xf32>
    %40 = arith.maximumf %36, %39 : vector<14x168xf32>
    %c0_40 = arith.constant 0 : index
    %c0_41 = arith.constant 0 : index
    %c0_42 = arith.constant 0 : index
    %41 = vector.load %arg5[%c0_40, %c0_41, %c0_42] : memref<2x168x84xf32, #tpu.memory_space<vmem>>, vector<1x168x84xf32>
    %42 = vector.shape_cast %41 : vector<1x168x84xf32> to vector<168x84xf32>
    %cst_43 = arith.constant dense<0.000000e+00> : vector<14x84xf32>
    %43 = tpu.matmul %40, %42, %cst_43 {dimension_numbers = #tpu.dot_dimension_numbers<[1], [0], [0], [1], [0, 0, 1, 1], [], []>} : vector<14x168xf32>, vector<168x84xf32>, vector<14x84xf32> -> vector<14x84xf32>
    %c1_44 = arith.constant 1 : index
    %c0_45 = arith.constant 0 : index
    %c0_46 = arith.constant 0 : index
    %44 = vector.load %arg5[%c1_44, %c0_45, %c0_46] : memref<2x168x84xf32, #tpu.memory_space<vmem>>, vector<1x168x84xf32>
    %45 = vector.shape_cast %44 : vector<1x168x84xf32> to vector<168x84xf32>
    %cst_47 = arith.constant dense<0.000000e+00> : vector<14x84xf32>
    %46 = tpu.matmul %40, %45, %cst_47 {dimension_numbers = #tpu.dot_dimension_numbers<[1], [0], [0], [1], [0, 0, 1, 1], [], []>} : vector<14x168xf32>, vector<168x84xf32>, vector<14x84xf32> -> vector<14x84xf32>
    %47 = arith.maximumf %43, %46 : vector<14x84xf32>
    %c0_48 = arith.constant 0 : index
    %c0_49 = arith.constant 0 : index
    %48 = vector.load %arg17[%c0_48, %c0_49] : memref<14x84xf32, #tpu.memory_space<vmem>>, vector<14x84xf32>
    tpu.vector_store %arg17[%c0_48, %c0_49], %47 {strides = array<i32>} : memref<14x84xf32, #tpu.memory_space<vmem>>, vector<14x84xf32>,
    %c0_50 = arith.constant 0 : index
    %c0_51 = arith.constant 0 : index
    %49 = vector.load %arg17[%c0_50, %c0_51] : memref<14x84xf32, #tpu.memory_space<vmem>>, vector<10x84xf32>
    %c0_52 = arith.constant 0 : index
    %c0_53 = arith.constant 0 : index
    %c0_54 = arith.constant 0 : index
    %50 = vector.load %arg6[%c0_52, %c0_53, %c0_54] : memref<5x84x160xf32, #tpu.memory_space<vmem>>, vector<1x84x160xf32>
    %51 = vector.shape_cast %50 : vector<1x84x160xf32> to vector<84x160xf32>
    %cst_55 = arith.constant dense<0.000000e+00> : vector<10x160xf32>
    %52 = tpu.matmul %49, %51, %cst_55 {dimension_numbers = #tpu.dot_dimension_numbers<[1], [0], [0], [1], [0, 0, 1, 1], [], []>} : vector<10x84xf32>, vector<84x160xf32>, vector<10x160xf32> -> vector<10x160xf32>
    %c1_56 = arith.constant 1 : index
    %c0_57 = arith.constant 0 : index
    %53 = vector.load %arg17[%c1_56, %c0_57] : memref<14x84xf32, #tpu.memory_space<vmem>>, vector<10x84xf32>
    %c1_58 = arith.constant 1 : index
    %c0_59 = arith.constant 0 : index
    %c0_60 = arith.constant 0 : index
    %54 = vector.load %arg6[%c1_58, %c0_59, %c0_60] : memref<5x84x160xf32, #tpu.memory_space<vmem>>, vector<1x84x160xf32>
    %55 = vector.shape_cast %54 : vector<1x84x160xf32> to vector<84x160xf32>
    %cst_61 = arith.constant dense<0.000000e+00> : vector<10x160xf32>
    %56 = tpu.matmul %53, %55, %cst_61 {dimension_numbers = #tpu.dot_dimension_numbers<[1], [0], [0], [1], [0, 0, 1, 1], [], []>} : vector<10x84xf32>, vector<84x160xf32>, vector<10x160xf32> -> vector<10x160xf32>
    %57 = arith.addf %52, %56 : vector<10x160xf32>
    %c2_62 = arith.constant 2 : index
    %c0_63 = arith.constant 0 : index
    %58 = vector.load %arg17[%c2_62, %c0_63] : memref<14x84xf32, #tpu.memory_space<vmem>>, vector<10x84xf32>
    %c2_64 = arith.constant 2 : index
    %c0_65 = arith.constant 0 : index
    %c0_66 = arith.constant 0 : index
    %59 = vector.load %arg6[%c2_64, %c0_65, %c0_66] : memref<5x84x160xf32, #tpu.memory_space<vmem>>, vector<1x84x160xf32>
    %60 = vector.shape_cast %59 : vector<1x84x160xf32> to vector<84x160xf32>
    %cst_67 = arith.constant dense<0.000000e+00> : vector<10x160xf32>
    %61 = tpu.matmul %58, %60, %cst_67 {dimension_numbers = #tpu.dot_dimension_numbers<[1], [0], [0], [1], [0, 0, 1, 1], [], []>} : vector<10x84xf32>, vector<84x160xf32>, vector<10x160xf32> -> vector<10x160xf32>
    %62 = arith.addf %57, %61 : vector<10x160xf32>
    %c3_68 = arith.constant 3 : index
    %c0_69 = arith.constant 0 : index
    %63 = vector.load %arg17[%c3_68, %c0_69] : memref<14x84xf32, #tpu.memory_space<vmem>>, vector<10x84xf32>
    %c3_70 = arith.constant 3 : index
    %c0_71 = arith.constant 0 : index
    %c0_72 = arith.constant 0 : index
    %64 = vector.load %arg6[%c3_70, %c0_71, %c0_72] : memref<5x84x160xf32, #tpu.memory_space<vmem>>, vector<1x84x160xf32>
    %65 = vector.shape_cast %64 : vector<1x84x160xf32> to vector<84x160xf32>
    %cst_73 = arith.constant dense<0.000000e+00> : vector<10x160xf32>
    %66 = tpu.matmul %63, %65, %cst_73 {dimension_numbers = #tpu.dot_dimension_numbers<[1], [0], [0], [1], [0, 0, 1, 1], [], []>} : vector<10x84xf32>, vector<84x160xf32>, vector<10x160xf32> -> vector<10x160xf32>
    %67 = arith.addf %62, %66 : vector<10x160xf32>
    %c4_74 = arith.constant 4 : index
    %c0_75 = arith.constant 0 : index
    %68 = vector.load %arg17[%c4_74, %c0_75] : memref<14x84xf32, #tpu.memory_space<vmem>>, vector<10x84xf32>
    %c4_76 = arith.constant 4 : index
    %c0_77 = arith.constant 0 : index
    %c0_78 = arith.constant 0 : index
    %69 = vector.load %arg6[%c4_76, %c0_77, %c0_78] : memref<5x84x160xf32, #tpu.memory_space<vmem>>, vector<1x84x160xf32>
    %70 = vector.shape_cast %69 : vector<1x84x160xf32> to vector<84x160xf32>
    %cst_79 = arith.constant dense<0.000000e+00> : vector<10x160xf32>
    %71 = tpu.matmul %68, %70, %cst_79 {dimension_numbers = #tpu.dot_dimension_numbers<[1], [0], [0], [1], [0, 0, 1, 1], [], []>} : vector<10x84xf32>, vector<84x160xf32>, vector<10x160xf32> -> vector<10x160xf32>
    %72 = arith.addf %67, %71 : vector<10x160xf32>
    %c0_80 = arith.constant 0 : index
    %c0_81 = arith.constant 0 : index
    %73 = vector.load %arg7[%c0_80, %c0_81] : memref<1x160xf32, #tpu.memory_space<vmem>>, vector<1x160xf32>
    %74 = vector.broadcast %73 : vector<1x160xf32> to vector<10x160xf32>
    %75 = arith.addf %72, %74 : vector<10x160xf32>
    %cst_82 = arith.constant 0.000000e+00 : f32
    %76 = vector.broadcast %cst_82 : f32 to vector<10x160xf32>
    %77 = arith.maximumf %75, %76 : vector<10x160xf32>
    %c0_83 = arith.constant 0 : index
    %c0_84 = arith.constant 0 : index
    %c0_85 = arith.constant 0 : index
    %78 = vector.load %arg8[%c0_83, %c0_84, %c0_85] : memref<2x5x10xf32, #tpu.memory_space<vmem>>, vector<1x5x10xf32>
    %79 = vector.shape_cast %78 : vector<1x5x10xf32> to vector<5x10xf32>
    %cst_86 = arith.constant dense<0.000000e+00> : vector<5x160xf32>
    %80 = tpu.matmul %79, %77, %cst_86 {dimension_numbers = #tpu.dot_dimension_numbers<[1], [0], [0], [1], [0, 0, 1, 1], [], []>} : vector<5x10xf32>, vector<10x160xf32>, vector<5x160xf32> -> vector<5x160xf32>
    %c1_87 = arith.constant 1 : index
    %c0_88 = arith.constant 0 : index
    %c0_89 = arith.constant 0 : index
    %81 = vector.load %arg8[%c1_87, %c0_88, %c0_89] : memref<2x5x10xf32, #tpu.memory_space<vmem>>, vector<1x5x10xf32>
    %82 = vector.shape_cast %81 : vector<1x5x10xf32> to vector<5x10xf32>
    %cst_90 = arith.constant dense<0.000000e+00> : vector<5x160xf32>
    %83 = tpu.matmul %82, %77, %cst_90 {dimension_numbers = #tpu.dot_dimension_numbers<[1], [0], [0], [1], [0, 0, 1, 1], [], []>} : vector<5x10xf32>, vector<10x160xf32>, vector<5x160xf32> -> vector<5x160xf32>
    %84 = arith.maximumf %80, %83 : vector<5x160xf32>
    %c0_91 = arith.constant 0 : index
    %c0_92 = arith.constant 0 : index
    %c0_93 = arith.constant 0 : index
    %85 = vector.load %arg9[%c0_91, %c0_92, %c0_93] : memref<2x160x80xf32, #tpu.memory_space<vmem>>, vector<1x160x80xf32>
    %86 = vector.shape_cast %85 : vector<1x160x80xf32> to vector<160x80xf32>
    %cst_94 = arith.constant dense<0.000000e+00> : vector<5x80xf32>
    %87 = tpu.matmul %84, %86, %cst_94 {dimension_numbers = #tpu.dot_dimension_numbers<[1], [0], [0], [1], [0, 0, 1, 1], [], []>} : vector<5x160xf32>, vector<160x80xf32>, vector<5x80xf32> -> vector<5x80xf32>
    %c1_95 = arith.constant 1 : index
    %c0_96 = arith.constant 0 : index
    %c0_97 = arith.constant 0 : index
    %88 = vector.load %arg9[%c1_95, %c0_96, %c0_97] : memref<2x160x80xf32, #tpu.memory_space<vmem>>, vector<1x160x80xf32>
    %89 = vector.shape_cast %88 : vector<1x160x80xf32> to vector<160x80xf32>
    %cst_98 = arith.constant dense<0.000000e+00> : vector<5x80xf32>
    %90 = tpu.matmul %84, %89, %cst_98 {dimension_numbers = #tpu.dot_dimension_numbers<[1], [0], [0], [1], [0, 0, 1, 1], [], []>} : vector<5x160xf32>, vector<160x80xf32>, vector<5x80xf32> -> vector<5x80xf32>
    %91 = arith.maximumf %87, %90 : vector<5x80xf32>
    %c0_99 = arith.constant 0 : index
    %c0_100 = arith.constant 0 : index
    %92 = vector.load %arg18[%c0_99, %c0_100] : memref<5x80xf32, #tpu.memory_space<vmem>>, vector<5x80xf32>
    tpu.vector_store %arg18[%c0_99, %c0_100], %91 {strides = array<i32>} : memref<5x80xf32, #tpu.memory_space<vmem>>, vector<5x80xf32>,
    %c0_101 = arith.constant 0 : index
    %c0_102 = arith.constant 0 : index
    %93 = vector.load %arg11[%c0_101, %c0_102] : memref<1x120xf32, #tpu.memory_space<vmem>>, vector<1x120xf32>
    %c0_103 = arith.constant 0 : index
    %c0_104 = arith.constant 0 : index
    %94 = vector.load %arg18[%c0_103, %c0_104] : memref<5x80xf32, #tpu.memory_space<vmem>>, vector<1x80xf32>
    %c0_105 = arith.constant 0 : index
    %c0_106 = arith.constant 0 : index
    %c0_107 = arith.constant 0 : index
    %95 = vector.load %arg10[%c0_105, %c0_106, %c0_107] : memref<5x80x120xf32, #tpu.memory_space<vmem>>, vector<1x80x120xf32>
    %96 = vector.shape_cast %95 : vector<1x80x120xf32> to vector<80x120xf32>
    %cst_108 = arith.constant dense<0.000000e+00> : vector<1x120xf32>
    %97 = tpu.matmul %94, %96, %cst_108 {dimension_numbers = #tpu.dot_dimension_numbers<[1], [0], [0], [1], [0, 0, 1, 1], [], []>} : vector<1x80xf32>, vector<80x120xf32>, vector<1x120xf32> -> vector<1x120xf32>
    %98 = arith.addf %93, %97 : vector<1x120xf32>
    %c1_109 = arith.constant 1 : index
    %c0_110 = arith.constant 0 : index
    %99 = vector.load %arg18[%c1_109, %c0_110] : memref<5x80xf32, #tpu.memory_space<vmem>>, vector<1x80xf32>
    %c1_111 = arith.constant 1 : index
    %c0_112 = arith.constant 0 : index
    %c0_113 = arith.constant 0 : index
    %100 = vector.load %arg10[%c1_111, %c0_112, %c0_113] : memref<5x80x120xf32, #tpu.memory_space<vmem>>, vector<1x80x120xf32>
    %101 = vector.shape_cast %100 : vector<1x80x120xf32> to vector<80x120xf32>
    %cst_114 = arith.constant dense<0.000000e+00> : vector<1x120xf32>
    %102 = tpu.matmul %99, %101, %cst_114 {dimension_numbers = #tpu.dot_dimension_numbers<[1], [0], [0], [1], [0, 0, 1, 1], [], []>} : vector<1x80xf32>, vector<80x120xf32>, vector<1x120xf32> -> vector<1x120xf32>
    %103 = arith.addf %98, %102 : vector<1x120xf32>
    %c2_115 = arith.constant 2 : index
    %c0_116 = arith.constant 0 : index
    %104 = vector.load %arg18[%c2_115, %c0_116] : memref<5x80xf32, #tpu.memory_space<vmem>>, vector<1x80xf32>
    %c2_117 = arith.constant 2 : index
    %c0_118 = arith.constant 0 : index
    %c0_119 = arith.constant 0 : index
    %105 = vector.load %arg10[%c2_117, %c0_118, %c0_119] : memref<5x80x120xf32, #tpu.memory_space<vmem>>, vector<1x80x120xf32>
    %106 = vector.shape_cast %105 : vector<1x80x120xf32> to vector<80x120xf32>
    %cst_120 = arith.constant dense<0.000000e+00> : vector<1x120xf32>
    %107 = tpu.matmul %104, %106, %cst_120 {dimension_numbers = #tpu.dot_dimension_numbers<[1], [0], [0], [1], [0, 0, 1, 1], [], []>} : vector<1x80xf32>, vector<80x120xf32>, vector<1x120xf32> -> vector<1x120xf32>
    %108 = arith.addf %103, %107 : vector<1x120xf32>
    %c3_121 = arith.constant 3 : index
    %c0_122 = arith.constant 0 : index
    %109 = vector.load %arg18[%c3_121, %c0_122] : memref<5x80xf32, #tpu.memory_space<vmem>>, vector<1x80xf32>
    %c3_123 = arith.constant 3 : index
    %c0_124 = arith.constant 0 : index
    %c0_125 = arith.constant 0 : index
    %110 = vector.load %arg10[%c3_123, %c0_124, %c0_125] : memref<5x80x120xf32, #tpu.memory_space<vmem>>, vector<1x80x120xf32>
    %111 = vector.shape_cast %110 : vector<1x80x120xf32> to vector<80x120xf32>
    %cst_126 = arith.constant dense<0.000000e+00> : vector<1x120xf32>
    %112 = tpu.matmul %109, %111, %cst_126 {dimension_numbers = #tpu.dot_dimension_numbers<[1], [0], [0], [1], [0, 0, 1, 1], [], []>} : vector<1x80xf32>, vector<80x120xf32>, vector<1x120xf32> -> vector<1x120xf32>
    %113 = arith.addf %108, %112 : vector<1x120xf32>
    %c4_127 = arith.constant 4 : index
    %c0_128 = arith.constant 0 : index
    %114 = vector.load %arg18[%c4_127, %c0_128] : memref<5x80xf32, #tpu.memory_space<vmem>>, vector<1x80xf32>
    %c4_129 = arith.constant 4 : index
    %c0_130 = arith.constant 0 : index
    %c0_131 = arith.constant 0 : index
    %115 = vector.load %arg10[%c4_129, %c0_130, %c0_131] : memref<5x80x120xf32, #tpu.memory_space<vmem>>, vector<1x80x120xf32>
    %116 = vector.shape_cast %115 : vector<1x80x120xf32> to vector<80x120xf32>
    %cst_132 = arith.constant dense<0.000000e+00> : vector<1x120xf32>
    %117 = tpu.matmul %114, %116, %cst_132 {dimension_numbers = #tpu.dot_dimension_numbers<[1], [0], [0], [1], [0, 0, 1, 1], [], []>} : vector<1x80xf32>, vector<80x120xf32>, vector<1x120xf32> -> vector<1x120xf32>
    %118 = arith.addf %113, %117 : vector<1x120xf32>
    %cst_133 = arith.constant 0.000000e+00 : f32
    %119 = vector.broadcast %cst_133 : f32 to vector<1x120xf32>
    %120 = arith.maximumf %118, %119 : vector<1x120xf32>
    %c0_134 = arith.constant 0 : index
    %c0_135 = arith.constant 0 : index
    %121 = vector.load %arg12[%c0_134, %c0_135] : memref<120x84xf32, #tpu.memory_space<vmem>>, vector<120x84xf32>
    %cst_136 = arith.constant dense<0.000000e+00> : vector<1x84xf32>
    %122 = tpu.matmul %120, %121, %cst_136 {dimension_numbers = #tpu.dot_dimension_numbers<[1], [0], [0], [1], [0, 0, 1, 1], [], []>} : vector<1x120xf32>, vector<120x84xf32>, vector<1x84xf32> -> vector<1x84xf32>
    %c0_137 = arith.constant 0 : index
    %c0_138 = arith.constant 0 : index
    %123 = vector.load %arg13[%c0_137, %c0_138] : memref<1x84xf32, #tpu.memory_space<vmem>>, vector<1x84xf32>
    %124 = arith.addf %122, %123 : vector<1x84xf32>
    %cst_139 = arith.constant 0.000000e+00 : f32
    %125 = vector.broadcast %cst_139 : f32 to vector<1x84xf32>
    %126 = arith.maximumf %124, %125 : vector<1x84xf32>
    %c0_140 = arith.constant 0 : index
    %c0_141 = arith.constant 0 : index
    %127 = vector.load %arg14[%c0_140, %c0_141] : memref<84x2xf32, #tpu.memory_space<vmem>>, vector<84x2xf32>
    %cst_142 = arith.constant dense<0.000000e+00> : vector<1x2xf32>
    %128 = tpu.matmul %126, %127, %cst_142 {dimension_numbers = #tpu.dot_dimension_numbers<[1], [0], [0], [1], [0, 0, 1, 1], [], []>} : vector<1x84xf32>, vector<84x2xf32>, vector<1x2xf32> -> vector<1x2xf32>
    %c0_143 = arith.constant 0 : index
    %c0_144 = arith.constant 0 : index
    %129 = vector.load %arg15[%c0_143, %c0_144] : memref<1x2xf32, #tpu.memory_space<vmem>>, vector<1x2xf32>
    %130 = arith.addf %128, %129 : vector<1x2xf32>
    %c0_145 = arith.constant 0 : index
    %c0_146 = arith.constant 0 : index
    %c0_147 = arith.constant 0 : index
    %131 = vector.load %arg16[%c0_145, %c0_146, %c0_147] : memref<1x1x2xf32, #tpu.memory_space<vmem>>, vector<1x1x2xf32>
    %132 = vector.shape_cast %131 : vector<1x1x2xf32> to vector<1x2xf32>
    %133 = vector.shape_cast %130 : vector<1x2xf32> to vector<1x1x2xf32>
    tpu.vector_store %arg16[%c0_145, %c0_146, %c0_147], %133 {strides = array<i32>} : memref<1x1x2xf32, #tpu.memory_space<vmem>>, vector<1x1x2xf32>,
    return
  }
  func.func @transform_0(%arg0: i32) -> (i32, i32, i32) {
    %c0_i32 = arith.constant 0 : i32
    %c0_i32_0 = arith.constant 0 : i32
    %c0_i32_1 = arith.constant 0 : i32
    return %arg0, %c0_i32, %c0_i32_0 : i32, i32, i32
  }
  func.func @transform_1(%arg0: i32) -> (i32, i32, i32) {
    %c0_i32 = arith.constant 0 : i32
    %c0_i32_0 = arith.constant 0 : i32
    %c0_i32_1 = arith.constant 0 : i32
    %c0_i32_2 = arith.constant 0 : i32
    return %c0_i32, %c0_i32_0, %c0_i32_1 : i32, i32, i32
  }
  func.func @transform_2(%arg0: i32) -> (i32, i32) {
    %c0_i32 = arith.constant 0 : i32
    %c0_i32_0 = arith.constant 0 : i32
    %c0_i32_1 = arith.constant 0 : i32
    return %c0_i32, %c0_i32_0 : i32, i32
  }
  func.func @transform_3(%arg0: i32) -> (i32, i32, i32) {
    %c0_i32 = arith.constant 0 : i32
    %c0_i32_0 = arith.constant 0 : i32
    %c0_i32_1 = arith.constant 0 : i32
    %c0_i32_2 = arith.constant 0 : i32
    return %c0_i32, %c0_i32_0, %c0_i32_1 : i32, i32, i32
  }
  func.func @transform_4(%arg0: i32) -> (i32, i32, i32) {
    %c0_i32 = arith.constant 0 : i32
    %c0_i32_0 = arith.constant 0 : i32
    %c0_i32_1 = arith.constant 0 : i32
    %c0_i32_2 = arith.constant 0 : i32
    return %c0_i32, %c0_i32_0, %c0_i32_1 : i32, i32, i32
  }
  func.func @transform_5(%arg0: i32) -> (i32, i32, i32) {
    %c0_i32 = arith.constant 0 : i32
    %c0_i32_0 = arith.constant 0 : i32
    %c0_i32_1 = arith.constant 0 : i32
    %c0_i32_2 = arith.constant 0 : i32
    return %c0_i32, %c0_i32_0, %c0_i32_1 : i32, i32, i32
  }
  func.func @transform_6(%arg0: i32) -> (i32, i32) {
    %c0_i32 = arith.constant 0 : i32
    %c0_i32_0 = arith.constant 0 : i32
    %c0_i32_1 = arith.constant 0 : i32
    return %c0_i32, %c0_i32_0 : i32, i32
  }
  func.func @transform_7(%arg0: i32) -> (i32, i32, i32) {
    %c0_i32 = arith.constant 0 : i32
    %c0_i32_0 = arith.constant 0 : i32
    %c0_i32_1 = arith.constant 0 : i32
    %c0_i32_2 = arith.constant 0 : i32
    return %c0_i32, %c0_i32_0, %c0_i32_1 : i32, i32, i32
  }
  func.func @transform_8(%arg0: i32) -> (i32, i32, i32) {
    %c0_i32 = arith.constant 0 : i32
    %c0_i32_0 = arith.constant 0 : i32
    %c0_i32_1 = arith.constant 0 : i32
    %c0_i32_2 = arith.constant 0 : i32
    return %c0_i32, %c0_i32_0, %c0_i32_1 : i32, i32, i32
  }
  func.func @transform_9(%arg0: i32) -> (i32, i32, i32) {
    %c0_i32 = arith.constant 0 : i32
    %c0_i32_0 = arith.constant 0 : i32
    %c0_i32_1 = arith.constant 0 : i32
    %c0_i32_2 = arith.constant 0 : i32
    return %c0_i32, %c0_i32_0, %c0_i32_1 : i32, i32, i32
  }
  func.func @transform_10(%arg0: i32) -> (i32, i32) {
    %c0_i32 = arith.constant 0 : i32
    %c0_i32_0 = arith.constant 0 : i32
    %c0_i32_1 = arith.constant 0 : i32
    return %c0_i32, %c0_i32_0 : i32, i32
  }
  func.func @transform_11(%arg0: i32) -> (i32, i32) {
    %c0_i32 = arith.constant 0 : i32
    %c0_i32_0 = arith.constant 0 : i32
    %c0_i32_1 = arith.constant 0 : i32
    return %c0_i32, %c0_i32_0 : i32, i32
  }
  func.func @transform_12(%arg0: i32) -> (i32, i32) {
    %c0_i32 = arith.constant 0 : i32
    %c0_i32_0 = arith.constant 0 : i32
    %c0_i32_1 = arith.constant 0 : i32
    return %c0_i32, %c0_i32_0 : i32, i32
  }
  func.func @transform_13(%arg0: i32) -> (i32, i32) {
    %c0_i32 = arith.constant 0 : i32
    %c0_i32_0 = arith.constant 0 : i32
    %c0_i32_1 = arith.constant 0 : i32
    return %c0_i32, %c0_i32_0 : i32, i32
  }
  func.func @transform_14(%arg0: i32) -> (i32, i32) {
    %c0_i32 = arith.constant 0 : i32
    %c0_i32_0 = arith.constant 0 : i32
    %c0_i32_1 = arith.constant 0 : i32
    return %c0_i32, %c0_i32_0 : i32, i32
  }
  func.func @transform_15(%arg0: i32) -> (i32, i32, i32) {
    %c0_i32 = arith.constant 0 : i32
    %c0_i32_0 = arith.constant 0 : i32
    %c0_i32_1 = arith.constant 0 : i32
    return %arg0, %c0_i32, %c0_i32_0 : i32, i32, i32
  }
}

</mosaic_0001>

<llo_original>
// kernel: cnet_forward.1
$region0: #{cnet_forward.1}
  #allocation0 [shape = 'u32[]', space=smem, size = 0x4, offset = 0x4, fixed_abs, tag = 'smem constant byte address 0x4 - core index']
  #allocation1 [shape = 'u32[144,128]{1,0:T(1,128)}', space=vmem, size = 0x12000, scoped, tag = 'internal scratch']
  #allocation2 [shape = 'f32[14,84]{1,0:T(8,128)}', space=vmem, size = 0x2000, scoped, tag = 'scratch operand']
  #allocation3 [shape = 'f32[5,80]{1,0:T(8,128)}', space=vmem, size = 0x1000, scoped, tag = 'scratch operand']
  %s0 = inlined_call_operand.vmem [shape: f32[2,32,96], index: 0, kind: input, shape index: {}]
  %s1 = inlined_call_operand.vmem [shape: f32[5,96,168], index: 1, kind: input, shape index: {}]
  %s2 = inlined_call_operand.vmem [shape: f32[1,168], index: 2, kind: input, shape index: {}]
  %s3 = inlined_call_operand.vmem [shape: f32[2,14,28], index: 3, kind: input, shape index: {}]
  %s4 = inlined_call_operand.vmem [shape: f32[2,168,84], index: 4, kind: input, shape index: {}]
  %s5 = inlined_call_operand.vmem [shape: f32[5,84,160], index: 5, kind: input, shape index: {}]
  %s6 = inlined_call_operand.vmem [shape: f32[1,160], index: 6, kind: input, shape index: {}]
  %s7 = inlined_call_operand.vmem [shape: f32[2,5,10], index: 7, kind: input, shape index: {}]
  %s8 = inlined_call_operand.vmem [shape: f32[2,160,80], index: 8, kind: input, shape index: {}]
  %s9 = inlined_call_operand.vmem [shape: f32[5,80,120], index: 9, kind: input, shape index: {}]
  %s10 = inlined_call_operand.vmem [shape: f32[1,120], index: 10, kind: input, shape index: {}]
  %s11 = inlined_call_operand.vmem [shape: f32[120,84], index: 11, kind: input, shape index: {}]
  %s12 = inlined_call_operand.vmem [shape: f32[1,84], index: 12, kind: input, shape index: {}]
  %s13 = inlined_call_operand.vmem [shape: f32[84,2], index: 13, kind: input, shape index: {}]
  %s14 = inlined_call_operand.vmem [shape: f32[1,2], index: 14, kind: input, shape index: {}]
  %s15 = inlined_call_operand.hbm [shape: f32[2,1,2], index: 15, kind: output, shape index: {}]
  %s16 = sld [smem:[#allocation0]]
  $region93: #{cnet_forward.1} parent=0
    _
  %s18 = ssub.s32 1, %s16
  %s19 = scalar_select 0, %s18, %s16
  $region1: #{cnet_forward.1} parent=0
    #allocation4 [shape = 'u8[1024]{0}', space=vmem, size = 0x400, scoped, tag = 'output window, operand 0']
    #allocation5 [shape = 's32[2]{0}', space=sflag, size = 0x8, scoped, tag = 'scoped memory for cnet_forward.1']
    %20 = vsyncpa [#allocation5], 0
    %s21 = scalar_lea.sflag [#allocation5], 1
    %22 = vsyncpa %s21, 0
    loop: start=0, step=1, limit=4
    $region2: #{cnet_forward.1} parent=1 // loop_pre_header
      _
    $region3: #{cnet_forward.1} parent=1 // loop_header
      %s24 = sphi 0, %s28
      %p25 = scmp.ge.s32.totalorder %s24, 4
      %s34 = sphi 0, %s36
      %s37 = sphi 0, %s34
      %s38 = sphi 0, %s37
      %s54 = sphi 0, %s38
      %s58 = sphi 0, %s58
      %s60 = sphi 0, %s58
      %s61 = sphi 0, %s60
      %s75 = sphi 0, %s61
      %s79 = sphi 0, %s79
      %s81 = sphi 0, %s79
      %s82 = sphi 0, %s81
      %s96 = sphi 0, %s82
      %s100 = sphi 0, %s100
      %s102 = sphi 0, %s100
      %s103 = sphi 0, %s102
      %s117 = sphi 0, %s103
      %s121 = sphi 0, %s121
      %s123 = sphi 0, %s121
      %s124 = sphi 0, %s123
      %s138 = sphi 0, %s124
      %s142 = sphi 0, %s142
      %s144 = sphi 0, %s142
      %s145 = sphi 0, %s144
      %s159 = sphi 0, %s145
      %s163 = sphi 0, %s163
      %s165 = sphi 0, %s163
      %s166 = sphi 0, %s165
      %s180 = sphi 0, %s166
      %s184 = sphi 0, %s184
      %s186 = sphi 0, %s184
      %s187 = sphi 0, %s186
      %s201 = sphi 0, %s187
      %s205 = sphi 0, %s205
      %s207 = sphi 0, %s205
      %s208 = sphi 0, %s207
      %s222 = sphi 0, %s208
      %s226 = sphi 0, %s226
      %s228 = sphi 0, %s226
      %s229 = sphi 0, %s228
      %s243 = sphi 0, %s229
      %s247 = sphi 0, %s247
      %s249 = sphi 0, %s247
      %s250 = sphi 0, %s249
      %s264 = sphi 0, %s250
      %s268 = sphi 0, %s268
      %s270 = sphi 0, %s268
      %s271 = sphi 0, %s270
      %s285 = sphi 0, %s271
      %s289 = sphi 0, %s289
      %s291 = sphi 0, %s289
      %s292 = sphi 0, %s291
      %s306 = sphi 0, %s292
      %s310 = sphi 0, %s310
      %s312 = sphi 0, %s310
      %s313 = sphi 0, %s312
      %s327 = sphi 0, %s313
      %s331 = sphi 0, %s331
      %s333 = sphi 0, %s331
      %s334 = sphi 0, %s333
      %s348 = sphi 0, %s334
      %s354 = sphi 0, %s356
      %s357 = sphi 0, %s354
      %s358 = sphi 0, %s357
      %s374 = sphi 0, %s358
    $region4: #{cnet_forward.1} parent=1 // loop_header_branch
      %27 = sbr.rel (%p25) target = $region8
    $region5: #{cnet_forward.1} parent=1 // loop_body
      %s29 = ssub.s32 %s24, 1
      %s30 = ssub.s32 %s24, 2
      %s31 = sadd.s32 %s24, 1
      %s32 = ssub.s32 %s24, %s31
      %p33 = scmp.eq.s32.totalorder %s32, 0
      %s35 = sadd.s32 %s34, 1
      %s36 = scalar_select %p33, %s34, %s35
      %p39 = pneg %p33
      %p40 = scmp.eq.s32.totalorder %s24, 1
      %p41 = por %p39, %p40
      %p42 = scmp.ne.s32.totalorder %s34, %s37
      %p43 = scmp.eq.s32.totalorder %s24, 0
      %p44 = por %p42, %p43
      %p45 = scmp.ne.s32.totalorder %s34, %s37
      %p46 = scmp.eq.s32.totalorder %s29, 1
      %p47 = por %p45, %p46
      %p48 = scmp.ne.s32.totalorder %s37, %s38
      %p49 = scmp.eq.s32.totalorder %s29, 0
      %p50 = por %p48, %p49
      %p51 = scmp.ne.s32.totalorder %s37, %s38
      %p52 = scmp.eq.s32.totalorder %s30, 1
      %p53 = por %p51, %p52
      %p55 = scmp.ne.s32.totalorder %s38, %s54
      %p56 = scmp.eq.s32.totalorder %s30, 0
      %p57 = por %p55, %p56
      %s59 = sadd.s32 %s58, 1
      %p62 = scmp.eq.s32.totalorder %s24, 1
      %p63 = scmp.ne.s32.totalorder %s58, %s60
      %p64 = scmp.eq.s32.totalorder %s24, 0
      %p65 = por %p63, %p64
      %p66 = scmp.ne.s32.totalorder %s58, %s60
      %p67 = scmp.eq.s32.totalorder %s29, 1
      %p68 = por %p66, %p67
      %p69 = scmp.ne.s32.totalorder %s60, %s61
      %p70 = scmp.eq.s32.totalorder %s29, 0
      %p71 = por %p69, %p70
      %p72 = scmp.ne.s32.totalorder %s60, %s61
      %p73 = scmp.eq.s32.totalorder %s30, 1
      %p74 = por %p72, %p73
      %p76 = scmp.ne.s32.totalorder %s61, %s75
      %p77 = scmp.eq.s32.totalorder %s30, 0
      %p78 = por %p76, %p77
      %s80 = sadd.s32 %s79, 1
      %p83 = scmp.eq.s32.totalorder %s24, 1
      %p84 = scmp.ne.s32.totalorder %s79, %s81
      %p85 = scmp.eq.s32.totalorder %s24, 0
      %p86 = por %p84, %p85
      %p87 = scmp.ne.s32.totalorder %s79, %s81
      %p88 = scmp.eq.s32.totalorder %s29, 1
      %p89 = por %p87, %p88
      %p90 = scmp.ne.s32.totalorder %s81, %s82
      %p91 = scmp.eq.s32.totalorder %s29, 0
      %p92 = por %p90, %p91
      %p93 = scmp.ne.s32.totalorder %s81, %s82
      %p94 = scmp.eq.s32.totalorder %s30, 1
      %p95 = por %p93, %p94
      %p97 = scmp.ne.s32.totalorder %s82, %s96
      %p98 = scmp.eq.s32.totalorder %s30, 0
      %p99 = por %p97, %p98
      %s101 = sadd.s32 %s100, 1
      %p104 = scmp.eq.s32.totalorder %s24, 1
      %p105 = scmp.ne.s32.totalorder %s100, %s102
      %p106 = scmp.eq.s32.totalorder %s24, 0
      %p107 = por %p105, %p106
      %p108 = scmp.ne.s32.totalorder %s100, %s102
      %p109 = scmp.eq.s32.totalorder %s29, 1
      %p110 = por %p108, %p109
      %p111 = scmp.ne.s32.totalorder %s102, %s103
      %p112 = scmp.eq.s32.totalorder %s29, 0
      %p113 = por %p111, %p112
      %p114 = scmp.ne.s32.totalorder %s102, %s103
      %p115 = scmp.eq.s32.totalorder %s30, 1
      %p116 = por %p114, %p115
      %p118 = scmp.ne.s32.totalorder %s103, %s117
      %p119 = scmp.eq.s32.totalorder %s30, 0
      %p120 = por %p118, %p119
      %s122 = sadd.s32 %s121, 1
      %p125 = scmp.eq.s32.totalorder %s24, 1
      %p126 = scmp.ne.s32.totalorder %s121, %s123
      %p127 = scmp.eq.s32.totalorder %s24, 0
      %p128 = por %p126, %p127
      %p129 = scmp.ne.s32.totalorder %s121, %s123
      %p130 = scmp.eq.s32.totalorder %s29, 1
      %p131 = por %p129, %p130
      %p132 = scmp.ne.s32.totalorder %s123, %s124
      %p133 = scmp.eq.s32.totalorder %s29, 0
      %p134 = por %p132, %p133
      %p135 = scmp.ne.s32.totalorder %s123, %s124
      %p136 = scmp.eq.s32.totalorder %s30, 1
      %p137 = por %p135, %p136
      %p139 = scmp.ne.s32.totalorder %s124, %s138
      %p140 = scmp.eq.s32.totalorder %s30, 0
      %p141 = por %p139, %p140
      %s143 = sadd.s32 %s142, 1
      %p146 = scmp.eq.s32.totalorder %s24, 1
      %p147 = scmp.ne.s32.totalorder %s142, %s144
      %p148 = scmp.eq.s32.totalorder %s24, 0
      %p149 = por %p147, %p148
      %p150 = scmp.ne.s32.totalorder %s142, %s144
      %p151 = scmp.eq.s32.totalorder %s29, 1
      %p152 = por %p150, %p151
      %p153 = scmp.ne.s32.totalorder %s144, %s145
      %p154 = scmp.eq.s32.totalorder %s29, 0
      %p155 = por %p153, %p154
      %p156 = scmp.ne.s32.totalorder %s144, %s145
      %p157 = scmp.eq.s32.totalorder %s30, 1
      %p158 = por %p156, %p157
      %p160 = scmp.ne.s32.totalorder %s145, %s159
      %p161 = scmp.eq.s32.totalorder %s30, 0
      %p162 = por %p160, %p161
      %s164 = sadd.s32 %s163, 1
      %p167 = scmp.eq.s32.totalorder %s24, 1
      %p168 = scmp.ne.s32.totalorder %s163, %s165
      %p169 = scmp.eq.s32.totalorder %s24, 0
      %p170 = por %p168, %p169
      %p171 = scmp.ne.s32.totalorder %s163, %s165
      %p172 = scmp.eq.s32.totalorder %s29, 1
      %p173 = por %p171, %p172
      %p174 = scmp.ne.s32.totalorder %s165, %s166
      %p175 = scmp.eq.s32.totalorder %s29, 0
      %p176 = por %p174, %p175
      %p177 = scmp.ne.s32.totalorder %s165, %s166
      %p178 = scmp.eq.s32.totalorder %s30, 1
      %p179 = por %p177, %p178
      %p181 = scmp.ne.s32.totalorder %s166, %s180
      %p182 = scmp.eq.s32.totalorder %s30, 0
      %p183 = por %p181, %p182
      %s185 = sadd.s32 %s184, 1
      %p188 = scmp.eq.s32.totalorder %s24, 1
      %p189 = scmp.ne.s32.totalorder %s184, %s186
      %p190 = scmp.eq.s32.totalorder %s24, 0
      %p191 = por %p189, %p190
      %p192 = scmp.ne.s32.totalorder %s184, %s186
      %p193 = scmp.eq.s32.totalorder %s29, 1
      %p194 = por %p192, %p193
      %p195 = scmp.ne.s32.totalorder %s186, %s187
      %p196 = scmp.eq.s32.totalorder %s29, 0
      %p197 = por %p195, %p196
      %p198 = scmp.ne.s32.totalorder %s186, %s187
      %p199 = scmp.eq.s32.totalorder %s30, 1
      %p200 = por %p198, %p199
      %p202 = scmp.ne.s32.totalorder %s187, %s201
      %p203 = scmp.eq.s32.totalorder %s30, 0
      %p204 = por %p202, %p203
      %s206 = sadd.s32 %s205, 1
      %p209 = scmp.eq.s32.totalorder %s24, 1
      %p210 = scmp.ne.s32.totalorder %s205, %s207
      %p211 = scmp.eq.s32.totalorder %s24, 0
      %p212 = por %p210, %p211
      %p213 = scmp.ne.s32.totalorder %s205, %s207
      %p214 = scmp.eq.s32.totalorder %s29, 1
      %p215 = por %p213, %p214
      %p216 = scmp.ne.s32.totalorder %s207, %s208
      %p217 = scmp.eq.s32.totalorder %s29, 0
      %p218 = por %p216, %p217
      %p219 = scmp.ne.s32.totalorder %s207, %s208
      %p220 = scmp.eq.s32.totalorder %s30, 1
      %p221 = por %p219, %p220
      %p223 = scmp.ne.s32.totalorder %s208, %s222
      %p224 = scmp.eq.s32.totalorder %s30, 0
      %p225 = por %p223, %p224
      %s227 = sadd.s32 %s226, 1
      %p230 = scmp.eq.s32.totalorder %s24, 1
      %p231 = scmp.ne.s32.totalorder %s226, %s228
      %p232 = scmp.eq.s32.totalorder %s24, 0
      %p233 = por %p231, %p232
      %p234 = scmp.ne.s32.totalorder %s226, %s228
      %p235 = scmp.eq.s32.totalorder %s29, 1
      %p236 = por %p234, %p235
      %p237 = scmp.ne.s32.totalorder %s228, %s229
      %p238 = scmp.eq.s32.totalorder %s29, 0
      %p239 = por %p237, %p238
      %p240 = scmp.ne.s32.totalorder %s228, %s229
      %p241 = scmp.eq.s32.totalorder %s30, 1
      %p242 = por %p240, %p241
      %p244 = scmp.ne.s32.totalorder %s229, %s243
      %p245 = scmp.eq.s32.totalorder %s30, 0
      %p246 = por %p244, %p245
      %s248 = sadd.s32 %s247, 1
      %p251 = scmp.eq.s32.totalorder %s24, 1
      %p252 = scmp.ne.s32.totalorder %s247, %s249
      %p253 = scmp.eq.s32.totalorder %s24, 0
      %p254 = por %p252, %p253
      %p255 = scmp.ne.s32.totalorder %s247, %s249
      %p256 = scmp.eq.s32.totalorder %s29, 1
      %p257 = por %p255, %p256
      %p258 = scmp.ne.s32.totalorder %s249, %s250
      %p259 = scmp.eq.s32.totalorder %s29, 0
      %p260 = por %p258, %p259
      %p261 = scmp.ne.s32.totalorder %s249, %s250
      %p262 = scmp.eq.s32.totalorder %s30, 1
      %p263 = por %p261, %p262
      %p265 = scmp.ne.s32.totalorder %s250, %s264
      %p266 = scmp.eq.s32.totalorder %s30, 0
      %p267 = por %p265, %p266
      %s269 = sadd.s32 %s268, 1
      %p272 = scmp.eq.s32.totalorder %s24, 1
      %p273 = scmp.ne.s32.totalorder %s268, %s270
      %p274 = scmp.eq.s32.totalorder %s24, 0
      %p275 = por %p273, %p274
      %p276 = scmp.ne.s32.totalorder %s268, %s270
      %p277 = scmp.eq.s32.totalorder %s29, 1
      %p278 = por %p276, %p277
      %p279 = scmp.ne.s32.totalorder %s270, %s271
      %p280 = scmp.eq.s32.totalorder %s29, 0
      %p281 = por %p279, %p280
      %p282 = scmp.ne.s32.totalorder %s270, %s271
      %p283 = scmp.eq.s32.totalorder %s30, 1
      %p284 = por %p282, %p283
      %p286 = scmp.ne.s32.totalorder %s271, %s285
      %p287 = scmp.eq.s32.totalorder %s30, 0
      %p288 = por %p286, %p287
      %s290 = sadd.s32 %s289, 1
      %p293 = scmp.eq.s32.totalorder %s24, 1
      %p294 = scmp.ne.s32.totalorder %s289, %s291
      %p295 = scmp.eq.s32.totalorder %s24, 0
      %p296 = por %p294, %p295
      %p297 = scmp.ne.s32.totalorder %s289, %s291
      %p298 = scmp.eq.s32.totalorder %s29, 1
      %p299 = por %p297, %p298
      %p300 = scmp.ne.s32.totalorder %s291, %s292
      %p301 = scmp.eq.s32.totalorder %s29, 0
      %p302 = por %p300, %p301
      %p303 = scmp.ne.s32.totalorder %s291, %s292
      %p304 = scmp.eq.s32.totalorder %s30, 1
      %p305 = por %p303, %p304
      %p307 = scmp.ne.s32.totalorder %s292, %s306
      %p308 = scmp.eq.s32.totalorder %s30, 0
      %p309 = por %p307, %p308
      %s311 = sadd.s32 %s310, 1
      %p314 = scmp.eq.s32.totalorder %s24, 1
      %p315 = scmp.ne.s32.totalorder %s310, %s312
      %p316 = scmp.eq.s32.totalorder %s24, 0
      %p317 = por %p315, %p316
      %p318 = scmp.ne.s32.totalorder %s310, %s312
      %p319 = scmp.eq.s32.totalorder %s29, 1
      %p320 = por %p318, %p319
      %p321 = scmp.ne.s32.totalorder %s312, %s313
      %p322 = scmp.eq.s32.totalorder %s29, 0
      %p323 = por %p321, %p322
      %p324 = scmp.ne.s32.totalorder %s312, %s313
      %p325 = scmp.eq.s32.totalorder %s30, 1
      %p326 = por %p324, %p325
      %p328 = scmp.ne.s32.totalorder %s313, %s327
      %p329 = scmp.eq.s32.totalorder %s30, 0
      %p330 = por %p328, %p329
      %s332 = sadd.s32 %s331, 1
      %p335 = scmp.eq.s32.totalorder %s24, 1
      %p336 = scmp.ne.s32.totalorder %s331, %s333
      %p337 = scmp.eq.s32.totalorder %s24, 0
      %p338 = por %p336, %p337
      %p339 = scmp.ne.s32.totalorder %s331, %s333
      %p340 = scmp.eq.s32.totalorder %s29, 1
      %p341 = por %p339, %p340
      %p342 = scmp.ne.s32.totalorder %s333, %s334
      %p343 = scmp.eq.s32.totalorder %s29, 0
      %p344 = por %p342, %p343
      %p345 = scmp.ne.s32.totalorder %s333, %s334
      %p346 = scmp.eq.s32.totalorder %s30, 1
      %p347 = por %p345, %p346
      %p349 = scmp.ne.s32.totalorder %s334, %s348
      %p350 = scmp.eq.s32.totalorder %s30, 0
      %p351 = por %p349, %p350
      %s352 = ssub.s32 %s24, %s31
      %p353 = scmp.eq.s32.totalorder %s352, 0
      %s355 = sadd.s32 %s354, 1
      %s356 = scalar_select %p353, %s354, %s355
      %p359 = pneg %p353
      %p360 = scmp.eq.s32.totalorder %s24, 1
      %p361 = por %p359, %p360
      %p362 = scmp.ne.s32.totalorder %s354, %s357
      %p363 = scmp.eq.s32.totalorder %s24, 0
      %p364 = por %p362, %p363
      %p365 = scmp.ne.s32.totalorder %s354, %s357
      %p366 = scmp.eq.s32.totalorder %s29, 1
      %p367 = por %p365, %p366
      %p368 = scmp.ne.s32.totalorder %s357, %s358
      %p369 = scmp.eq.s32.totalorder %s29, 0
      %p370 = por %p368, %p369
      %p371 = scmp.ne.s32.totalorder %s357, %s358
      %p372 = scmp.eq.s32.totalorder %s30, 1
      %p373 = por %p371, %p372
      %p375 = scmp.ne.s32.totalorder %s358, %s374
      %p376 = scmp.eq.s32.totalorder %s30, 0
      %p377 = por %p375, %p376
      %p378 = scmp.le.s32.totalorder 1, %s24
      %p379 = scmp.lt.s32.totalorder %s24, 3
      %p380 = pnand %p378, %p379
      %p381 = pneg %p380
      // Predicated region
      $region9: #{cnet_forward.1} parent=5 // pred_check
        _
      $region10: #{cnet_forward.1} parent=5 // pred_check_branch
        %383 = sbr.rel (%p380) target = $region12
      $region11: #{cnet_forward.1} parent=5 // pred_region
        %s384 = ssub.s32 %s24, 1
        // Predicated region
        $region13: #{cnet_forward.1} parent=11 // pred_check
          %p385 = pneg %p71
        $region14: #{cnet_forward.1} parent=11 // pred_check_branch
          %387 = sbr.rel (%p385) target = $region16
        $region15: #{cnet_forward.1} parent=11 // pred_region
          _
        $region16: #{cnet_forward.1} parent=11 // pred_fallthru
          _
        // Predicated region
        $region17: #{cnet_forward.1} parent=11 // pred_check
          %p388 = pneg %p92
        $region18: #{cnet_forward.1} parent=11 // pred_check_branch
          %390 = sbr.rel (%p388) target = $region20
        $region19: #{cnet_forward.1} parent=11 // pred_region
          _
        $region20: #{cnet_forward.1} parent=11 // pred_fallthru
          _
        // Predicated region
        $region21: #{cnet_forward.1} parent=11 // pred_check
          %p391 = pneg %p113
        $region22: #{cnet_forward.1} parent=11 // pred_check_branch
          %393 = sbr.rel (%p391) target = $region24
        $region23: #{cnet_forward.1} parent=11 // pred_region
          _
        $region24: #{cnet_forward.1} parent=11 // pred_fallthru
          _
        // Predicated region
        $region25: #{cnet_forward.1} parent=11 // pred_check
          %p394 = pneg %p134
        $region26: #{cnet_forward.1} parent=11 // pred_check_branch
          %396 = sbr.rel (%p394) target = $region28
        $region27: #{cnet_forward.1} parent=11 // pred_region
          _
        $region28: #{cnet_forward.1} parent=11 // pred_fallthru
          _
        // Predicated region
        $region29: #{cnet_forward.1} parent=11 // pred_check
          %p397 = pneg %p155
        $region30: #{cnet_forward.1} parent=11 // pred_check_branch
          %399 = sbr.rel (%p397) target = $region32
        $region31: #{cnet_forward.1} parent=11 // pred_region
          _
        $region32: #{cnet_forward.1} parent=11 // pred_fallthru
          _
        // Predicated region
        $region33: #{cnet_forward.1} parent=11 // pred_check
          %p400 = pneg %p176
        $region34: #{cnet_forward.1} parent=11 // pred_check_branch
          %402 = sbr.rel (%p400) target = $region36
        $region35: #{cnet_forward.1} parent=11 // pred_region
          _
        $region36: #{cnet_forward.1} parent=11 // pred_fallthru
          _
        // Predicated region
        $region37: #{cnet_forward.1} parent=11 // pred_check
          %p403 = pneg %p197
        $region38: #{cnet_forward.1} parent=11 // pred_check_branch
          %405 = sbr.rel (%p403) target = $region40
        $region39: #{cnet_forward.1} parent=11 // pred_region
          _
        $region40: #{cnet_forward.1} parent=11 // pred_fallthru
          _
        // Predicated region
        $region41: #{cnet_forward.1} parent=11 // pred_check
          %p406 = pneg %p218
        $region42: #{cnet_forward.1} parent=11 // pred_check_branch
          %408 = sbr.rel (%p406) target = $region44
        $region43: #{cnet_forward.1} parent=11 // pred_region
          _
        $region44: #{cnet_forward.1} parent=11 // pred_fallthru
          _
        // Predicated region
        $region45: #{cnet_forward.1} parent=11 // pred_check
          %p409 = pneg %p239
        $region46: #{cnet_forward.1} parent=11 // pred_check_branch
          %411 = sbr.rel (%p409) target = $region48
        $region47: #{cnet_forward.1} parent=11 // pred_region
          _
        $region48: #{cnet_forward.1} parent=11 // pred_fallthru
          _
        // Predicated region
        $region49: #{cnet_forward.1} parent=11 // pred_check
          %p412 = pneg %p260
        $region50: #{cnet_forward.1} parent=11 // pred_check_branch
          %414 = sbr.rel (%p412) target = $region52
        $region51: #{cnet_forward.1} parent=11 // pred_region
          _
        $region52: #{cnet_forward.1} parent=11 // pred_fallthru
          _
        // Predicated region
        $region53: #{cnet_forward.1} parent=11 // pred_check
          %p415 = pneg %p281
        $region54: #{cnet_forward.1} parent=11 // pred_check_branch
          %417 = sbr.rel (%p415) target = $region56
        $region55: #{cnet_forward.1} parent=11 // pred_region
          _
        $region56: #{cnet_forward.1} parent=11 // pred_fallthru
          _
        // Predicated region
        $region57: #{cnet_forward.1} parent=11 // pred_check
          %p418 = pneg %p302
        $region58: #{cnet_forward.1} parent=11 // pred_check_branch
          %420 = sbr.rel (%p418) target = $region60
        $region59: #{cnet_forward.1} parent=11 // pred_region
          _
        $region60: #{cnet_forward.1} parent=11 // pred_fallthru
          _
        // Predicated region
        $region61: #{cnet_forward.1} parent=11 // pred_check
          %p421 = pneg %p323
        $region62: #{cnet_forward.1} parent=11 // pred_check_branch
          %423 = sbr.rel (%p421) target = $region64
        $region63: #{cnet_forward.1} parent=11 // pred_region
          _
        $region64: #{cnet_forward.1} parent=11 // pred_fallthru
          _
        // Predicated region
        $region65: #{cnet_forward.1} parent=11 // pred_check
          %p424 = pneg %p344
        $region66: #{cnet_forward.1} parent=11 // pred_check_branch
          %426 = sbr.rel (%p424) target = $region68
        $region67: #{cnet_forward.1} parent=11 // pred_region
          _
        $region68: #{cnet_forward.1} parent=11 // pred_fallthru
          _
      $region12: #{cnet_forward.1} parent=5 // pred_fallthru
        _
      %p427 = scmp.lt.s32.totalorder %s24, 2
      // Predicated region
      $region69: #{cnet_forward.1} parent=5 // pred_check
        %p428 = pneg %p427
      $region70: #{cnet_forward.1} parent=5 // pred_check_branch
        %430 = sbr.rel (%p428) target = $region72
      $region71: #{cnet_forward.1} parent=5 // pred_region
        // Predicated region
        $region73: #{cnet_forward.1} parent=71 // pred_check
          %p431 = pneg %p44
        $region74: #{cnet_forward.1} parent=71 // pred_check_branch
          %433 = sbr.rel (%p431) target = $region76
        $region75: #{cnet_forward.1} parent=71 // pred_region
          %p434 = scmp.lt.s32.totalorder %s24, 1
          %s435 = scalar_select %p434, %s24, 1
          %s436 = smul.addr %s435, 4
          %s437 = smul.addr %s436, 8
          %s438 = scalar_lea.vmem %s0, %s437
        $region76: #{cnet_forward.1} parent=71 // pred_fallthru
          _
      $region72: #{cnet_forward.1} parent=5 // pred_fallthru
        _
      %p439 = scmp.le.s32.totalorder 1, %s24
      %p440 = scmp.lt.s32.totalorder %s24, 3
      %p441 = pnand %p439, %p440
      %p442 = pneg %p441
      // Predicated region
      $region77: #{cnet_forward.1} parent=5 // pred_check
        _
      $region78: #{cnet_forward.1} parent=5 // pred_check_branch
        %444 = sbr.rel (%p441) target = $region80
      $region79: #{cnet_forward.1} parent=5 // pred_region
        %s445 = ssub.s32 %s24, 1
        %p446 = scmp.lt.s32.totalorder %s29, 1
        %s447 = scalar_select %p446, %s29, 1
        %s448 = smul.addr %s447, 4
        %s449 = smul.addr %s448, 8
        %s450 = scalar_lea.vmem %s0, %s449
        %p451 = pneg %p50
        %p452 = pneg %p47
        %p453 = pneg %p71
        %p454 = pneg %p68
        %p455 = pneg %p92
        %p456 = pneg %p89
        %p457 = pneg %p113
        %p458 = pneg %p110
        %p459 = pneg %p134
        %p460 = pneg %p131
        %p461 = pneg %p155
        %p462 = pneg %p152
        %p463 = pneg %p176
        %p464 = pneg %p173
        %p465 = pneg %p197
        %p466 = pneg %p194
        %p467 = pneg %p218
        %p468 = pneg %p215
        %p469 = pneg %p239
        %p470 = pneg %p236
        %p471 = pneg %p260
        %p472 = pneg %p257
        %p473 = pneg %p281
        %p474 = pneg %p278
        %p475 = pneg %p302
        %p476 = pneg %p299
        %p477 = pneg %p323
        %p478 = pneg %p320
        %p479 = pneg %p344
        %p480 = pneg %p341
        %p481 = pneg %p370
        %p482 = pneg %p367
        %s483 = sand.u32 %s357, 1
        %s484 = scalar_lea.sflag [#allocation5], %s483
        %s485 = sand.u32 %s357, 1
        %s486 = scalar_lea.vmem [#allocation4], %s485
        %p487 = scmp.lt.s32.totalorder %s29, 1
        %s488 = scalar_select %p487, %s29, 1
        %s489 = smul.addr %s488, 4
        %s490 = smul.addr %s489, 8
        %s491 = scalar_lea.vmem %s0, %s490
        %v492 = vld [vmem:[%s491] sm:$0xff]
        %v493 = vld [vmem:[%s491 + $0x8] sm:$0xff]
        %v494 = vld [vmem:[%s491 + $0x10] sm:$0xff]
        %v495 = vld [vmem:[%s491 + $0x18] sm:$0xf]
        %v496 = vld [vmem:[%s1] sm:$0xff]
        %v497 = vld [vmem:[%s1 + $0x8] sm:$0xff]
        %v498 = vld [vmem:[%s1 + $0x10] sm:$0xff]
        %v499 = vld [vmem:[%s1 + $0x18] sm:$0xff]
        %v500 = vld [vmem:[%s1 + $0x20] sm:$0xff]
        %v501 = vld [vmem:[%s1 + $0x28] sm:$0xff]
        %v502 = vld [vmem:[%s1 + $0x30] sm:$0xff]
        %v503 = vld [vmem:[%s1 + $0x38] sm:$0xff]
        %v504 = vld [vmem:[%s1 + $0x40] sm:$0xff]
        %v505 = vld [vmem:[%s1 + $0x48] sm:$0xff]
        %v506 = vld [vmem:[%s1 + $0x50] sm:$0xff]
        %v507 = vld [vmem:[%s1 + $0x58] sm:$0xff]
        %v508 = vld [vmem:[%s1 + $0x60] sm:$0xff]
        %v509 = vld [vmem:[%s1 + $0x68] sm:$0xff]
        %v510 = vld [vmem:[%s1 + $0x70] sm:$0xff]
        %v511 = vld [vmem:[%s1 + $0x78] sm:$0xff]
        %v512 = vld [vmem:[%s1 + $0x80] sm:$0xff]
        %v513 = vld [vmem:[%s1 + $0x88] sm:$0xff]
        %v514 = vld [vmem:[%s1 + $0x90] sm:$0xff]
        %v515 = vld [vmem:[%s1 + $0x98] sm:$0xff]
        %v516 = vld [vmem:[%s1 + $0xa0] sm:$0xff]
        %v517 = vld [vmem:[%s1 + $0xa8] sm:$0xff]
        %v518 = vld [vmem:[%s1 + $0xb0] sm:$0xff]
        %v519 = vld [vmem:[%s1 + $0xb8] sm:$0xff]
        %v520 = vld [vmem:[%s491 + $0x1] sm:$0xff]
        %v521 = vld [vmem:[%s491 + $0x9] sm:$0xff]
        %v522 = vld [vmem:[%s491 + $0x11] sm:$0xff]
        %v523 = vld [vmem:[%s491 + $0x19] sm:$0xf]
        %s524 = scalar_lea.vmem %s1, 192
        %v525 = vld [vmem:[%s524] sm:$0xff]
        %v526 = vld [vmem:[%s524 + $0x8] sm:$0xff]
        %v527 = vld [vmem:[%s524 + $0x10] sm:$0xff]
        %v528 = vld [vmem:[%s524 + $0x18] sm:$0xff]
        %v529 = vld [vmem:[%s524 + $0x20] sm:$0xff]
        %v530 = vld [vmem:[%s524 + $0x28] sm:$0xff]
        %v531 = vld [vmem:[%s524 + $0x30] sm:$0xff]
        %v532 = vld [vmem:[%s524 + $0x38] sm:$0xff]
        %v533 = vld [vmem:[%s524 + $0x40] sm:$0xff]
        %v534 = vld [vmem:[%s524 + $0x48] sm:$0xff]
        %v535 = vld [vmem:[%s524 + $0x50] sm:$0xff]
        %v536 = vld [vmem:[%s524 + $0x58] sm:$0xff]
        %v537 = vld [vmem:[%s524 + $0x60] sm:$0xff]
        %v538 = vld [vmem:[%s524 + $0x68] sm:$0xff]
        %v539 = vld [vmem:[%s524 + $0x70] sm:$0xff]
        %v540 = vld [vmem:[%s524 + $0x78] sm:$0xff]
        %v541 = vld [vmem:[%s524 + $0x80] sm:$0xff]
        %v542 = vld [vmem:[%s524 + $0x88] sm:$0xff]
        %v543 = vld [vmem:[%s524 + $0x90] sm:$0xff]
        %v544 = vld [vmem:[%s524 + $0x98] sm:$0xff]
        %v545 = vld [vmem:[%s524 + $0xa0] sm:$0xff]
        %v546 = vld [vmem:[%s524 + $0xa8] sm:$0xff]
        %v547 = vld [vmem:[%s524 + $0xb0] sm:$0xff]
        %v548 = vld [vmem:[%s524 + $0xb8] sm:$0xff]
        %vm549 = vcmask 785408
        %v551 = vsel %vm549, %v520, 0
        %v554 = vsel %vm549, %v521, 0
        %v557 = vsel %vm549, %v522, 0
        %v560 = vsel %vm549, %v523, 0
        %562 = vmatprep.subr.mxu0 %v526
        %563 = vmatpush1.msra.mxu0 %v525
        %564 = vmatprep.subr.mxu0 %v528
        %565 = vmatpush1.msra.mxu0 %v527
        %566 = vmatprep.subr.mxu0 %v530
        %567 = vmatpush1.msra.mxu0 %v529
        %568 = vmatprep.subr.mxu0 %v532
        %569 = vmatpush1.msra.mxu0 %v531
        %570 = vmatprep.subr.mxu0 %v534
        %571 = vmatpush1.msra.mxu0 %v533
        %572 = vmatprep.subr.mxu0 %v536
        %573 = vmatpush1.msra.mxu0 %v535
        %574 = vmatprep.subr.mxu0 %v538
        %575 = vmatpush1.msra.mxu0 %v537
        %576 = vmatprep.subr.mxu0 %v540
        %577 = vmatpush1.msra.mxu0 %v539
        %578 = vmatprep.subr.mxu0 %v542
        %579 = vmatpush1.msra.mxu0 %v541
        %580 = vmatprep.subr.mxu0 %v544
        %581 = vmatpush1.msra.mxu0 %v543
        %582 = vmatprep.subr.mxu0 %v546
        %583 = vmatpush1.msra.mxu0 %v545
        %584 = vmatprep.subr.mxu0 %v548
        %585 = vmatpush1.msra.mxu0 %v547
        %586 = vmatprep.subr.mxu0 0.0
        %587 = vmatpush1.msra.mxu0 0.0
        %588 = vmatprep.subr.mxu0 0.0
        %589 = vmatpush1.msra.mxu0 0.0
        %590 = vmatprep.subr.mxu0 0.0
        %591 = vmatpush1.msra.mxu0 0.0
        %592 = vmatprep.subr.mxu0 0.0
        %593 = vmatpush1.msra.mxu0 0.0
        %594 = vmatprep.subr.mxu0 0.0
        %595 = vmatpush1.msra.mxu0 0.0
        %596 = vmatprep.subr.mxu0 0.0
        %597 = vmatpush1.msra.mxu0 0.0
        %598 = vmatprep.subr.mxu0 0.0
        %599 = vmatpush1.msra.mxu0 0.0
        %600 = vmatprep.subr.mxu0 0.0
        %601 = vmatpush1.msra.mxu0 0.0
        %602 = vmatprep.subr.mxu0 0.0
        %603 = vmatpush1.msra.mxu0 0.0
        %604 = vmatprep.subr.mxu0 0.0
        %605 = vmatpush1.msra.mxu0 0.0
        %606 = vmatprep.subr.mxu0 0.0
        %607 = vmatpush1.msra.mxu0 0.0
        %608 = vmatprep.subr.mxu0 0.0
        %609 = vmatpush1.msra.mxu0 0.0
        %610 = vmatprep.subr.mxu0 0.0
        %611 = vmatpush1.msra.mxu0 0.0
        %612 = vmatprep.subr.mxu0 0.0
        %613 = vmatpush1.msra.mxu0 0.0
        %614 = vmatprep.subr.mxu0 0.0
        %615 = vmatpush1.msra.mxu0 0.0
        %616 = vmatprep.subr.mxu0 0.0
        %617 = vmatpush1.msra.mxu0 0.0
        %618 = vmatprep.subr.mxu0 0.0
        %619 = vmatpush1.msra.mxu0 0.0
        %620 = vmatprep.subr.mxu0 0.0
        %621 = vmatpush1.msra.mxu0 0.0
        %622 = vmatprep.subr.mxu0 0.0
        %623 = vmatpush1.msra.mxu0 0.0
        %624 = vmatprep.subr.mxu0 0.0
        %625 = vmatpush1.msra.mxu0 0.0
        %626 = vmatprep.mubr.f32.mxu0 0.0
        %627 = vmatmul.mubr.f32.gmra.mrb[0].mxu0 %v551
        %v628 = vpop.f32.mrb[0].mxu0
        %v629 = vadd.f32 0.0, %v628
        %v630 = vpop.f32.mrb[0].mxu0
        %v631 = vadd.f32 0.0, %v630
        %632 = vmatprep.mubr.f32.mxu0 0.0
        %633 = vmatmul.mubr.f32.gmra.mrb[0].mxu0 %v554
        %v634 = vpop.f32.mrb[0].mxu0
        %v635 = vadd.f32 0.0, %v634
        %v636 = vpop.f32.mrb[0].mxu0
        %v637 = vadd.f32 0.0, %v636
        %638 = vmatprep.mubr.f32.mxu0 0.0
        %639 = vmatmul.mubr.f32.gmra.mrb[0].mxu0 %v557
        %v640 = vpop.f32.mrb[0].mxu0
        %v641 = vadd.f32 0.0, %v640
        %v642 = vpop.f32.mrb[0].mxu0
        %v643 = vadd.f32 0.0, %v642
        %644 = vmatprep.mubr.f32.mxu0 0.0
        %645 = vmatmul.mubr.f32.gmra.mrb[0].mxu0 %v560
        %v646 = vpop.f32.mrb[0].mxu0
        %v647 = vadd.f32 0.0, %v646
        %v648 = vpop.f32.mrb[0].mxu0
        %v649 = vadd.f32 0.0, %v648
        %650 = vdwg.mxu0
        %v652 = vsel %vm549, %v492, 0
        %v655 = vsel %vm549, %v493, 0
        %v658 = vsel %vm549, %v494, 0
        %v661 = vsel %vm549, %v495, 0
        %663 = vmatprep.subr.mxu0 %v497
        %664 = vmatpush1.msra.mxu0 %v496
        %665 = vmatprep.subr.mxu0 %v499
        %666 = vmatpush1.msra.mxu0 %v498
        %667 = vmatprep.subr.mxu0 %v501
        %668 = vmatpush1.msra.mxu0 %v500
        %669 = vmatprep.subr.mxu0 %v503
        %670 = vmatpush1.msra.mxu0 %v502
        %671 = vmatprep.subr.mxu0 %v505
        %672 = vmatpush1.msra.mxu0 %v504
        %673 = vmatprep.subr.mxu0 %v507
        %674 = vmatpush1.msra.mxu0 %v506
        %675 = vmatprep.subr.mxu0 %v509
        %676 = vmatpush1.msra.mxu0 %v508
        %677 = vmatprep.subr.mxu0 %v511
        %678 = vmatpush1.msra.mxu0 %v510
        %679 = vmatprep.subr.mxu0 %v513
        %680 = vmatpush1.msra.mxu0 %v512
        %681 = vmatprep.subr.mxu0 %v515
        %682 = vmatpush1.msra.mxu0 %v514
        %683 = vmatprep.subr.mxu0 %v517
        %684 = vmatpush1.msra.mxu0 %v516
        %685 = vmatprep.subr.mxu0 %v519
        %686 = vmatpush1.msra.mxu0 %v518
        %687 = vmatprep.subr.mxu0 0.0
        %688 = vmatpush1.msra.mxu0 0.0
        %689 = vmatprep.subr.mxu0 0.0
        %690 = vmatpush1.msra.mxu0 0.0
        %691 = vmatprep.subr.mxu0 0.0
        %692 = vmatpush1.msra.mxu0 0.0
        %693 = vmatprep.subr.mxu0 0.0
        %694 = vmatpush1.msra.mxu0 0.0
        %695 = vmatprep.subr.mxu0 0.0
        %696 = vmatpush1.msra.mxu0 0.0
        %697 = vmatprep.subr.mxu0 0.0
        %698 = vmatpush1.msra.mxu0 0.0
        %699 = vmatprep.subr.mxu0 0.0
        %700 = vmatpush1.msra.mxu0 0.0
        %701 = vmatprep.subr.mxu0 0.0
        %702 = vmatpush1.msra.mxu0 0.0
        %703 = vmatprep.subr.mxu0 0.0
        %704 = vmatpush1.msra.mxu0 0.0
        %705 = vmatprep.subr.mxu0 0.0
        %706 = vmatpush1.msra.mxu0 0.0
        %707 = vmatprep.subr.mxu0 0.0
        %708 = vmatpush1.msra.mxu0 0.0
        %709 = vmatprep.subr.mxu0 0.0
        %710 = vmatpush1.msra.mxu0 0.0
        %711 = vmatprep.subr.mxu0 0.0
        %712 = vmatpush1.msra.mxu0 0.0
        %713 = vmatprep.subr.mxu0 0.0
        %714 = vmatpush1.msra.mxu0 0.0
        %715 = vmatprep.subr.mxu0 0.0
        %716 = vmatpush1.msra.mxu0 0.0
        %717 = vmatprep.subr.mxu0 0.0
        %718 = vmatpush1.msra.mxu0 0.0
        %719 = vmatprep.subr.mxu0 0.0
        %720 = vmatpush1.msra.mxu0 0.0
        %721 = vmatprep.subr.mxu0 0.0
        %722 = vmatpush1.msra.mxu0 0.0
        %723 = vmatprep.subr.mxu0 0.0
        %724 = vmatpush1.msra.mxu0 0.0
        %725 = vmatprep.subr.mxu0 0.0
        %726 = vmatpush1.msra.mxu0 0.0
        %727 = vmatprep.mubr.f32.mxu0 0.0
        %728 = vmatmul.mubr.f32.gmra.mrb[0].mxu0 %v652
        %v729 = vpop.f32.mrb[0].mxu0
        %v730 = vadd.f32 %v629, %v729
        %v731 = vpop.f32.mrb[0].mxu0
        %v732 = vadd.f32 %v631, %v731
        %733 = vmatprep.mubr.f32.mxu0 0.0
        %734 = vmatmul.mubr.f32.gmra.mrb[0].mxu0 %v655
        %v735 = vpop.f32.mrb[0].mxu0
        %v736 = vadd.f32 %v635, %v735
        %v737 = vpop.f32.mrb[0].mxu0
        %v738 = vadd.f32 %v637, %v737
        %739 = vmatprep.mubr.f32.mxu0 0.0
        %740 = vmatmul.mubr.f32.gmra.mrb[0].mxu0 %v658
        %v741 = vpop.f32.mrb[0].mxu0
        %v742 = vadd.f32 %v641, %v741
        %v743 = vpop.f32.mrb[0].mxu0
        %v744 = vadd.f32 %v643, %v743
        %745 = vmatprep.mubr.f32.mxu0 0.0
        %746 = vmatmul.mubr.f32.gmra.mrb[0].mxu0 %v661
        %v747 = vpop.f32.mrb[0].mxu0
        %v748 = vadd.f32 %v647, %v747
        %v749 = vpop.f32.mrb[0].mxu0
        %v750 = vadd.f32 %v649, %v749
        %751 = vdwg.mxu0
        %v752 = vld [vmem:[%s491 + $0x2] sm:$0xff]
        %v753 = vld [vmem:[%s491 + $0xa] sm:$0xff]
        %v754 = vld [vmem:[%s491 + $0x12] sm:$0xff]
        %v755 = vld [vmem:[%s491 + $0x1a] sm:$0xf]
        %s756 = scalar_lea.vmem %s1, 384
        %v757 = vld [vmem:[%s756] sm:$0xff]
        %v758 = vld [vmem:[%s756 + $0x8] sm:$0xff]
        %v759 = vld [vmem:[%s756 + $0x10] sm:$0xff]
        %v760 = vld [vmem:[%s756 + $0x18] sm:$0xff]
        %v761 = vld [vmem:[%s756 + $0x20] sm:$0xff]
        %v762 = vld [vmem:[%s756 + $0x28] sm:$0xff]
        %v763 = vld [vmem:[%s756 + $0x30] sm:$0xff]
        %v764 = vld [vmem:[%s756 + $0x38] sm:$0xff]
        %v765 = vld [vmem:[%s756 + $0x40] sm:$0xff]
        %v766 = vld [vmem:[%s756 + $0x48] sm:$0xff]
        %v767 = vld [vmem:[%s756 + $0x50] sm:$0xff]
        %v768 = vld [vmem:[%s756 + $0x58] sm:$0xff]
        %v769 = vld [vmem:[%s756 + $0x60] sm:$0xff]
        %v770 = vld [vmem:[%s756 + $0x68] sm:$0xff]
        %v771 = vld [vmem:[%s756 + $0x70] sm:$0xff]
        %v772 = vld [vmem:[%s756 + $0x78] sm:$0xff]
        %v773 = vld [vmem:[%s756 + $0x80] sm:$0xff]
        %v774 = vld [vmem:[%s756 + $0x88] sm:$0xff]
        %v775 = vld [vmem:[%s756 + $0x90] sm:$0xff]
        %v776 = vld [vmem:[%s756 + $0x98] sm:$0xff]
        %v777 = vld [vmem:[%s756 + $0xa0] sm:$0xff]
        %v778 = vld [vmem:[%s756 + $0xa8] sm:$0xff]
        %v779 = vld [vmem:[%s756 + $0xb0] sm:$0xff]
        %v780 = vld [vmem:[%s756 + $0xb8] sm:$0xff]
        %v782 = vsel %vm549, %v752, 0
        %v785 = vsel %vm549, %v753, 0
        %v788 = vsel %vm549, %v754, 0
        %v791 = vsel %vm549, %v755, 0
        %793 = vmatprep.subr.mxu0 %v758
        %794 = vmatpush1.msra.mxu0 %v757
        %795 = vmatprep.subr.mxu0 %v760
        %796 = vmatpush1.msra.mxu0 %v759
        %797 = vmatprep.subr.mxu0 %v762
        %798 = vmatpush1.msra.mxu0 %v761
        %799 = vmatprep.subr.mxu0 %v764
        %800 = vmatpush1.msra.mxu0 %v763
        %801 = vmatprep.subr.mxu0 %v766
        %802 = vmatpush1.msra.mxu0 %v765
        %803 = vmatprep.subr.mxu0 %v768
        %804 = vmatpush1.msra.mxu0 %v767
        %805 = vmatprep.subr.mxu0 %v770
        %806 = vmatpush1.msra.mxu0 %v769
        %807 = vmatprep.subr.mxu0 %v772
        %808 = vmatpush1.msra.mxu0 %v771
        %809 = vmatprep.subr.mxu0 %v774
        %810 = vmatpush1.msra.mxu0 %v773
        %811 = vmatprep.subr.mxu0 %v776
        %812 = vmatpush1.msra.mxu0 %v775
        %813 = vmatprep.subr.mxu0 %v778
        %814 = vmatpush1.msra.mxu0 %v777
        %815 = vmatprep.subr.mxu0 %v780
        %816 = vmatpush1.msra.mxu0 %v779
        %817 = vmatprep.subr.mxu0 0.0
        %818 = vmatpush1.msra.mxu0 0.0
        %819 = vmatprep.subr.mxu0 0.0
        %820 = vmatpush1.msra.mxu0 0.0
        %821 = vmatprep.subr.mxu0 0.0
        %822 = vmatpush1.msra.mxu0 0.0
        %823 = vmatprep.subr.mxu0 0.0
        %824 = vmatpush1.msra.mxu0 0.0
        %825 = vmatprep.subr.mxu0 0.0
        %826 = vmatpush1.msra.mxu0 0.0
        %827 = vmatprep.subr.mxu0 0.0
        %828 = vmatpush1.msra.mxu0 0.0
        %829 = vmatprep.subr.mxu0 0.0
        %830 = vmatpush1.msra.mxu0 0.0
        %831 = vmatprep.subr.mxu0 0.0
        %832 = vmatpush1.msra.mxu0 0.0
        %833 = vmatprep.subr.mxu0 0.0
        %834 = vmatpush1.msra.mxu0 0.0
        %835 = vmatprep.subr.mxu0 0.0
        %836 = vmatpush1.msra.mxu0 0.0
        %837 = vmatprep.subr.mxu0 0.0
        %838 = vmatpush1.msra.mxu0 0.0
        %839 = vmatprep.subr.mxu0 0.0
        %840 = vmatpush1.msra.mxu0 0.0
        %841 = vmatprep.subr.mxu0 0.0
        %842 = vmatpush1.msra.mxu0 0.0
        %843 = vmatprep.subr.mxu0 0.0
        %844 = vmatpush1.msra.mxu0 0.0
        %845 = vmatprep.subr.mxu0 0.0
        %846 = vmatpush1.msra.mxu0 0.0
        %847 = vmatprep.subr.mxu0 0.0
        %848 = vmatpush1.msra.mxu0 0.0
        %849 = vmatprep.subr.mxu0 0.0
        %850 = vmatpush1.msra.mxu0 0.0
        %851 = vmatprep.subr.mxu0 0.0
        %852 = vmatpush1.msra.mxu0 0.0
        %853 = vmatprep.subr.mxu0 0.0
        %854 = vmatpush1.msra.mxu0 0.0
        %855 = vmatprep.subr.mxu0 0.0
        %856 = vmatpush1.msra.mxu0 0.0
        %857 = vmatprep.mubr.f32.mxu0 0.0
        %858 = vmatmul.mubr.f32.gmra.mrb[0].mxu0 %v782
        %v859 = vpop.f32.mrb[0].mxu0
        %v860 = vadd.f32 0.0, %v859
        %v861 = vpop.f32.mrb[0].mxu0
        %v862 = vadd.f32 0.0, %v861
        %863 = vmatprep.mubr.f32.mxu0 0.0
        %864 = vmatmul.mubr.f32.gmra.mrb[0].mxu0 %v785
        %v865 = vpop.f32.mrb[0].mxu0
        %v866 = vadd.f32 0.0, %v865
        %v867 = vpop.f32.mrb[0].mxu0
        %v868 = vadd.f32 0.0, %v867
        %869 = vmatprep.mubr.f32.mxu0 0.0
        %870 = vmatmul.mubr.f32.gmra.mrb[0].mxu0 %v788
        %v871 = vpop.f32.mrb[0].mxu0
        %v872 = vadd.f32 0.0, %v871
        %v873 = vpop.f32.mrb[0].mxu0
        %v874 = vadd.f32 0.0, %v873
        %875 = vmatprep.mubr.f32.mxu0 0.0
        %876 = vmatmul.mubr.f32.gmra.mrb[0].mxu0 %v791
        %v877 = vpop.f32.mrb[0].mxu0
        %v878 = vadd.f32 0.0, %v877
        %v879 = vpop.f32.mrb[0].mxu0
        %v880 = vadd.f32 0.0, %v879
        %881 = vdwg.mxu0
        %v882 = vadd.f32 %v730, %v860
        %v883 = vadd.f32 %v732, %v862
        %v884 = vadd.f32 %v736, %v866
        %v885 = vadd.f32 %v738, %v868
        %v886 = vadd.f32 %v742, %v872
        %v887 = vadd.f32 %v744, %v874
        %v888 = vadd.f32 %v748, %v878
        %v889 = vadd.f32 %v750, %v880
        %v890 = vld [vmem:[%s491 + $0x3] sm:$0xff]
        %v891 = vld [vmem:[%s491 + $0xb] sm:$0xff]
        %v892 = vld [vmem:[%s491 + $0x13] sm:$0xff]
        %v893 = vld [vmem:[%s491 + $0x1b] sm:$0xf]
        %s894 = scalar_lea.vmem %s1, 576
        %v895 = vld [vmem:[%s894] sm:$0xff]
        %v896 = vld [vmem:[%s894 + $0x8] sm:$0xff]
        %v897 = vld [vmem:[%s894 + $0x10] sm:$0xff]
        %v898 = vld [vmem:[%s894 + $0x18] sm:$0xff]
        %v899 = vld [vmem:[%s894 + $0x20] sm:$0xff]
        %v900 = vld [vmem:[%s894 + $0x28] sm:$0xff]
        %v901 = vld [vmem:[%s894 + $0x30] sm:$0xff]
        %v902 = vld [vmem:[%s894 + $0x38] sm:$0xff]
        %v903 = vld [vmem:[%s894 + $0x40] sm:$0xff]
        %v904 = vld [vmem:[%s894 + $0x48] sm:$0xff]
        %v905 = vld [vmem:[%s894 + $0x50] sm:$0xff]
        %v906 = vld [vmem:[%s894 + $0x58] sm:$0xff]
        %v907 = vld [vmem:[%s894 + $0x60] sm:$0xff]
        %v908 = vld [vmem:[%s894 + $0x68] sm:$0xff]
        %v909 = vld [vmem:[%s894 + $0x70] sm:$0xff]
        %v910 = vld [vmem:[%s894 + $0x78] sm:$0xff]
        %v911 = vld [vmem:[%s894 + $0x80] sm:$0xff]
        %v912 = vld [vmem:[%s894 + $0x88] sm:$0xff]
        %v913 = vld [vmem:[%s894 + $0x90] sm:$0xff]
        %v914 = vld [vmem:[%s894 + $0x98] sm:$0xff]
        %v915 = vld [vmem:[%s894 + $0xa0] sm:$0xff]
        %v916 = vld [vmem:[%s894 + $0xa8] sm:$0xff]
        %v917 = vld [vmem:[%s894 + $0xb0] sm:$0xff]
        %v918 = vld [vmem:[%s894 + $0xb8] sm:$0xff]
        %v920 = vsel %vm549, %v890, 0
        %v923 = vsel %vm549, %v891, 0
        %v926 = vsel %vm549, %v892, 0
        %v929 = vsel %vm549, %v893, 0
        %931 = vmatprep.subr.mxu0 %v896
        %932 = vmatpush1.msra.mxu0 %v895
        %933 = vmatprep.subr.mxu0 %v898
        %934 = vmatpush1.msra.mxu0 %v897
        %935 = vmatprep.subr.mxu0 %v900
        %936 = vmatpush1.msra.mxu0 %v899
        %937 = vmatprep.subr.mxu0 %v902
        %938 = vmatpush1.msra.mxu0 %v901
        %939 = vmatprep.subr.mxu0 %v904
        %940 = vmatpush1.msra.mxu0 %v903
        %941 = vmatprep.subr.mxu0 %v906
        %942 = vmatpush1.msra.mxu0 %v905
        %943 = vmatprep.subr.mxu0 %v908
        %944 = vmatpush1.msra.mxu0 %v907
        %945 = vmatprep.subr.mxu0 %v910
        %946 = vmatpush1.msra.mxu0 %v909
        %947 = vmatprep.subr.mxu0 %v912
        %948 = vmatpush1.msra.mxu0 %v911
        %949 = vmatprep.subr.mxu0 %v914
        %950 = vmatpush1.msra.mxu0 %v913
        %951 = vmatprep.subr.mxu0 %v916
        %952 = vmatpush1.msra.mxu0 %v915
        %953 = vmatprep.subr.mxu0 %v918
        %954 = vmatpush1.msra.mxu0 %v917
        %955 = vmatprep.subr.mxu0 0.0
        %956 = vmatpush1.msra.mxu0 0.0
        %957 = vmatprep.subr.mxu0 0.0
        %958 = vmatpush1.msra.mxu0 0.0
        %959 = vmatprep.subr.mxu0 0.0
        %960 = vmatpush1.msra.mxu0 0.0
        %961 = vmatprep.subr.mxu0 0.0
        %962 = vmatpush1.msra.mxu0 0.0
        %963 = vmatprep.subr.mxu0 0.0
        %964 = vmatpush1.msra.mxu0 0.0
        %965 = vmatprep.subr.mxu0 0.0
        %966 = vmatpush1.msra.mxu0 0.0
        %967 = vmatprep.subr.mxu0 0.0
        %968 = vmatpush1.msra.mxu0 0.0
        %969 = vmatprep.subr.mxu0 0.0
        %970 = vmatpush1.msra.mxu0 0.0
        %971 = vmatprep.subr.mxu0 0.0
        %972 = vmatpush1.msra.mxu0 0.0
        %973 = vmatprep.subr.mxu0 0.0
        %974 = vmatpush1.msra.mxu0 0.0
        %975 = vmatprep.subr.mxu0 0.0
        %976 = vmatpush1.msra.mxu0 0.0
        %977 = vmatprep.subr.mxu0 0.0
        %978 = vmatpush1.msra.mxu0 0.0
        %979 = vmatprep.subr.mxu0 0.0
        %980 = vmatpush1.msra.mxu0 0.0
        %981 = vmatprep.subr.mxu0 0.0
        %982 = vmatpush1.msra.mxu0 0.0
        %983 = vmatprep.subr.mxu0 0.0
        %984 = vmatpush1.msra.mxu0 0.0
        %985 = vmatprep.subr.mxu0 0.0
        %986 = vmatpush1.msra.mxu0 0.0
        %987 = vmatprep.subr.mxu0 0.0
        %988 = vmatpush1.msra.mxu0 0.0
        %989 = vmatprep.subr.mxu0 0.0
        %990 = vmatpush1.msra.mxu0 0.0
        %991 = vmatprep.subr.mxu0 0.0
        %992 = vmatpush1.msra.mxu0 0.0
        %993 = vmatprep.subr.mxu0 0.0
        %994 = vmatpush1.msra.mxu0 0.0
        %995 = vmatprep.mubr.f32.mxu0 0.0
        %996 = vmatmul.mubr.f32.gmra.mrb[0].mxu0 %v920
        %v997 = vpop.f32.mrb[0].mxu0
        %v998 = vadd.f32 0.0, %v997
        %v999 = vpop.f32.mrb[0].mxu0
        %v1000 = vadd.f32 0.0, %v999
        %1001 = vmatprep.mubr.f32.mxu0 0.0
        %1002 = vmatmul.mubr.f32.gmra.mrb[0].mxu0 %v923
        %v1003 = vpop.f32.mrb[0].mxu0
        %v1004 = vadd.f32 0.0, %v1003
        %v1005 = vpop.f32.mrb[0].mxu0
        %v1006 = vadd.f32 0.0, %v1005
        %1007 = vmatprep.mubr.f32.mxu0 0.0
        %1008 = vmatmul.mubr.f32.gmra.mrb[0].mxu0 %v926
        %v1009 = vpop.f32.mrb[0].mxu0
        %v1010 = vadd.f32 0.0, %v1009
        %v1011 = vpop.f32.mrb[0].mxu0
        %v1012 = vadd.f32 0.0, %v1011
        %1013 = vmatprep.mubr.f32.mxu0 0.0
        %1014 = vmatmul.mubr.f32.gmra.mrb[0].mxu0 %v929
        %v1015 = vpop.f32.mrb[0].mxu0
        %v1016 = vadd.f32 0.0, %v1015
        %v1017 = vpop.f32.mrb[0].mxu0
        %v1018 = vadd.f32 0.0, %v1017
        %1019 = vdwg.mxu0
        %v1020 = vadd.f32 %v882, %v998
        %v1021 = vadd.f32 %v883, %v1000
        %v1022 = vadd.f32 %v884, %v1004
        %v1023 = vadd.f32 %v885, %v1006
        %v1024 = vadd.f32 %v886, %v1010
        %v1025 = vadd.f32 %v887, %v1012
        %v1026 = vadd.f32 %v888, %v1016
        %v1027 = vadd.f32 %v889, %v1018
        %v1028 = vld [vmem:[%s491 + $0x4] sm:$0xff]
        %v1029 = vld [vmem:[%s491 + $0xc] sm:$0xff]
        %v1030 = vld [vmem:[%s491 + $0x14] sm:$0xff]
        %v1031 = vld [vmem:[%s491 + $0x1c] sm:$0xf]
        %s1032 = scalar_lea.vmem %s1, 768
        %v1033 = vld [vmem:[%s1032] sm:$0xff]
        %v1034 = vld [vmem:[%s1032 + $0x8] sm:$0xff]
        %v1035 = vld [vmem:[%s1032 + $0x10] sm:$0xff]
        %v1036 = vld [vmem:[%s1032 + $0x18] sm:$0xff]
        %v1037 = vld [vmem:[%s1032 + $0x20] sm:$0xff]
        %v1038 = vld [vmem:[%s1032 + $0x28] sm:$0xff]
        %v1039 = vld [vmem:[%s1032 + $0x30] sm:$0xff]
        %v1040 = vld [vmem:[%s1032 + $0x38] sm:$0xff]
        %v1041 = vld [vmem:[%s1032 + $0x40] sm:$0xff]
        %v1042 = vld [vmem:[%s1032 + $0x48] sm:$0xff]
        %v1043 = vld [vmem:[%s1032 + $0x50] sm:$0xff]
        %v1044 = vld [vmem:[%s1032 + $0x58] sm:$0xff]
        %v1045 = vld [vmem:[%s1032 + $0x60] sm:$0xff]
        %v1046 = vld [vmem:[%s1032 + $0x68] sm:$0xff]
        %v1047 = vld [vmem:[%s1032 + $0x70] sm:$0xff]
        %v1048 = vld [vmem:[%s1032 + $0x78] sm:$0xff]
        %v1049 = vld [vmem:[%s1032 + $0x80] sm:$0xff]
        %v1050 = vld [vmem:[%s1032 + $0x88] sm:$0xff]
        %v1051 = vld [vmem:[%s1032 + $0x90] sm:$0xff]
        %v1052 = vld [vmem:[%s1032 + $0x98] sm:$0xff]
        %v1053 = vld [vmem:[%s1032 + $0xa0] sm:$0xff]
        %v1054 = vld [vmem:[%s1032 + $0xa8] sm:$0xff]
        %v1055 = vld [vmem:[%s1032 + $0xb0] sm:$0xff]
        %v1056 = vld [vmem:[%s1032 + $0xb8] sm:$0xff]
        %v1058 = vsel %vm549, %v1028, 0
        %v1061 = vsel %vm549, %v1029, 0
        %v1064 = vsel %vm549, %v1030, 0
        %v1067 = vsel %vm549, %v1031, 0
        %1069 = vmatprep.subr.mxu0 %v1034
        %1070 = vmatpush1.msra.mxu0 %v1033
        %1071 = vmatprep.subr.mxu0 %v1036
        %1072 = vmatpush1.msra.mxu0 %v1035
        %1073 = vmatprep.subr.mxu0 %v1038
        %1074 = vmatpush1.msra.mxu0 %v1037
        %1075 = vmatprep.subr.mxu0 %v1040
        %1076 = vmatpush1.msra.mxu0 %v1039
        %1077 = vmatprep.subr.mxu0 %v1042
        %1078 = vmatpush1.msra.mxu0 %v1041
        %1079 = vmatprep.subr.mxu0 %v1044
        %1080 = vmatpush1.msra.mxu0 %v1043
        %1081 = vmatprep.subr.mxu0 %v1046
        %1082 = vmatpush1.msra.mxu0 %v1045
        %1083 = vmatprep.subr.mxu0 %v1048
        %1084 = vmatpush1.msra.mxu0 %v1047
        %1085 = vmatprep.subr.mxu0 %v1050
        %1086 = vmatpush1.msra.mxu0 %v1049
        %1087 = vmatprep.subr.mxu0 %v1052
        %1088 = vmatpush1.msra.mxu0 %v1051
        %1089 = vmatprep.subr.mxu0 %v1054
        %1090 = vmatpush1.msra.mxu0 %v1053
        %1091 = vmatprep.subr.mxu0 %v1056
        %1092 = vmatpush1.msra.mxu0 %v1055
        %1093 = vmatprep.subr.mxu0 0.0
        %1094 = vmatpush1.msra.mxu0 0.0
        %1095 = vmatprep.subr.mxu0 0.0
        %1096 = vmatpush1.msra.mxu0 0.0
        %1097 = vmatprep.subr.mxu0 0.0
        %1098 = vmatpush1.msra.mxu0 0.0
        %1099 = vmatprep.subr.mxu0 0.0
        %1100 = vmatpush1.msra.mxu0 0.0
        %1101 = vmatprep.subr.mxu0 0.0
        %1102 = vmatpush1.msra.mxu0 0.0
        %1103 = vmatprep.subr.mxu0 0.0
        %1104 = vmatpush1.msra.mxu0 0.0
        %1105 = vmatprep.subr.mxu0 0.0
        %1106 = vmatpush1.msra.mxu0 0.0
        %1107 = vmatprep.subr.mxu0 0.0
        %1108 = vmatpush1.msra.mxu0 0.0
        %1109 = vmatprep.subr.mxu0 0.0
        %1110 = vmatpush1.msra.mxu0 0.0
        %1111 = vmatprep.subr.mxu0 0.0
        %1112 = vmatpush1.msra.mxu0 0.0
        %1113 = vmatprep.subr.mxu0 0.0
        %1114 = vmatpush1.msra.mxu0 0.0
        %1115 = vmatprep.subr.mxu0 0.0
        %1116 = vmatpush1.msra.mxu0 0.0
        %1117 = vmatprep.subr.mxu0 0.0
        %1118 = vmatpush1.msra.mxu0 0.0
        %1119 = vmatprep.subr.mxu0 0.0
        %1120 = vmatpush1.msra.mxu0 0.0
        %1121 = vmatprep.subr.mxu0 0.0
        %1122 = vmatpush1.msra.mxu0 0.0
        %1123 = vmatprep.subr.mxu0 0.0
        %1124 = vmatpush1.msra.mxu0 0.0
        %1125 = vmatprep.subr.mxu0 0.0
        %1126 = vmatpush1.msra.mxu0 0.0
        %1127 = vmatprep.subr.mxu0 0.0
        %1128 = vmatpush1.msra.mxu0 0.0
        %1129 = vmatprep.subr.mxu0 0.0
        %1130 = vmatpush1.msra.mxu0 0.0
        %1131 = vmatprep.subr.mxu0 0.0
        %1132 = vmatpush1.msra.mxu0 0.0
        %1133 = vmatprep.mubr.f32.mxu0 0.0
        %1134 = vmatmul.mubr.f32.gmra.mrb[0].mxu0 %v1058
        %v1135 = vpop.f32.mrb[0].mxu0
        %v1136 = vadd.f32 0.0, %v1135
        %v1137 = vpop.f32.mrb[0].mxu0
        %v1138 = vadd.f32 0.0, %v1137
        %1139 = vmatprep.mubr.f32.mxu0 0.0
        %1140 = vmatmul.mubr.f32.gmra.mrb[0].mxu0 %v1061
        %v1141 = vpop.f32.mrb[0].mxu0
        %v1142 = vadd.f32 0.0, %v1141
        %v1143 = vpop.f32.mrb[0].mxu0
        %v1144 = vadd.f32 0.0, %v1143
        %1145 = vmatprep.mubr.f32.mxu0 0.0
        %1146 = vmatmul.mubr.f32.gmra.mrb[0].mxu0 %v1064
        %v1147 = vpop.f32.mrb[0].mxu0
        %v1148 = vadd.f32 0.0, %v1147
        %v1149 = vpop.f32.mrb[0].mxu0
        %v1150 = vadd.f32 0.0, %v1149
        %1151 = vmatprep.mubr.f32.mxu0 0.0
        %1152 = vmatmul.mubr.f32.gmra.mrb[0].mxu0 %v1067
        %v1153 = vpop.f32.mrb[0].mxu0
        %v1154 = vadd.f32 0.0, %v1153
        %v1155 = vpop.f32.mrb[0].mxu0
        %v1156 = vadd.f32 0.0, %v1155
        %1157 = vdwg.mxu0
        %v1158 = vadd.f32 %v1020, %v1136
        %v1159 = vadd.f32 %v1021, %v1138
        %v1160 = vadd.f32 %v1022, %v1142
        %v1161 = vadd.f32 %v1023, %v1144
        %v1162 = vadd.f32 %v1024, %v1148
        %v1163 = vadd.f32 %v1025, %v1150
        %v1164 = vadd.f32 %v1026, %v1154
        %v1165 = vadd.f32 %v1027, %v1156
        %v1166 = vld [vmem:[%s2] sm:$0x3]
        %v1168 = vlaneseq
        %v1169 = vshrl.u32 %v1168, 7
        %v1170 = vsub.s32 0, %v1169
        %v1171 = vrot.slane %v1166, %v1170
        %v1172 = vlaneseq
        %v1173 = vshrl.u32 %v1172, 7
        %v1174 = vsub.s32 1, %v1173
        %v1175 = vrot.slane %v1166, %v1174
        %v1178 = vadd.f32 %v1158, %v1171
        %v1179 = vadd.f32 %v1159, %v1175
        %v1180 = vadd.f32 %v1160, %v1171
        %v1181 = vadd.f32 %v1161, %v1175
        %v1182 = vadd.f32 %v1162, %v1171
        %v1183 = vadd.f32 %v1163, %v1175
        %v1184 = vadd.f32 %v1164, %v1171
        %v1185 = vadd.f32 %v1165, %v1175
        %v1186 = vmax.f32 %v1178, 0.0
        %v1187 = vmax.f32 %v1179, 0.0
        %v1188 = vmax.f32 %v1180, 0.0
        %v1189 = vmax.f32 %v1181, 0.0
        %v1190 = vmax.f32 %v1182, 0.0
        %v1191 = vmax.f32 %v1183, 0.0
        %v1192 = vmax.f32 %v1184, 0.0
        %v1193 = vmax.f32 %v1185, 0.0
        %v1194 = vld [vmem:[%s3] sm:$0xff]
        %v1195 = vld [vmem:[%s3 + $0x8] sm:$0x3f]
        %vm1196 = vcmask 228352
        %v1198 = vsel %vm1196, %v1194, 0
        %v1201 = vsel %vm1196, %v1195, 0
        %vm1203 = vcmask 1043456
        %v1205 = vsel %vm1203, %v1192, 0
        %v1208 = vsel %vm1203, %v1193, 0
        %1210 = vmatprep.subr.mxu0 %v1187
        %1211 = vmatpush1.msra.mxu0 %v1186
        %1212 = vmatprep.subr.mxu0 %v1189
        %1213 = vmatpush1.msra.mxu0 %v1188
        %1214 = vmatprep.subr.mxu0 %v1191
        %1215 = vmatpush1.msra.mxu0 %v1190
        %1216 = vmatprep.subr.mxu0 %v1208
        %1217 = vmatpush1.msra.mxu0 %v1205
        %1218 = vmatprep.subr.mxu0 0.0
        %1219 = vmatpush1.msra.mxu0 0.0
        %1220 = vmatprep.subr.mxu0 0.0
        %1221 = vmatpush1.msra.mxu0 0.0
        %1222 = vmatprep.subr.mxu0 0.0
        %1223 = vmatpush1.msra.mxu0 0.0
        %1224 = vmatprep.subr.mxu0 0.0
        %1225 = vmatpush1.msra.mxu0 0.0
        %1226 = vmatprep.subr.mxu0 0.0
        %1227 = vmatpush1.msra.mxu0 0.0
        %1228 = vmatprep.subr.mxu0 0.0
        %1229 = vmatpush1.msra.mxu0 0.0
        %1230 = vmatprep.subr.mxu0 0.0
        %1231 = vmatpush1.msra.mxu0 0.0
        %1232 = vmatprep.subr.mxu0 0.0
        %1233 = vmatpush1.msra.mxu0 0.0
        %1234 = vmatprep.subr.mxu0 0.0
        %1235 = vmatpush1.msra.mxu0 0.0
        %1236 = vmatprep.subr.mxu0 0.0
        %1237 = vmatpush1.msra.mxu0 0.0
        %1238 = vmatprep.subr.mxu0 0.0
        %1239 = vmatpush1.msra.mxu0 0.0
        %1240 = vmatprep.subr.mxu0 0.0
        %1241 = vmatpush1.msra.mxu0 0.0
        %1242 = vmatprep.subr.mxu0 0.0
        %1243 = vmatpush1.msra.mxu0 0.0
        %1244 = vmatprep.subr.mxu0 0.0
        %1245 = vmatpush1.msra.mxu0 0.0
        %1246 = vmatprep.subr.mxu0 0.0
        %1247 = vmatpush1.msra.mxu0 0.0
        %1248 = vmatprep.subr.mxu0 0.0
        %1249 = vmatpush1.msra.mxu0 0.0
        %1250 = vmatprep.subr.mxu0 0.0
        %1251 = vmatpush1.msra.mxu0 0.0
        %1252 = vmatprep.subr.mxu0 0.0
        %1253 = vmatpush1.msra.mxu0 0.0
        %1254 = vmatprep.subr.mxu0 0.0
        %1255 = vmatpush1.msra.mxu0 0.0
        %1256 = vmatprep.subr.mxu0 0.0
        %1257 = vmatpush1.msra.mxu0 0.0
        %1258 = vmatprep.subr.mxu0 0.0
        %1259 = vmatpush1.msra.mxu0 0.0
        %1260 = vmatprep.subr.mxu0 0.0
        %1261 = vmatpush1.msra.mxu0 0.0
        %1262 = vmatprep.subr.mxu0 0.0
        %1263 = vmatpush1.msra.mxu0 0.0
        %1264 = vmatprep.subr.mxu0 0.0
        %1265 = vmatpush1.msra.mxu0 0.0
        %1266 = vmatprep.subr.mxu0 0.0
        %1267 = vmatpush1.msra.mxu0 0.0
        %1268 = vmatprep.subr.mxu0 0.0
        %1269 = vmatpush1.msra.mxu0 0.0
        %1270 = vmatprep.subr.mxu0 0.0
        %1271 = vmatpush1.msra.mxu0 0.0
        %1272 = vmatprep.subr.mxu0 0.0
        %1273 = vmatpush1.msra.mxu0 0.0
        %1274 = vmatprep.mubr.f32.mxu0 0.0
        %1275 = vmatmul.mubr.f32.gmra.mrb[0].mxu0 %v1198
        %v1276 = vpop.f32.mrb[0].mxu0
        %v1277 = vadd.f32 0.0, %v1276
        %v1278 = vpop.f32.mrb[0].mxu0
        %v1279 = vadd.f32 0.0, %v1278
        %1280 = vmatprep.mubr.f32.mxu0 0.0
        %1281 = vmatmul.mubr.f32.gmra.mrb[0].mxu0 %v1201
        %v1282 = vpop.f32.mrb[0].mxu0
        %v1283 = vadd.f32 0.0, %v1282
        %v1284 = vpop.f32.mrb[0].mxu0
        %v1285 = vadd.f32 0.0, %v1284
        %1286 = vdwg.mxu0
        %s1287 = scalar_lea.vmem %s3, 16
        %v1288 = vld [vmem:[%s1287] sm:$0xff]
        %v1289 = vld [vmem:[%s1287 + $0x8] sm:$0x3f]
        %v1291 = vsel %vm1196, %v1288, 0
        %v1294 = vsel %vm1196, %v1289, 0
        %1296 = vmatprep.subr.mxu0 %v1187
        %1297 = vmatpush1.msra.mxu0 %v1186
        %1298 = vmatprep.subr.mxu0 %v1189
        %1299 = vmatpush1.msra.mxu0 %v1188
        %1300 = vmatprep.subr.mxu0 %v1191
        %1301 = vmatpush1.msra.mxu0 %v1190
        %1302 = vmatprep.subr.mxu0 %v1208
        %1303 = vmatpush1.msra.mxu0 %v1205
        %1304 = vmatprep.subr.mxu0 0.0
        %1305 = vmatpush1.msra.mxu0 0.0
        %1306 = vmatprep.subr.mxu0 0.0
        %1307 = vmatpush1.msra.mxu0 0.0
        %1308 = vmatprep.subr.mxu0 0.0
        %1309 = vmatpush1.msra.mxu0 0.0
        %1310 = vmatprep.subr.mxu0 0.0
        %1311 = vmatpush1.msra.mxu0 0.0
        %1312 = vmatprep.subr.mxu0 0.0
        %1313 = vmatpush1.msra.mxu0 0.0
        %1314 = vmatprep.subr.mxu0 0.0
        %1315 = vmatpush1.msra.mxu0 0.0
        %1316 = vmatprep.subr.mxu0 0.0
        %1317 = vmatpush1.msra.mxu0 0.0
        %1318 = vmatprep.subr.mxu0 0.0
        %1319 = vmatpush1.msra.mxu0 0.0
        %1320 = vmatprep.subr.mxu0 0.0
        %1321 = vmatpush1.msra.mxu0 0.0
        %1322 = vmatprep.subr.mxu0 0.0
        %1323 = vmatpush1.msra.mxu0 0.0
        %1324 = vmatprep.subr.mxu0 0.0
        %1325 = vmatpush1.msra.mxu0 0.0
        %1326 = vmatprep.subr.mxu0 0.0
        %1327 = vmatpush1.msra.mxu0 0.0
        %1328 = vmatprep.subr.mxu0 0.0
        %1329 = vmatpush1.msra.mxu0 0.0
        %1330 = vmatprep.subr.mxu0 0.0
        %1331 = vmatpush1.msra.mxu0 0.0
        %1332 = vmatprep.subr.mxu0 0.0
        %1333 = vmatpush1.msra.mxu0 0.0
        %1334 = vmatprep.subr.mxu0 0.0
        %1335 = vmatpush1.msra.mxu0 0.0
        %1336 = vmatprep.subr.mxu0 0.0
        %1337 = vmatpush1.msra.mxu0 0.0
        %1338 = vmatprep.subr.mxu0 0.0
        %1339 = vmatpush1.msra.mxu0 0.0
        %1340 = vmatprep.subr.mxu0 0.0
        %1341 = vmatpush1.msra.mxu0 0.0
        %1342 = vmatprep.subr.mxu0 0.0
        %1343 = vmatpush1.msra.mxu0 0.0
        %1344 = vmatprep.subr.mxu0 0.0
        %1345 = vmatpush1.msra.mxu0 0.0
        %1346 = vmatprep.subr.mxu0 0.0
        %1347 = vmatpush1.msra.mxu0 0.0
        %1348 = vmatprep.subr.mxu0 0.0
        %1349 = vmatpush1.msra.mxu0 0.0
        %1350 = vmatprep.subr.mxu0 0.0
        %1351 = vmatpush1.msra.mxu0 0.0
        %1352 = vmatprep.subr.mxu0 0.0
        %1353 = vmatpush1.msra.mxu0 0.0
        %1354 = vmatprep.subr.mxu0 0.0
        %1355 = vmatpush1.msra.mxu0 0.0
        %1356 = vmatprep.subr.mxu0 0.0
        %1357 = vmatpush1.msra.mxu0 0.0
        %1358 = vmatprep.subr.mxu0 0.0
        %1359 = vmatpush1.msra.mxu0 0.0
        %1360 = vmatprep.mubr.f32.mxu0 0.0
        %1361 = vmatmul.mubr.f32.gmra.mrb[0].mxu0 %v1291
        %v1362 = vpop.f32.mrb[0].mxu0
        %v1363 = vadd.f32 0.0, %v1362
        %v1364 = vpop.f32.mrb[0].mxu0
        %v1365 = vadd.f32 0.0, %v1364
        %1366 = vmatprep.mubr.f32.mxu0 0.0
        %1367 = vmatmul.mubr.f32.gmra.mrb[0].mxu0 %v1294
        %v1368 = vpop.f32.mrb[0].mxu0
        %v1369 = vadd.f32 0.0, %v1368
        %v1370 = vpop.f32.mrb[0].mxu0
        %v1371 = vadd.f32 0.0, %v1370
        %1372 = vdwg.mxu0
        %v1373 = vmax.f32 %v1277, %v1363
        %v1374 = vmax.f32 %v1279, %v1365
        %v1375 = vmax.f32 %v1283, %v1369
        %v1376 = vmax.f32 %v1285, %v1371
        %v1377 = vld [vmem:[%s4] sm:$0xff]
        %v1378 = vld [vmem:[%s4 + $0x8] sm:$0xff]
        %v1379 = vld [vmem:[%s4 + $0x10] sm:$0xff]
        %v1380 = vld [vmem:[%s4 + $0x18] sm:$0xff]
        %v1381 = vld [vmem:[%s4 + $0x20] sm:$0xff]
        %v1382 = vld [vmem:[%s4 + $0x28] sm:$0xff]
        %v1383 = vld [vmem:[%s4 + $0x30] sm:$0xff]
        %v1384 = vld [vmem:[%s4 + $0x38] sm:$0xff]
        %v1385 = vld [vmem:[%s4 + $0x40] sm:$0xff]
        %v1386 = vld [vmem:[%s4 + $0x48] sm:$0xff]
        %v1387 = vld [vmem:[%s4 + $0x50] sm:$0xff]
        %v1388 = vld [vmem:[%s4 + $0x58] sm:$0xff]
        %v1389 = vld [vmem:[%s4 + $0x60] sm:$0xff]
        %v1390 = vld [vmem:[%s4 + $0x68] sm:$0xff]
        %v1391 = vld [vmem:[%s4 + $0x70] sm:$0xff]
        %v1392 = vld [vmem:[%s4 + $0x78] sm:$0xff]
        %v1393 = vld [vmem:[%s4 + $0x80] sm:$0xff]
        %v1394 = vld [vmem:[%s4 + $0x88] sm:$0xff]
        %v1395 = vld [vmem:[%s4 + $0x90] sm:$0xff]
        %v1396 = vld [vmem:[%s4 + $0x98] sm:$0xff]
        %v1397 = vld [vmem:[%s4 + $0xa0] sm:$0xff]
        %vm1398 = vcmask 326656
        %v1400 = vsel %vm1398, %v1374, 0
        %v1403 = vsel %vm1398, %v1376, 0
        %1405 = vmatprep.subr.mxu0 0.0
        %1406 = vmatpush1.msra.mxu0 %v1377
        %1407 = vmatprep.subr.mxu0 0.0
        %1408 = vmatpush1.msra.mxu0 %v1378
        %1409 = vmatprep.subr.mxu0 0.0
        %1410 = vmatpush1.msra.mxu0 %v1379
        %1411 = vmatprep.subr.mxu0 0.0
        %1412 = vmatpush1.msra.mxu0 %v1380
        %1413 = vmatprep.subr.mxu0 0.0
        %1414 = vmatpush1.msra.mxu0 %v1381
        %1415 = vmatprep.subr.mxu0 0.0
        %1416 = vmatpush1.msra.mxu0 %v1382
        %1417 = vmatprep.subr.mxu0 0.0
        %1418 = vmatpush1.msra.mxu0 %v1383
        %1419 = vmatprep.subr.mxu0 0.0
        %1420 = vmatpush1.msra.mxu0 %v1384
        %1421 = vmatprep.subr.mxu0 0.0
        %1422 = vmatpush1.msra.mxu0 %v1385
        %1423 = vmatprep.subr.mxu0 0.0
        %1424 = vmatpush1.msra.mxu0 %v1386
        %1425 = vmatprep.subr.mxu0 0.0
        %1426 = vmatpush1.msra.mxu0 %v1387
        %1427 = vmatprep.subr.mxu0 0.0
        %1428 = vmatpush1.msra.mxu0 %v1388
        %1429 = vmatprep.subr.mxu0 0.0
        %1430 = vmatpush1.msra.mxu0 %v1389
        %1431 = vmatprep.subr.mxu0 0.0
        %1432 = vmatpush1.msra.mxu0 %v1390
        %1433 = vmatprep.subr.mxu0 0.0
        %1434 = vmatpush1.msra.mxu0 %v1391
        %1435 = vmatprep.subr.mxu0 0.0
        %1436 = vmatpush1.msra.mxu0 %v1392
        %1437 = vmatprep.subr.mxu0 0.0
        %1438 = vmatpush1.msra.mxu0 %v1393
        %1439 = vmatprep.subr.mxu0 0.0
        %1440 = vmatpush1.msra.mxu0 %v1394
        %1441 = vmatprep.subr.mxu0 0.0
        %1442 = vmatpush1.msra.mxu0 %v1395
        %1443 = vmatprep.subr.mxu0 0.0
        %1444 = vmatpush1.msra.mxu0 %v1396
        %1445 = vmatprep.subr.mxu0 0.0
        %1446 = vmatpush1.msra.mxu0 %v1397
        %1447 = vmatprep.subr.mxu0 0.0
        %1448 = vmatpush1.msra.mxu0 0.0
        %1449 = vmatprep.subr.mxu0 0.0
        %1450 = vmatpush1.msra.mxu0 0.0
        %1451 = vmatprep.subr.mxu0 0.0
        %1452 = vmatpush1.msra.mxu0 0.0
        %1453 = vmatprep.subr.mxu0 0.0
        %1454 = vmatpush1.msra.mxu0 0.0
        %1455 = vmatprep.subr.mxu0 0.0
        %1456 = vmatpush1.msra.mxu0 0.0
        %1457 = vmatprep.subr.mxu0 0.0
        %1458 = vmatpush1.msra.mxu0 0.0
        %1459 = vmatprep.subr.mxu0 0.0
        %1460 = vmatpush1.msra.mxu0 0.0
        %1461 = vmatprep.subr.mxu0 0.0
        %1462 = vmatpush1.msra.mxu0 0.0
        %1463 = vmatprep.subr.mxu0 0.0
        %1464 = vmatpush1.msra.mxu0 0.0
        %1465 = vmatprep.subr.mxu0 0.0
        %1466 = vmatpush1.msra.mxu0 0.0
        %1467 = vmatprep.subr.mxu0 0.0
        %1468 = vmatpush1.msra.mxu0 0.0
        %1469 = vmatprep.mubr.f32.mxu0 %v1400
        %1470 = vmatmul.mubr.f32.gmra.mrb[0].mxu0 %v1373
        %v1471 = vpop.f32.mrb[0].mxu0
        %v1472 = vadd.f32 0.0, %v1471
        %v1473 = vpop.f32.mrb[0].mxu0
        %1474 = vmatprep.mubr.f32.mxu0 %v1403
        %1475 = vmatmul.mubr.f32.gmra.mrb[0].mxu0 %v1375
        %v1476 = vpop.f32.mrb[0].mxu0
        %v1477 = vadd.f32 0.0, %v1476
        %v1478 = vpop.f32.mrb[0].mxu0
        %1479 = vdwg.mxu0
        %s1480 = scalar_lea.vmem %s4, 168
        %v1481 = vld [vmem:[%s1480] sm:$0xff]
        %v1482 = vld [vmem:[%s1480 + $0x8] sm:$0xff]
        %v1483 = vld [vmem:[%s1480 + $0x10] sm:$0xff]
        %v1484 = vld [vmem:[%s1480 + $0x18] sm:$0xff]
        %v1485 = vld [vmem:[%s1480 + $0x20] sm:$0xff]
        %v1486 = vld [vmem:[%s1480 + $0x28] sm:$0xff]
        %v1487 = vld [vmem:[%s1480 + $0x30] sm:$0xff]
        %v1488 = vld [vmem:[%s1480 + $0x38] sm:$0xff]
        %v1489 = vld [vmem:[%s1480 + $0x40] sm:$0xff]
        %v1490 = vld [vmem:[%s1480 + $0x48] sm:$0xff]
        %v1491 = vld [vmem:[%s1480 + $0x50] sm:$0xff]
        %v1492 = vld [vmem:[%s1480 + $0x58] sm:$0xff]
        %v1493 = vld [vmem:[%s1480 + $0x60] sm:$0xff]
        %v1494 = vld [vmem:[%s1480 + $0x68] sm:$0xff]
        %v1495 = vld [vmem:[%s1480 + $0x70] sm:$0xff]
        %v1496 = vld [vmem:[%s1480 + $0x78] sm:$0xff]
        %v1497 = vld [vmem:[%s1480 + $0x80] sm:$0xff]
        %v1498 = vld [vmem:[%s1480 + $0x88] sm:$0xff]
        %v1499 = vld [vmem:[%s1480 + $0x90] sm:$0xff]
        %v1500 = vld [vmem:[%s1480 + $0x98] sm:$0xff]
        %v1501 = vld [vmem:[%s1480 + $0xa0] sm:$0xff]
        %1502 = vmatprep.subr.mxu0 0.0
        %1503 = vmatpush1.msra.mxu0 %v1481
        %1504 = vmatprep.subr.mxu0 0.0
        %1505 = vmatpush1.msra.mxu0 %v1482
        %1506 = vmatprep.subr.mxu0 0.0
        %1507 = vmatpush1.msra.mxu0 %v1483
        %1508 = vmatprep.subr.mxu0 0.0
        %1509 = vmatpush1.msra.mxu0 %v1484
        %1510 = vmatprep.subr.mxu0 0.0
        %1511 = vmatpush1.msra.mxu0 %v1485
        %1512 = vmatprep.subr.mxu0 0.0
        %1513 = vmatpush1.msra.mxu0 %v1486
        %1514 = vmatprep.subr.mxu0 0.0
        %1515 = vmatpush1.msra.mxu0 %v1487
        %1516 = vmatprep.subr.mxu0 0.0
        %1517 = vmatpush1.msra.mxu0 %v1488
        %1518 = vmatprep.subr.mxu0 0.0
        %1519 = vmatpush1.msra.mxu0 %v1489
        %1520 = vmatprep.subr.mxu0 0.0
        %1521 = vmatpush1.msra.mxu0 %v1490
        %1522 = vmatprep.subr.mxu0 0.0
        %1523 = vmatpush1.msra.mxu0 %v1491
        %1524 = vmatprep.subr.mxu0 0.0
        %1525 = vmatpush1.msra.mxu0 %v1492
        %1526 = vmatprep.subr.mxu0 0.0
        %1527 = vmatpush1.msra.mxu0 %v1493
        %1528 = vmatprep.subr.mxu0 0.0
        %1529 = vmatpush1.msra.mxu0 %v1494
        %1530 = vmatprep.subr.mxu0 0.0
        %1531 = vmatpush1.msra.mxu0 %v1495
        %1532 = vmatprep.subr.mxu0 0.0
        %1533 = vmatpush1.msra.mxu0 %v1496
        %1534 = vmatprep.subr.mxu0 0.0
        %1535 = vmatpush1.msra.mxu0 %v1497
        %1536 = vmatprep.subr.mxu0 0.0
        %1537 = vmatpush1.msra.mxu0 %v1498
        %1538 = vmatprep.subr.mxu0 0.0
        %1539 = vmatpush1.msra.mxu0 %v1499
        %1540 = vmatprep.subr.mxu0 0.0
        %1541 = vmatpush1.msra.mxu0 %v1500
        %1542 = vmatprep.subr.mxu0 0.0
        %1543 = vmatpush1.msra.mxu0 %v1501
        %1544 = vmatprep.subr.mxu0 0.0
        %1545 = vmatpush1.msra.mxu0 0.0
        %1546 = vmatprep.subr.mxu0 0.0
        %1547 = vmatpush1.msra.mxu0 0.0
        %1548 = vmatprep.subr.mxu0 0.0
        %1549 = vmatpush1.msra.mxu0 0.0
        %1550 = vmatprep.subr.mxu0 0.0
        %1551 = vmatpush1.msra.mxu0 0.0
        %1552 = vmatprep.subr.mxu0 0.0
        %1553 = vmatpush1.msra.mxu0 0.0
        %1554 = vmatprep.subr.mxu0 0.0
        %1555 = vmatpush1.msra.mxu0 0.0
        %1556 = vmatprep.subr.mxu0 0.0
        %1557 = vmatpush1.msra.mxu0 0.0
        %1558 = vmatprep.subr.mxu0 0.0
        %1559 = vmatpush1.msra.mxu0 0.0
        %1560 = vmatprep.subr.mxu0 0.0
        %1561 = vmatpush1.msra.mxu0 0.0
        %1562 = vmatprep.subr.mxu0 0.0
        %1563 = vmatpush1.msra.mxu0 0.0
        %1564 = vmatprep.subr.mxu0 0.0
        %1565 = vmatpush1.msra.mxu0 0.0
        %1566 = vmatprep.mubr.f32.mxu0 %v1400
        %1567 = vmatmul.mubr.f32.gmra.mrb[0].mxu0 %v1373
        %v1568 = vpop.f32.mrb[0].mxu0
        %v1569 = vadd.f32 0.0, %v1568
        %v1570 = vpop.f32.mrb[0].mxu0
        %1571 = vmatprep.mubr.f32.mxu0 %v1403
        %1572 = vmatmul.mubr.f32.gmra.mrb[0].mxu0 %v1375
        %v1573 = vpop.f32.mrb[0].mxu0
        %v1574 = vadd.f32 0.0, %v1573
        %v1575 = vpop.f32.mrb[0].mxu0
        %1576 = vdwg.mxu0
        %v1577 = vmax.f32 %v1472, %v1569
        %v1578 = vmax.f32 %v1477, %v1574
        %vm1579 = vcmask 687104
        %1580 = vst.msk [vmem:[#allocation2] sm:$0xff] %vm1579, %v1577
        %vm1581 = vcmask 685056
        %1582 = vst.msk [vmem:[#allocation2 + $0x8] sm:$0x3f] %vm1581, %v1578
        %v1583 = vld [vmem:[#allocation2] sm:$0xff]
        %v1584 = vld [vmem:[#allocation2 + $0x8] sm:$0x3]
        %v1585 = vld [vmem:[%s5] sm:$0xff]
        %v1586 = vld [vmem:[%s5 + $0x8] sm:$0xff]
        %v1587 = vld [vmem:[%s5 + $0x10] sm:$0xff]
        %v1588 = vld [vmem:[%s5 + $0x18] sm:$0xff]
        %v1589 = vld [vmem:[%s5 + $0x20] sm:$0xff]
        %v1590 = vld [vmem:[%s5 + $0x28] sm:$0xff]
        %v1591 = vld [vmem:[%s5 + $0x30] sm:$0xff]
        %v1592 = vld [vmem:[%s5 + $0x38] sm:$0xff]
        %v1593 = vld [vmem:[%s5 + $0x40] sm:$0xff]
        %v1594 = vld [vmem:[%s5 + $0x48] sm:$0xff]
        %v1595 = vld [vmem:[%s5 + $0x50] sm:$0xff]
        %v1596 = vld [vmem:[%s5 + $0x58] sm:$0xff]
        %v1597 = vld [vmem:[%s5 + $0x60] sm:$0xff]
        %v1598 = vld [vmem:[%s5 + $0x68] sm:$0xff]
        %v1599 = vld [vmem:[%s5 + $0x70] sm:$0xff]
        %v1600 = vld [vmem:[%s5 + $0x78] sm:$0xff]
        %v1601 = vld [vmem:[%s5 + $0x80] sm:$0xff]
        %v1602 = vld [vmem:[%s5 + $0x88] sm:$0xff]
        %v1603 = vld [vmem:[%s5 + $0x90] sm:$0xff]
        %v1604 = vld [vmem:[%s5 + $0x98] sm:$0xff]
        %v1605 = vld [vmem:[%s5 + $0xa0] sm:$0xf]
        %v1606 = vld [vmem:[%s5 + $0xa8] sm:$0xf]
        %v1607 = vld [vmem:[#allocation2 + $0x1] sm:$0xff]
        %v1608 = vld [vmem:[#allocation2 + $0x9] sm:$0x3]
        %s1609 = scalar_lea.vmem %s5, 176
        %v1610 = vld [vmem:[%s1609] sm:$0xff]
        %v1611 = vld [vmem:[%s1609 + $0x8] sm:$0xff]
        %v1612 = vld [vmem:[%s1609 + $0x10] sm:$0xff]
        %v1613 = vld [vmem:[%s1609 + $0x18] sm:$0xff]
        %v1614 = vld [vmem:[%s1609 + $0x20] sm:$0xff]
        %v1615 = vld [vmem:[%s1609 + $0x28] sm:$0xff]
        %v1616 = vld [vmem:[%s1609 + $0x30] sm:$0xff]
        %v1617 = vld [vmem:[%s1609 + $0x38] sm:$0xff]
        %v1618 = vld [vmem:[%s1609 + $0x40] sm:$0xff]
        %v1619 = vld [vmem:[%s1609 + $0x48] sm:$0xff]
        %v1620 = vld [vmem:[%s1609 + $0x50] sm:$0xff]
        %v1621 = vld [vmem:[%s1609 + $0x58] sm:$0xff]
        %v1622 = vld [vmem:[%s1609 + $0x60] sm:$0xff]
        %v1623 = vld [vmem:[%s1609 + $0x68] sm:$0xff]
        %v1624 = vld [vmem:[%s1609 + $0x70] sm:$0xff]
        %v1625 = vld [vmem:[%s1609 + $0x78] sm:$0xff]
        %v1626 = vld [vmem:[%s1609 + $0x80] sm:$0xff]
        %v1627 = vld [vmem:[%s1609 + $0x88] sm:$0xff]
        %v1628 = vld [vmem:[%s1609 + $0x90] sm:$0xff]
        %v1629 = vld [vmem:[%s1609 + $0x98] sm:$0xff]
        %v1630 = vld [vmem:[%s1609 + $0xa0] sm:$0xf]
        %v1631 = vld [vmem:[%s1609 + $0xa8] sm:$0xf]
        %v1633 = vsel %vm1579, %v1607, 0
        %v1636 = vsel %vm1579, %v1608, 0
        %v1639 = vsel %vm1203, %v1630, 0
        %v1642 = vsel %vm1203, %v1631, 0
        %1644 = vmatprep.subr.mxu0 %v1611
        %1645 = vmatpush1.msra.mxu0 %v1610
        %1646 = vmatprep.subr.mxu0 %v1613
        %1647 = vmatpush1.msra.mxu0 %v1612
        %1648 = vmatprep.subr.mxu0 %v1615
        %1649 = vmatpush1.msra.mxu0 %v1614
        %1650 = vmatprep.subr.mxu0 %v1617
        %1651 = vmatpush1.msra.mxu0 %v1616
        %1652 = vmatprep.subr.mxu0 %v1619
        %1653 = vmatpush1.msra.mxu0 %v1618
        %1654 = vmatprep.subr.mxu0 %v1621
        %1655 = vmatpush1.msra.mxu0 %v1620
        %1656 = vmatprep.subr.mxu0 %v1623
        %1657 = vmatpush1.msra.mxu0 %v1622
        %1658 = vmatprep.subr.mxu0 %v1625
        %1659 = vmatpush1.msra.mxu0 %v1624
        %1660 = vmatprep.subr.mxu0 %v1627
        %1661 = vmatpush1.msra.mxu0 %v1626
        %1662 = vmatprep.subr.mxu0 %v1629
        %1663 = vmatpush1.msra.mxu0 %v1628
        %1664 = vmatprep.subr.mxu0 %v1642
        %1665 = vmatpush1.msra.mxu0 %v1639
        %1666 = vmatprep.subr.mxu0 0.0
        %1667 = vmatpush1.msra.mxu0 0.0
        %1668 = vmatprep.subr.mxu0 0.0
        %1669 = vmatpush1.msra.mxu0 0.0
        %1670 = vmatprep.subr.mxu0 0.0
        %1671 = vmatpush1.msra.mxu0 0.0
        %1672 = vmatprep.subr.mxu0 0.0
        %1673 = vmatpush1.msra.mxu0 0.0
        %1674 = vmatprep.subr.mxu0 0.0
        %1675 = vmatpush1.msra.mxu0 0.0
        %1676 = vmatprep.subr.mxu0 0.0
        %1677 = vmatpush1.msra.mxu0 0.0
        %1678 = vmatprep.subr.mxu0 0.0
        %1679 = vmatpush1.msra.mxu0 0.0
        %1680 = vmatprep.subr.mxu0 0.0
        %1681 = vmatpush1.msra.mxu0 0.0
        %1682 = vmatprep.subr.mxu0 0.0
        %1683 = vmatpush1.msra.mxu0 0.0
        %1684 = vmatprep.subr.mxu0 0.0
        %1685 = vmatpush1.msra.mxu0 0.0
        %1686 = vmatprep.subr.mxu0 0.0
        %1687 = vmatpush1.msra.mxu0 0.0
        %1688 = vmatprep.subr.mxu0 0.0
        %1689 = vmatpush1.msra.mxu0 0.0
        %1690 = vmatprep.subr.mxu0 0.0
        %1691 = vmatpush1.msra.mxu0 0.0
        %1692 = vmatprep.subr.mxu0 0.0
        %1693 = vmatpush1.msra.mxu0 0.0
        %1694 = vmatprep.subr.mxu0 0.0
        %1695 = vmatpush1.msra.mxu0 0.0
        %1696 = vmatprep.subr.mxu0 0.0
        %1697 = vmatpush1.msra.mxu0 0.0
        %1698 = vmatprep.subr.mxu0 0.0
        %1699 = vmatpush1.msra.mxu0 0.0
        %1700 = vmatprep.subr.mxu0 0.0
        %1701 = vmatpush1.msra.mxu0 0.0
        %1702 = vmatprep.subr.mxu0 0.0
        %1703 = vmatpush1.msra.mxu0 0.0
        %1704 = vmatprep.subr.mxu0 0.0
        %1705 = vmatpush1.msra.mxu0 0.0
        %1706 = vmatprep.subr.mxu0 0.0
        %1707 = vmatpush1.msra.mxu0 0.0
        %1708 = vmatprep.mubr.f32.mxu0 0.0
        %1709 = vmatmul.mubr.f32.gmra.mrb[0].mxu0 %v1633
        %v1710 = vpop.f32.mrb[0].mxu0
        %v1711 = vadd.f32 0.0, %v1710
        %v1712 = vpop.f32.mrb[0].mxu0
        %v1713 = vadd.f32 0.0, %v1712
        %1714 = vmatprep.mubr.f32.mxu0 0.0
        %1715 = vmatmul.mubr.f32.gmra.mrb[0].mxu0 %v1636
        %v1716 = vpop.f32.mrb[0].mxu0
        %v1717 = vadd.f32 0.0, %v1716
        %v1718 = vpop.f32.mrb[0].mxu0
        %v1719 = vadd.f32 0.0, %v1718
        %1720 = vdwg.mxu0
        %v1722 = vsel %vm1579, %v1583, 0
        %v1725 = vsel %vm1579, %v1584, 0
        %v1728 = vsel %vm1203, %v1605, 0
        %v1731 = vsel %vm1203, %v1606, 0
        %1733 = vmatprep.subr.mxu0 %v1586
        %1734 = vmatpush1.msra.mxu0 %v1585
        %1735 = vmatprep.subr.mxu0 %v1588
        %1736 = vmatpush1.msra.mxu0 %v1587
        %1737 = vmatprep.subr.mxu0 %v1590
        %1738 = vmatpush1.msra.mxu0 %v1589
        %1739 = vmatprep.subr.mxu0 %v1592
        %1740 = vmatpush1.msra.mxu0 %v1591
        %1741 = vmatprep.subr.mxu0 %v1594
        %1742 = vmatpush1.msra.mxu0 %v1593
        %1743 = vmatprep.subr.mxu0 %v1596
        %1744 = vmatpush1.msra.mxu0 %v1595
        %1745 = vmatprep.subr.mxu0 %v1598
        %1746 = vmatpush1.msra.mxu0 %v1597
        %1747 = vmatprep.subr.mxu0 %v1600
        %1748 = vmatpush1.msra.mxu0 %v1599
        %1749 = vmatprep.subr.mxu0 %v1602
        %1750 = vmatpush1.msra.mxu0 %v1601
        %1751 = vmatprep.subr.mxu0 %v1604
        %1752 = vmatpush1.msra.mxu0 %v1603
        %1753 = vmatprep.subr.mxu0 %v1731
        %1754 = vmatpush1.msra.mxu0 %v1728
        %1755 = vmatprep.subr.mxu0 0.0
        %1756 = vmatpush1.msra.mxu0 0.0
        %1757 = vmatprep.subr.mxu0 0.0
        %1758 = vmatpush1.msra.mxu0 0.0
        %1759 = vmatprep.subr.mxu0 0.0
        %1760 = vmatpush1.msra.mxu0 0.0
        %1761 = vmatprep.subr.mxu0 0.0
        %1762 = vmatpush1.msra.mxu0 0.0
        %1763 = vmatprep.subr.mxu0 0.0
        %1764 = vmatpush1.msra.mxu0 0.0
        %1765 = vmatprep.subr.mxu0 0.0
        %1766 = vmatpush1.msra.mxu0 0.0
        %1767 = vmatprep.subr.mxu0 0.0
        %1768 = vmatpush1.msra.mxu0 0.0
        %1769 = vmatprep.subr.mxu0 0.0
        %1770 = vmatpush1.msra.mxu0 0.0
        %1771 = vmatprep.subr.mxu0 0.0
        %1772 = vmatpush1.msra.mxu0 0.0
        %1773 = vmatprep.subr.mxu0 0.0
        %1774 = vmatpush1.msra.mxu0 0.0
        %1775 = vmatprep.subr.mxu0 0.0
        %1776 = vmatpush1.msra.mxu0 0.0
        %1777 = vmatprep.subr.mxu0 0.0
        %1778 = vmatpush1.msra.mxu0 0.0
        %1779 = vmatprep.subr.mxu0 0.0
        %1780 = vmatpush1.msra.mxu0 0.0
        %1781 = vmatprep.subr.mxu0 0.0
        %1782 = vmatpush1.msra.mxu0 0.0
        %1783 = vmatprep.subr.mxu0 0.0
        %1784 = vmatpush1.msra.mxu0 0.0
        %1785 = vmatprep.subr.mxu0 0.0
        %1786 = vmatpush1.msra.mxu0 0.0
        %1787 = vmatprep.subr.mxu0 0.0
        %1788 = vmatpush1.msra.mxu0 0.0
        %1789 = vmatprep.subr.mxu0 0.0
        %1790 = vmatpush1.msra.mxu0 0.0
        %1791 = vmatprep.subr.mxu0 0.0
        %1792 = vmatpush1.msra.mxu0 0.0
        %1793 = vmatprep.subr.mxu0 0.0
        %1794 = vmatpush1.msra.mxu0 0.0
        %1795 = vmatprep.subr.mxu0 0.0
        %1796 = vmatpush1.msra.mxu0 0.0
        %1797 = vmatprep.mubr.f32.mxu0 0.0
        %1798 = vmatmul.mubr.f32.gmra.mrb[0].mxu0 %v1722
        %v1799 = vpop.f32.mrb[0].mxu0
        %v1800 = vadd.f32 %v1711, %v1799
        %v1801 = vpop.f32.mrb[0].mxu0
        %v1802 = vadd.f32 %v1713, %v1801
        %1803 = vmatprep.mubr.f32.mxu0 0.0
        %1804 = vmatmul.mubr.f32.gmra.mrb[0].mxu0 %v1725
        %v1805 = vpop.f32.mrb[0].mxu0
        %v1806 = vadd.f32 %v1717, %v1805
        %v1807 = vpop.f32.mrb[0].mxu0
        %v1808 = vadd.f32 %v1719, %v1807
        %1809 = vdwg.mxu0
        %v1810 = vld [vmem:[#allocation2 + $0x2] sm:$0xff]
        %v1811 = vld [vmem:[#allocation2 + $0xa] sm:$0x3]
        %s1812 = scalar_lea.vmem %s5, 352
        %v1813 = vld [vmem:[%s1812] sm:$0xff]
        %v1814 = vld [vmem:[%s1812 + $0x8] sm:$0xff]
        %v1815 = vld [vmem:[%s1812 + $0x10] sm:$0xff]
        %v1816 = vld [vmem:[%s1812 + $0x18] sm:$0xff]
        %v1817 = vld [vmem:[%s1812 + $0x20] sm:$0xff]
        %v1818 = vld [vmem:[%s1812 + $0x28] sm:$0xff]
        %v1819 = vld [vmem:[%s1812 + $0x30] sm:$0xff]
        %v1820 = vld [vmem:[%s1812 + $0x38] sm:$0xff]
        %v1821 = vld [vmem:[%s1812 + $0x40] sm:$0xff]
        %v1822 = vld [vmem:[%s1812 + $0x48] sm:$0xff]
        %v1823 = vld [vmem:[%s1812 + $0x50] sm:$0xff]
        %v1824 = vld [vmem:[%s1812 + $0x58] sm:$0xff]
        %v1825 = vld [vmem:[%s1812 + $0x60] sm:$0xff]
        %v1826 = vld [vmem:[%s1812 + $0x68] sm:$0xff]
        %v1827 = vld [vmem:[%s1812 + $0x70] sm:$0xff]
        %v1828 = vld [vmem:[%s1812 + $0x78] sm:$0xff]
        %v1829 = vld [vmem:[%s1812 + $0x80] sm:$0xff]
        %v1830 = vld [vmem:[%s1812 + $0x88] sm:$0xff]
        %v1831 = vld [vmem:[%s1812 + $0x90] sm:$0xff]
        %v1832 = vld [vmem:[%s1812 + $0x98] sm:$0xff]
        %v1833 = vld [vmem:[%s1812 + $0xa0] sm:$0xf]
        %v1834 = vld [vmem:[%s1812 + $0xa8] sm:$0xf]
        %v1836 = vsel %vm1579, %v1810, 0
        %v1839 = vsel %vm1579, %v1811, 0
        %v1842 = vsel %vm1203, %v1833, 0
        %v1845 = vsel %vm1203, %v1834, 0
        %1847 = vmatprep.subr.mxu0 %v1814
        %1848 = vmatpush1.msra.mxu0 %v1813
        %1849 = vmatprep.subr.mxu0 %v1816
        %1850 = vmatpush1.msra.mxu0 %v1815
        %1851 = vmatprep.subr.mxu0 %v1818
        %1852 = vmatpush1.msra.mxu0 %v1817
        %1853 = vmatprep.subr.mxu0 %v1820
        %1854 = vmatpush1.msra.mxu0 %v1819
        %1855 = vmatprep.subr.mxu0 %v1822
        %1856 = vmatpush1.msra.mxu0 %v1821
        %1857 = vmatprep.subr.mxu0 %v1824
        %1858 = vmatpush1.msra.mxu0 %v1823
        %1859 = vmatprep.subr.mxu0 %v1826
        %1860 = vmatpush1.msra.mxu0 %v1825
        %1861 = vmatprep.subr.mxu0 %v1828
        %1862 = vmatpush1.msra.mxu0 %v1827
        %1863 = vmatprep.subr.mxu0 %v1830
        %1864 = vmatpush1.msra.mxu0 %v1829
        %1865 = vmatprep.subr.mxu0 %v1832
        %1866 = vmatpush1.msra.mxu0 %v1831
        %1867 = vmatprep.subr.mxu0 %v1845
        %1868 = vmatpush1.msra.mxu0 %v1842
        %1869 = vmatprep.subr.mxu0 0.0
        %1870 = vmatpush1.msra.mxu0 0.0
        %1871 = vmatprep.subr.mxu0 0.0
        %1872 = vmatpush1.msra.mxu0 0.0
        %1873 = vmatprep.subr.mxu0 0.0
        %1874 = vmatpush1.msra.mxu0 0.0
        %1875 = vmatprep.subr.mxu0 0.0
        %1876 = vmatpush1.msra.mxu0 0.0
        %1877 = vmatprep.subr.mxu0 0.0
        %1878 = vmatpush1.msra.mxu0 0.0
        %1879 = vmatprep.subr.mxu0 0.0
        %1880 = vmatpush1.msra.mxu0 0.0
        %1881 = vmatprep.subr.mxu0 0.0
        %1882 = vmatpush1.msra.mxu0 0.0
        %1883 = vmatprep.subr.mxu0 0.0
        %1884 = vmatpush1.msra.mxu0 0.0
        %1885 = vmatprep.subr.mxu0 0.0
        %1886 = vmatpush1.msra.mxu0 0.0
        %1887 = vmatprep.subr.mxu0 0.0
        %1888 = vmatpush1.msra.mxu0 0.0
        %1889 = vmatprep.subr.mxu0 0.0
        %1890 = vmatpush1.msra.mxu0 0.0
        %1891 = vmatprep.subr.mxu0 0.0
        %1892 = vmatpush1.msra.mxu0 0.0
        %1893 = vmatprep.subr.mxu0 0.0
        %1894 = vmatpush1.msra.mxu0 0.0
        %1895 = vmatprep.subr.mxu0 0.0
        %1896 = vmatpush1.msra.mxu0 0.0
        %1897 = vmatprep.subr.mxu0 0.0
        %1898 = vmatpush1.msra.mxu0 0.0
        %1899 = vmatprep.subr.mxu0 0.0
        %1900 = vmatpush1.msra.mxu0 0.0
        %1901 = vmatprep.subr.mxu0 0.0
        %1902 = vmatpush1.msra.mxu0 0.0
        %1903 = vmatprep.subr.mxu0 0.0
        %1904 = vmatpush1.msra.mxu0 0.0
        %1905 = vmatprep.subr.mxu0 0.0
        %1906 = vmatpush1.msra.mxu0 0.0
        %1907 = vmatprep.subr.mxu0 0.0
        %1908 = vmatpush1.msra.mxu0 0.0
        %1909 = vmatprep.subr.mxu0 0.0
        %1910 = vmatpush1.msra.mxu0 0.0
        %1911 = vmatprep.mubr.f32.mxu0 0.0
        %1912 = vmatmul.mubr.f32.gmra.mrb[0].mxu0 %v1836
        %v1913 = vpop.f32.mrb[0].mxu0
        %v1914 = vadd.f32 0.0, %v1913
        %v1915 = vpop.f32.mrb[0].mxu0
        %v1916 = vadd.f32 0.0, %v1915
        %1917 = vmatprep.mubr.f32.mxu0 0.0
        %1918 = vmatmul.mubr.f32.gmra.mrb[0].mxu0 %v1839
        %v1919 = vpop.f32.mrb[0].mxu0
        %v1920 = vadd.f32 0.0, %v1919
        %v1921 = vpop.f32.mrb[0].mxu0
        %v1922 = vadd.f32 0.0, %v1921
        %1923 = vdwg.mxu0
        %v1924 = vadd.f32 %v1800, %v1914
        %v1925 = vadd.f32 %v1802, %v1916
        %v1926 = vadd.f32 %v1806, %v1920
        %v1927 = vadd.f32 %v1808, %v1922
        %v1928 = vld [vmem:[#allocation2 + $0x3] sm:$0xff]
        %v1929 = vld [vmem:[#allocation2 + $0xb] sm:$0x3]
        %s1930 = scalar_lea.vmem %s5, 528
        %v1931 = vld [vmem:[%s1930] sm:$0xff]
        %v1932 = vld [vmem:[%s1930 + $0x8] sm:$0xff]
        %v1933 = vld [vmem:[%s1930 + $0x10] sm:$0xff]
        %v1934 = vld [vmem:[%s1930 + $0x18] sm:$0xff]
        %v1935 = vld [vmem:[%s1930 + $0x20] sm:$0xff]
        %v1936 = vld [vmem:[%s1930 + $0x28] sm:$0xff]
        %v1937 = vld [vmem:[%s1930 + $0x30] sm:$0xff]
        %v1938 = vld [vmem:[%s1930 + $0x38] sm:$0xff]
        %v1939 = vld [vmem:[%s1930 + $0x40] sm:$0xff]
        %v1940 = vld [vmem:[%s1930 + $0x48] sm:$0xff]
        %v1941 = vld [vmem:[%s1930 + $0x50] sm:$0xff]
        %v1942 = vld [vmem:[%s1930 + $0x58] sm:$0xff]
        %v1943 = vld [vmem:[%s1930 + $0x60] sm:$0xff]
        %v1944 = vld [vmem:[%s1930 + $0x68] sm:$0xff]
        %v1945 = vld [vmem:[%s1930 + $0x70] sm:$0xff]
        %v1946 = vld [vmem:[%s1930 + $0x78] sm:$0xff]
        %v1947 = vld [vmem:[%s1930 + $0x80] sm:$0xff]
        %v1948 = vld [vmem:[%s1930 + $0x88] sm:$0xff]
        %v1949 = vld [vmem:[%s1930 + $0x90] sm:$0xff]
        %v1950 = vld [vmem:[%s1930 + $0x98] sm:$0xff]
        %v1951 = vld [vmem:[%s1930 + $0xa0] sm:$0xf]
        %v1952 = vld [vmem:[%s1930 + $0xa8] sm:$0xf]
        %v1954 = vsel %vm1579, %v1928, 0
        %v1957 = vsel %vm1579, %v1929, 0
        %v1960 = vsel %vm1203, %v1951, 0
        %v1963 = vsel %vm1203, %v1952, 0
        %1965 = vmatprep.subr.mxu0 %v1932
        %1966 = vmatpush1.msra.mxu0 %v1931
        %1967 = vmatprep.subr.mxu0 %v1934
        %1968 = vmatpush1.msra.mxu0 %v1933
        %1969 = vmatprep.subr.mxu0 %v1936
        %1970 = vmatpush1.msra.mxu0 %v1935
        %1971 = vmatprep.subr.mxu0 %v1938
        %1972 = vmatpush1.msra.mxu0 %v1937
        %1973 = vmatprep.subr.mxu0 %v1940
        %1974 = vmatpush1.msra.mxu0 %v1939
        %1975 = vmatprep.subr.mxu0 %v1942
        %1976 = vmatpush1.msra.mxu0 %v1941
        %1977 = vmatprep.subr.mxu0 %v1944
        %1978 = vmatpush1.msra.mxu0 %v1943
        %1979 = vmatprep.subr.mxu0 %v1946
        %1980 = vmatpush1.msra.mxu0 %v1945
        %1981 = vmatprep.subr.mxu0 %v1948
        %1982 = vmatpush1.msra.mxu0 %v1947
        %1983 = vmatprep.subr.mxu0 %v1950
        %1984 = vmatpush1.msra.mxu0 %v1949
        %1985 = vmatprep.subr.mxu0 %v1963
        %1986 = vmatpush1.msra.mxu0 %v1960
        %1987 = vmatprep.subr.mxu0 0.0
        %1988 = vmatpush1.msra.mxu0 0.0
        %1989 = vmatprep.subr.mxu0 0.0
        %1990 = vmatpush1.msra.mxu0 0.0
        %1991 = vmatprep.subr.mxu0 0.0
        %1992 = vmatpush1.msra.mxu0 0.0
        %1993 = vmatprep.subr.mxu0 0.0
        %1994 = vmatpush1.msra.mxu0 0.0
        %1995 = vmatprep.subr.mxu0 0.0
        %1996 = vmatpush1.msra.mxu0 0.0
        %1997 = vmatprep.subr.mxu0 0.0
        %1998 = vmatpush1.msra.mxu0 0.0
        %1999 = vmatprep.subr.mxu0 0.0
        %2000 = vmatpush1.msra.mxu0 0.0
        %2001 = vmatprep.subr.mxu0 0.0
        %2002 = vmatpush1.msra.mxu0 0.0
        %2003 = vmatprep.subr.mxu0 0.0
        %2004 = vmatpush1.msra.mxu0 0.0
        %2005 = vmatprep.subr.mxu0 0.0
        %2006 = vmatpush1.msra.mxu0 0.0
        %2007 = vmatprep.subr.mxu0 0.0
        %2008 = vmatpush1.msra.mxu0 0.0
        %2009 = vmatprep.subr.mxu0 0.0
        %2010 = vmatpush1.msra.mxu0 0.0
        %2011 = vmatprep.subr.mxu0 0.0
        %2012 = vmatpush1.msra.mxu0 0.0
        %2013 = vmatprep.subr.mxu0 0.0
        %2014 = vmatpush1.msra.mxu0 0.0
        %2015 = vmatprep.subr.mxu0 0.0
        %2016 = vmatpush1.msra.mxu0 0.0
        %2017 = vmatprep.subr.mxu0 0.0
        %2018 = vmatpush1.msra.mxu0 0.0
        %2019 = vmatprep.subr.mxu0 0.0
        %2020 = vmatpush1.msra.mxu0 0.0
        %2021 = vmatprep.subr.mxu0 0.0
        %2022 = vmatpush1.msra.mxu0 0.0
        %2023 = vmatprep.subr.mxu0 0.0
        %2024 = vmatpush1.msra.mxu0 0.0
        %2025 = vmatprep.subr.mxu0 0.0
        %2026 = vmatpush1.msra.mxu0 0.0
        %2027 = vmatprep.subr.mxu0 0.0
        %2028 = vmatpush1.msra.mxu0 0.0
        %2029 = vmatprep.mubr.f32.mxu0 0.0
        %2030 = vmatmul.mubr.f32.gmra.mrb[0].mxu0 %v1954
        %v2031 = vpop.f32.mrb[0].mxu0
        %v2032 = vadd.f32 0.0, %v2031
        %v2033 = vpop.f32.mrb[0].mxu0
        %v2034 = vadd.f32 0.0, %v2033
        %2035 = vmatprep.mubr.f32.mxu0 0.0
        %2036 = vmatmul.mubr.f32.gmra.mrb[0].mxu0 %v1957
        %v2037 = vpop.f32.mrb[0].mxu0
        %v2038 = vadd.f32 0.0, %v2037
        %v2039 = vpop.f32.mrb[0].mxu0
        %v2040 = vadd.f32 0.0, %v2039
        %2041 = vdwg.mxu0
        %v2042 = vadd.f32 %v1924, %v2032
        %v2043 = vadd.f32 %v1925, %v2034
        %v2044 = vadd.f32 %v1926, %v2038
        %v2045 = vadd.f32 %v1927, %v2040
        %v2046 = vld [vmem:[#allocation2 + $0x4] sm:$0xff]
        %v2047 = vld [vmem:[#allocation2 + $0xc] sm:$0x3]
        %s2048 = scalar_lea.vmem %s5, 704
        %v2049 = vld [vmem:[%s2048] sm:$0xff]
        %v2050 = vld [vmem:[%s2048 + $0x8] sm:$0xff]
        %v2051 = vld [vmem:[%s2048 + $0x10] sm:$0xff]
        %v2052 = vld [vmem:[%s2048 + $0x18] sm:$0xff]
        %v2053 = vld [vmem:[%s2048 + $0x20] sm:$0xff]
        %v2054 = vld [vmem:[%s2048 + $0x28] sm:$0xff]
        %v2055 = vld [vmem:[%s2048 + $0x30] sm:$0xff]
        %v2056 = vld [vmem:[%s2048 + $0x38] sm:$0xff]
        %v2057 = vld [vmem:[%s2048 + $0x40] sm:$0xff]
        %v2058 = vld [vmem:[%s2048 + $0x48] sm:$0xff]
        %v2059 = vld [vmem:[%s2048 + $0x50] sm:$0xff]
        %v2060 = vld [vmem:[%s2048 + $0x58] sm:$0xff]
        %v2061 = vld [vmem:[%s2048 + $0x60] sm:$0xff]
        %v2062 = vld [vmem:[%s2048 + $0x68] sm:$0xff]
        %v2063 = vld [vmem:[%s2048 + $0x70] sm:$0xff]
        %v2064 = vld [vmem:[%s2048 + $0x78] sm:$0xff]
        %v2065 = vld [vmem:[%s2048 + $0x80] sm:$0xff]
        %v2066 = vld [vmem:[%s2048 + $0x88] sm:$0xff]
        %v2067 = vld [vmem:[%s2048 + $0x90] sm:$0xff]
        %v2068 = vld [vmem:[%s2048 + $0x98] sm:$0xff]
        %v2069 = vld [vmem:[%s2048 + $0xa0] sm:$0xf]
        %v2070 = vld [vmem:[%s2048 + $0xa8] sm:$0xf]
        %v2072 = vsel %vm1579, %v2046, 0
        %v2075 = vsel %vm1579, %v2047, 0
        %v2078 = vsel %vm1203, %v2069, 0
        %v2081 = vsel %vm1203, %v2070, 0
        %2083 = vmatprep.subr.mxu0 %v2050
        %2084 = vmatpush1.msra.mxu0 %v2049
        %2085 = vmatprep.subr.mxu0 %v2052
        %2086 = vmatpush1.msra.mxu0 %v2051
        %2087 = vmatprep.subr.mxu0 %v2054
        %2088 = vmatpush1.msra.mxu0 %v2053
        %2089 = vmatprep.subr.mxu0 %v2056
        %2090 = vmatpush1.msra.mxu0 %v2055
        %2091 = vmatprep.subr.mxu0 %v2058
        %2092 = vmatpush1.msra.mxu0 %v2057
        %2093 = vmatprep.subr.mxu0 %v2060
        %2094 = vmatpush1.msra.mxu0 %v2059
        %2095 = vmatprep.subr.mxu0 %v2062
        %2096 = vmatpush1.msra.mxu0 %v2061
        %2097 = vmatprep.subr.mxu0 %v2064
        %2098 = vmatpush1.msra.mxu0 %v2063
        %2099 = vmatprep.subr.mxu0 %v2066
        %2100 = vmatpush1.msra.mxu0 %v2065
        %2101 = vmatprep.subr.mxu0 %v2068
        %2102 = vmatpush1.msra.mxu0 %v2067
        %2103 = vmatprep.subr.mxu0 %v2081
        %2104 = vmatpush1.msra.mxu0 %v2078
        %2105 = vmatprep.subr.mxu0 0.0
        %2106 = vmatpush1.msra.mxu0 0.0
        %2107 = vmatprep.subr.mxu0 0.0
        %2108 = vmatpush1.msra.mxu0 0.0
        %2109 = vmatprep.subr.mxu0 0.0
        %2110 = vmatpush1.msra.mxu0 0.0
        %2111 = vmatprep.subr.mxu0 0.0
        %2112 = vmatpush1.msra.mxu0 0.0
        %2113 = vmatprep.subr.mxu0 0.0
        %2114 = vmatpush1.msra.mxu0 0.0
        %2115 = vmatprep.subr.mxu0 0.0
        %2116 = vmatpush1.msra.mxu0 0.0
        %2117 = vmatprep.subr.mxu0 0.0
        %2118 = vmatpush1.msra.mxu0 0.0
        %2119 = vmatprep.subr.mxu0 0.0
        %2120 = vmatpush1.msra.mxu0 0.0
        %2121 = vmatprep.subr.mxu0 0.0
        %2122 = vmatpush1.msra.mxu0 0.0
        %2123 = vmatprep.subr.mxu0 0.0
        %2124 = vmatpush1.msra.mxu0 0.0
        %2125 = vmatprep.subr.mxu0 0.0
        %2126 = vmatpush1.msra.mxu0 0.0
        %2127 = vmatprep.subr.mxu0 0.0
        %2128 = vmatpush1.msra.mxu0 0.0
        %2129 = vmatprep.subr.mxu0 0.0
        %2130 = vmatpush1.msra.mxu0 0.0
        %2131 = vmatprep.subr.mxu0 0.0
        %2132 = vmatpush1.msra.mxu0 0.0
        %2133 = vmatprep.subr.mxu0 0.0
        %2134 = vmatpush1.msra.mxu0 0.0
        %2135 = vmatprep.subr.mxu0 0.0
        %2136 = vmatpush1.msra.mxu0 0.0
        %2137 = vmatprep.subr.mxu0 0.0
        %2138 = vmatpush1.msra.mxu0 0.0
        %2139 = vmatprep.subr.mxu0 0.0
        %2140 = vmatpush1.msra.mxu0 0.0
        %2141 = vmatprep.subr.mxu0 0.0
        %2142 = vmatpush1.msra.mxu0 0.0
        %2143 = vmatprep.subr.mxu0 0.0
        %2144 = vmatpush1.msra.mxu0 0.0
        %2145 = vmatprep.subr.mxu0 0.0
        %2146 = vmatpush1.msra.mxu0 0.0
        %2147 = vmatprep.mubr.f32.mxu0 0.0
        %2148 = vmatmul.mubr.f32.gmra.mrb[0].mxu0 %v2072
        %v2149 = vpop.f32.mrb[0].mxu0
        %v2150 = vadd.f32 0.0, %v2149
        %v2151 = vpop.f32.mrb[0].mxu0
        %v2152 = vadd.f32 0.0, %v2151
        %2153 = vmatprep.mubr.f32.mxu0 0.0
        %2154 = vmatmul.mubr.f32.gmra.mrb[0].mxu0 %v2075
        %v2155 = vpop.f32.mrb[0].mxu0
        %v2156 = vadd.f32 0.0, %v2155
        %v2157 = vpop.f32.mrb[0].mxu0
        %v2158 = vadd.f32 0.0, %v2157
        %2159 = vdwg.mxu0
        %v2160 = vadd.f32 %v2042, %v2150
        %v2161 = vadd.f32 %v2043, %v2152
        %v2162 = vadd.f32 %v2044, %v2156
        %v2163 = vadd.f32 %v2045, %v2158
        %v2164 = vld [vmem:[%s6] sm:$0x3]
        %v2166 = vlaneseq
        %v2167 = vshrl.u32 %v2166, 7
        %v2168 = vsub.s32 0, %v2167
        %v2169 = vrot.slane %v2164, %v2168
        %v2170 = vlaneseq
        %v2171 = vshrl.u32 %v2170, 7
        %v2172 = vsub.s32 1, %v2171
        %v2173 = vrot.slane %v2164, %v2172
        %v2176 = vadd.f32 %v2160, %v2169
        %v2177 = vadd.f32 %v2161, %v2173
        %v2178 = vadd.f32 %v2162, %v2169
        %v2179 = vadd.f32 %v2163, %v2173
        %v2180 = vmax.f32 %v2176, 0.0
        %v2181 = vmax.f32 %v2177, 0.0
        %v2182 = vmax.f32 %v2178, 0.0
        %v2183 = vmax.f32 %v2179, 0.0
        %v2184 = vld [vmem:[%s7] sm:$0x1f]
        %vm2185 = vcmask 80896
        %v2187 = vsel %vm2185, %v2184, 0
        %vm2189 = vcmask 1041408
        %v2191 = vsel %vm2189, %v2182, 0
        %v2194 = vsel %vm2189, %v2183, 0
        %2196 = vmatprep.subr.mxu0 %v2181
        %2197 = vmatpush1.msra.mxu0 %v2180
        %2198 = vmatprep.subr.mxu0 %v2194
        %2199 = vmatpush1.msra.mxu0 %v2191
        %2200 = vmatprep.subr.mxu0 0.0
        %2201 = vmatpush1.msra.mxu0 0.0
        %2202 = vmatprep.subr.mxu0 0.0
        %2203 = vmatpush1.msra.mxu0 0.0
        %2204 = vmatprep.subr.mxu0 0.0
        %2205 = vmatpush1.msra.mxu0 0.0
        %2206 = vmatprep.subr.mxu0 0.0
        %2207 = vmatpush1.msra.mxu0 0.0
        %2208 = vmatprep.subr.mxu0 0.0
        %2209 = vmatpush1.msra.mxu0 0.0
        %2210 = vmatprep.subr.mxu0 0.0
        %2211 = vmatpush1.msra.mxu0 0.0
        %2212 = vmatprep.subr.mxu0 0.0
        %2213 = vmatpush1.msra.mxu0 0.0
        %2214 = vmatprep.subr.mxu0 0.0
        %2215 = vmatpush1.msra.mxu0 0.0
        %2216 = vmatprep.subr.mxu0 0.0
        %2217 = vmatpush1.msra.mxu0 0.0
        %2218 = vmatprep.subr.mxu0 0.0
        %2219 = vmatpush1.msra.mxu0 0.0
        %2220 = vmatprep.subr.mxu0 0.0
        %2221 = vmatpush1.msra.mxu0 0.0
        %2222 = vmatprep.subr.mxu0 0.0
        %2223 = vmatpush1.msra.mxu0 0.0
        %2224 = vmatprep.subr.mxu0 0.0
        %2225 = vmatpush1.msra.mxu0 0.0
        %2226 = vmatprep.subr.mxu0 0.0
        %2227 = vmatpush1.msra.mxu0 0.0
        %2228 = vmatprep.subr.mxu0 0.0
        %2229 = vmatpush1.msra.mxu0 0.0
        %2230 = vmatprep.subr.mxu0 0.0
        %2231 = vmatpush1.msra.mxu0 0.0
        %2232 = vmatprep.subr.mxu0 0.0
        %2233 = vmatpush1.msra.mxu0 0.0
        %2234 = vmatprep.subr.mxu0 0.0
        %2235 = vmatpush1.msra.mxu0 0.0
        %2236 = vmatprep.subr.mxu0 0.0
        %2237 = vmatpush1.msra.mxu0 0.0
        %2238 = vmatprep.subr.mxu0 0.0
        %2239 = vmatpush1.msra.mxu0 0.0
        %2240 = vmatprep.subr.mxu0 0.0
        %2241 = vmatpush1.msra.mxu0 0.0
        %2242 = vmatprep.subr.mxu0 0.0
        %2243 = vmatpush1.msra.mxu0 0.0
        %2244 = vmatprep.subr.mxu0 0.0
        %2245 = vmatpush1.msra.mxu0 0.0
        %2246 = vmatprep.subr.mxu0 0.0
        %2247 = vmatpush1.msra.mxu0 0.0
        %2248 = vmatprep.subr.mxu0 0.0
        %2249 = vmatpush1.msra.mxu0 0.0
        %2250 = vmatprep.subr.mxu0 0.0
        %2251 = vmatpush1.msra.mxu0 0.0
        %2252 = vmatprep.subr.mxu0 0.0
        %2253 = vmatpush1.msra.mxu0 0.0
        %2254 = vmatprep.subr.mxu0 0.0
        %2255 = vmatpush1.msra.mxu0 0.0
        %2256 = vmatprep.subr.mxu0 0.0
        %2257 = vmatpush1.msra.mxu0 0.0
        %2258 = vmatprep.subr.mxu0 0.0
        %2259 = vmatpush1.msra.mxu0 0.0
        %2260 = vmatprep.mubr.f32.mxu0 0.0
        %2261 = vmatmul.mubr.f32.gmra.mrb[0].mxu0 %v2187
        %v2262 = vpop.f32.mrb[0].mxu0
        %v2263 = vadd.f32 0.0, %v2262
        %v2264 = vpop.f32.mrb[0].mxu0
        %v2265 = vadd.f32 0.0, %v2264
        %2266 = vdwg.mxu0
        %s2267 = scalar_lea.vmem %s7, 8
        %v2268 = vld [vmem:[%s2267] sm:$0x1f]
        %v2270 = vsel %vm2185, %v2268, 0
        %2272 = vmatprep.subr.mxu0 %v2181
        %2273 = vmatpush1.msra.mxu0 %v2180
        %2274 = vmatprep.subr.mxu0 %v2194
        %2275 = vmatpush1.msra.mxu0 %v2191
        %2276 = vmatprep.subr.mxu0 0.0
        %2277 = vmatpush1.msra.mxu0 0.0
        %2278 = vmatprep.subr.mxu0 0.0
        %2279 = vmatpush1.msra.mxu0 0.0
        %2280 = vmatprep.subr.mxu0 0.0
        %2281 = vmatpush1.msra.mxu0 0.0
        %2282 = vmatprep.subr.mxu0 0.0
        %2283 = vmatpush1.msra.mxu0 0.0
        %2284 = vmatprep.subr.mxu0 0.0
        %2285 = vmatpush1.msra.mxu0 0.0
        %2286 = vmatprep.subr.mxu0 0.0
        %2287 = vmatpush1.msra.mxu0 0.0
        %2288 = vmatprep.subr.mxu0 0.0
        %2289 = vmatpush1.msra.mxu0 0.0
        %2290 = vmatprep.subr.mxu0 0.0
        %2291 = vmatpush1.msra.mxu0 0.0
        %2292 = vmatprep.subr.mxu0 0.0
        %2293 = vmatpush1.msra.mxu0 0.0
        %2294 = vmatprep.subr.mxu0 0.0
        %2295 = vmatpush1.msra.mxu0 0.0
        %2296 = vmatprep.subr.mxu0 0.0
        %2297 = vmatpush1.msra.mxu0 0.0
        %2298 = vmatprep.subr.mxu0 0.0
        %2299 = vmatpush1.msra.mxu0 0.0
        %2300 = vmatprep.subr.mxu0 0.0
        %2301 = vmatpush1.msra.mxu0 0.0
        %2302 = vmatprep.subr.mxu0 0.0
        %2303 = vmatpush1.msra.mxu0 0.0
        %2304 = vmatprep.subr.mxu0 0.0
        %2305 = vmatpush1.msra.mxu0 0.0
        %2306 = vmatprep.subr.mxu0 0.0
        %2307 = vmatpush1.msra.mxu0 0.0
        %2308 = vmatprep.subr.mxu0 0.0
        %2309 = vmatpush1.msra.mxu0 0.0
        %2310 = vmatprep.subr.mxu0 0.0
        %2311 = vmatpush1.msra.mxu0 0.0
        %2312 = vmatprep.subr.mxu0 0.0
        %2313 = vmatpush1.msra.mxu0 0.0
        %2314 = vmatprep.subr.mxu0 0.0
        %2315 = vmatpush1.msra.mxu0 0.0
        %2316 = vmatprep.subr.mxu0 0.0
        %2317 = vmatpush1.msra.mxu0 0.0
        %2318 = vmatprep.subr.mxu0 0.0
        %2319 = vmatpush1.msra.mxu0 0.0
        %2320 = vmatprep.subr.mxu0 0.0
        %2321 = vmatpush1.msra.mxu0 0.0
        %2322 = vmatprep.subr.mxu0 0.0
        %2323 = vmatpush1.msra.mxu0 0.0
        %2324 = vmatprep.subr.mxu0 0.0
        %2325 = vmatpush1.msra.mxu0 0.0
        %2326 = vmatprep.subr.mxu0 0.0
        %2327 = vmatpush1.msra.mxu0 0.0
        %2328 = vmatprep.subr.mxu0 0.0
        %2329 = vmatpush1.msra.mxu0 0.0
        %2330 = vmatprep.subr.mxu0 0.0
        %2331 = vmatpush1.msra.mxu0 0.0
        %2332 = vmatprep.subr.mxu0 0.0
        %2333 = vmatpush1.msra.mxu0 0.0
        %2334 = vmatprep.subr.mxu0 0.0
        %2335 = vmatpush1.msra.mxu0 0.0
        %2336 = vmatprep.mubr.f32.mxu0 0.0
        %2337 = vmatmul.mubr.f32.gmra.mrb[0].mxu0 %v2270
        %v2338 = vpop.f32.mrb[0].mxu0
        %v2339 = vadd.f32 0.0, %v2338
        %v2340 = vpop.f32.mrb[0].mxu0
        %v2341 = vadd.f32 0.0, %v2340
        %2342 = vdwg.mxu0
        %v2343 = vmax.f32 %v2263, %v2339
        %v2344 = vmax.f32 %v2265, %v2341
        %v2345 = vld [vmem:[%s8] sm:$0xff]
        %v2346 = vld [vmem:[%s8 + $0x8] sm:$0xff]
        %v2347 = vld [vmem:[%s8 + $0x10] sm:$0xff]
        %v2348 = vld [vmem:[%s8 + $0x18] sm:$0xff]
        %v2349 = vld [vmem:[%s8 + $0x20] sm:$0xff]
        %v2350 = vld [vmem:[%s8 + $0x28] sm:$0xff]
        %v2351 = vld [vmem:[%s8 + $0x30] sm:$0xff]
        %v2352 = vld [vmem:[%s8 + $0x38] sm:$0xff]
        %v2353 = vld [vmem:[%s8 + $0x40] sm:$0xff]
        %v2354 = vld [vmem:[%s8 + $0x48] sm:$0xff]
        %v2355 = vld [vmem:[%s8 + $0x50] sm:$0xff]
        %v2356 = vld [vmem:[%s8 + $0x58] sm:$0xff]
        %v2357 = vld [vmem:[%s8 + $0x60] sm:$0xff]
        %v2358 = vld [vmem:[%s8 + $0x68] sm:$0xff]
        %v2359 = vld [vmem:[%s8 + $0x70] sm:$0xff]
        %v2360 = vld [vmem:[%s8 + $0x78] sm:$0xff]
        %v2361 = vld [vmem:[%s8 + $0x80] sm:$0xff]
        %v2362 = vld [vmem:[%s8 + $0x88] sm:$0xff]
        %v2363 = vld [vmem:[%s8 + $0x90] sm:$0xff]
        %v2364 = vld [vmem:[%s8 + $0x98] sm:$0xff]
        %vm2365 = vcmask 261120
        %v2367 = vsel %vm2365, %v2344, 0
        %2369 = vmatprep.subr.mxu0 0.0
        %2370 = vmatpush1.msra.mxu0 %v2345
        %2371 = vmatprep.subr.mxu0 0.0
        %2372 = vmatpush1.msra.mxu0 %v2346
        %2373 = vmatprep.subr.mxu0 0.0
        %2374 = vmatpush1.msra.mxu0 %v2347
        %2375 = vmatprep.subr.mxu0 0.0
        %2376 = vmatpush1.msra.mxu0 %v2348
        %2377 = vmatprep.subr.mxu0 0.0
        %2378 = vmatpush1.msra.mxu0 %v2349
        %2379 = vmatprep.subr.mxu0 0.0
        %2380 = vmatpush1.msra.mxu0 %v2350
        %2381 = vmatprep.subr.mxu0 0.0
        %2382 = vmatpush1.msra.mxu0 %v2351
        %2383 = vmatprep.subr.mxu0 0.0
        %2384 = vmatpush1.msra.mxu0 %v2352
        %2385 = vmatprep.subr.mxu0 0.0
        %2386 = vmatpush1.msra.mxu0 %v2353
        %2387 = vmatprep.subr.mxu0 0.0
        %2388 = vmatpush1.msra.mxu0 %v2354
        %2389 = vmatprep.subr.mxu0 0.0
        %2390 = vmatpush1.msra.mxu0 %v2355
        %2391 = vmatprep.subr.mxu0 0.0
        %2392 = vmatpush1.msra.mxu0 %v2356
        %2393 = vmatprep.subr.mxu0 0.0
        %2394 = vmatpush1.msra.mxu0 %v2357
        %2395 = vmatprep.subr.mxu0 0.0
        %2396 = vmatpush1.msra.mxu0 %v2358
        %2397 = vmatprep.subr.mxu0 0.0
        %2398 = vmatpush1.msra.mxu0 %v2359
        %2399 = vmatprep.subr.mxu0 0.0
        %2400 = vmatpush1.msra.mxu0 %v2360
        %2401 = vmatprep.subr.mxu0 0.0
        %2402 = vmatpush1.msra.mxu0 %v2361
        %2403 = vmatprep.subr.mxu0 0.0
        %2404 = vmatpush1.msra.mxu0 %v2362
        %2405 = vmatprep.subr.mxu0 0.0
        %2406 = vmatpush1.msra.mxu0 %v2363
        %2407 = vmatprep.subr.mxu0 0.0
        %2408 = vmatpush1.msra.mxu0 %v2364
        %2409 = vmatprep.subr.mxu0 0.0
        %2410 = vmatpush1.msra.mxu0 0.0
        %2411 = vmatprep.subr.mxu0 0.0
        %2412 = vmatpush1.msra.mxu0 0.0
        %2413 = vmatprep.subr.mxu0 0.0
        %2414 = vmatpush1.msra.mxu0 0.0
        %2415 = vmatprep.subr.mxu0 0.0
        %2416 = vmatpush1.msra.mxu0 0.0
        %2417 = vmatprep.subr.mxu0 0.0
        %2418 = vmatpush1.msra.mxu0 0.0
        %2419 = vmatprep.subr.mxu0 0.0
        %2420 = vmatpush1.msra.mxu0 0.0
        %2421 = vmatprep.subr.mxu0 0.0
        %2422 = vmatpush1.msra.mxu0 0.0
        %2423 = vmatprep.subr.mxu0 0.0
        %2424 = vmatpush1.msra.mxu0 0.0
        %2425 = vmatprep.subr.mxu0 0.0
        %2426 = vmatpush1.msra.mxu0 0.0
        %2427 = vmatprep.subr.mxu0 0.0
        %2428 = vmatpush1.msra.mxu0 0.0
        %2429 = vmatprep.subr.mxu0 0.0
        %2430 = vmatpush1.msra.mxu0 0.0
        %2431 = vmatprep.subr.mxu0 0.0
        %2432 = vmatpush1.msra.mxu0 0.0
        %2433 = vmatprep.mubr.f32.mxu0 %v2367
        %2434 = vmatmul.mubr.f32.gmra.mrb[0].mxu0 %v2343
        %v2435 = vpop.f32.mrb[0].mxu0
        %v2436 = vadd.f32 0.0, %v2435
        %v2437 = vpop.f32.mrb[0].mxu0
        %2438 = vdwg.mxu0
        %s2439 = scalar_lea.vmem %s8, 160
        %v2440 = vld [vmem:[%s2439] sm:$0xff]
        %v2441 = vld [vmem:[%s2439 + $0x8] sm:$0xff]
        %v2442 = vld [vmem:[%s2439 + $0x10] sm:$0xff]
        %v2443 = vld [vmem:[%s2439 + $0x18] sm:$0xff]
        %v2444 = vld [vmem:[%s2439 + $0x20] sm:$0xff]
        %v2445 = vld [vmem:[%s2439 + $0x28] sm:$0xff]
        %v2446 = vld [vmem:[%s2439 + $0x30] sm:$0xff]
        %v2447 = vld [vmem:[%s2439 + $0x38] sm:$0xff]
        %v2448 = vld [vmem:[%s2439 + $0x40] sm:$0xff]
        %v2449 = vld [vmem:[%s2439 + $0x48] sm:$0xff]
        %v2450 = vld [vmem:[%s2439 + $0x50] sm:$0xff]
        %v2451 = vld [vmem:[%s2439 + $0x58] sm:$0xff]
        %v2452 = vld [vmem:[%s2439 + $0x60] sm:$0xff]
        %v2453 = vld [vmem:[%s2439 + $0x68] sm:$0xff]
        %v2454 = vld [vmem:[%s2439 + $0x70] sm:$0xff]
        %v2455 = vld [vmem:[%s2439 + $0x78] sm:$0xff]
        %v2456 = vld [vmem:[%s2439 + $0x80] sm:$0xff]
        %v2457 = vld [vmem:[%s2439 + $0x88] sm:$0xff]
        %v2458 = vld [vmem:[%s2439 + $0x90] sm:$0xff]
        %v2459 = vld [vmem:[%s2439 + $0x98] sm:$0xff]
        %2460 = vmatprep.subr.mxu0 0.0
        %2461 = vmatpush1.msra.mxu0 %v2440
        %2462 = vmatprep.subr.mxu0 0.0
        %2463 = vmatpush1.msra.mxu0 %v2441
        %2464 = vmatprep.subr.mxu0 0.0
        %2465 = vmatpush1.msra.mxu0 %v2442
        %2466 = vmatprep.subr.mxu0 0.0
        %2467 = vmatpush1.msra.mxu0 %v2443
        %2468 = vmatprep.subr.mxu0 0.0
        %2469 = vmatpush1.msra.mxu0 %v2444
        %2470 = vmatprep.subr.mxu0 0.0
        %2471 = vmatpush1.msra.mxu0 %v2445
        %2472 = vmatprep.subr.mxu0 0.0
        %2473 = vmatpush1.msra.mxu0 %v2446
        %2474 = vmatprep.subr.mxu0 0.0
        %2475 = vmatpush1.msra.mxu0 %v2447
        %2476 = vmatprep.subr.mxu0 0.0
        %2477 = vmatpush1.msra.mxu0 %v2448
        %2478 = vmatprep.subr.mxu0 0.0
        %2479 = vmatpush1.msra.mxu0 %v2449
        %2480 = vmatprep.subr.mxu0 0.0
        %2481 = vmatpush1.msra.mxu0 %v2450
        %2482 = vmatprep.subr.mxu0 0.0
        %2483 = vmatpush1.msra.mxu0 %v2451
        %2484 = vmatprep.subr.mxu0 0.0
        %2485 = vmatpush1.msra.mxu0 %v2452
        %2486 = vmatprep.subr.mxu0 0.0
        %2487 = vmatpush1.msra.mxu0 %v2453
        %2488 = vmatprep.subr.mxu0 0.0
        %2489 = vmatpush1.msra.mxu0 %v2454
        %2490 = vmatprep.subr.mxu0 0.0
        %2491 = vmatpush1.msra.mxu0 %v2455
        %2492 = vmatprep.subr.mxu0 0.0
        %2493 = vmatpush1.msra.mxu0 %v2456
        %2494 = vmatprep.subr.mxu0 0.0
        %2495 = vmatpush1.msra.mxu0 %v2457
        %2496 = vmatprep.subr.mxu0 0.0
        %2497 = vmatpush1.msra.mxu0 %v2458
        %2498 = vmatprep.subr.mxu0 0.0
        %2499 = vmatpush1.msra.mxu0 %v2459
        %2500 = vmatprep.subr.mxu0 0.0
        %2501 = vmatpush1.msra.mxu0 0.0
        %2502 = vmatprep.subr.mxu0 0.0
        %2503 = vmatpush1.msra.mxu0 0.0
        %2504 = vmatprep.subr.mxu0 0.0
        %2505 = vmatpush1.msra.mxu0 0.0
        %2506 = vmatprep.subr.mxu0 0.0
        %2507 = vmatpush1.msra.mxu0 0.0
        %2508 = vmatprep.subr.mxu0 0.0
        %2509 = vmatpush1.msra.mxu0 0.0
        %2510 = vmatprep.subr.mxu0 0.0
        %2511 = vmatpush1.msra.mxu0 0.0
        %2512 = vmatprep.subr.mxu0 0.0
        %2513 = vmatpush1.msra.mxu0 0.0
        %2514 = vmatprep.subr.mxu0 0.0
        %2515 = vmatpush1.msra.mxu0 0.0
        %2516 = vmatprep.subr.mxu0 0.0
        %2517 = vmatpush1.msra.mxu0 0.0
        %2518 = vmatprep.subr.mxu0 0.0
        %2519 = vmatpush1.msra.mxu0 0.0
        %2520 = vmatprep.subr.mxu0 0.0
        %2521 = vmatpush1.msra.mxu0 0.0
        %2522 = vmatprep.subr.mxu0 0.0
        %2523 = vmatpush1.msra.mxu0 0.0
        %2524 = vmatprep.mubr.f32.mxu0 %v2367
        %2525 = vmatmul.mubr.f32.gmra.mrb[0].mxu0 %v2343
        %v2526 = vpop.f32.mrb[0].mxu0
        %v2527 = vadd.f32 0.0, %v2526
        %v2528 = vpop.f32.mrb[0].mxu0
        %2529 = vdwg.mxu0
        %v2530 = vmax.f32 %v2436, %v2527
        %vm2531 = vcmask 651264
        %2532 = vst.msk [vmem:[#allocation3] sm:$0x1f] %vm2531, %v2530
        %v2533 = vld [vmem:[%s10] sm:$0x1]
        %v2534 = vld [vmem:[#allocation3] sm:$0x1]
        %v2535 = vld [vmem:[%s9] sm:$0xff]
        %v2536 = vld [vmem:[%s9 + $0x8] sm:$0xff]
        %v2537 = vld [vmem:[%s9 + $0x10] sm:$0xff]
        %v2538 = vld [vmem:[%s9 + $0x18] sm:$0xff]
        %v2539 = vld [vmem:[%s9 + $0x20] sm:$0xff]
        %v2540 = vld [vmem:[%s9 + $0x28] sm:$0xff]
        %v2541 = vld [vmem:[%s9 + $0x30] sm:$0xff]
        %v2542 = vld [vmem:[%s9 + $0x38] sm:$0xff]
        %v2543 = vld [vmem:[%s9 + $0x40] sm:$0xff]
        %v2544 = vld [vmem:[%s9 + $0x48] sm:$0xff]
        %vm2545 = vcmask 654336
        %v2547 = vsel %vm2545, %v2534, 0
        %2549 = vmatprep.subr.mxu0 0.0
        %2550 = vmatpush1.msra.mxu0 %v2535
        %2551 = vmatprep.subr.mxu0 0.0
        %2552 = vmatpush1.msra.mxu0 %v2536
        %2553 = vmatprep.subr.mxu0 0.0
        %2554 = vmatpush1.msra.mxu0 %v2537
        %2555 = vmatprep.subr.mxu0 0.0
        %2556 = vmatpush1.msra.mxu0 %v2538
        %2557 = vmatprep.subr.mxu0 0.0
        %2558 = vmatpush1.msra.mxu0 %v2539
        %2559 = vmatprep.subr.mxu0 0.0
        %2560 = vmatpush1.msra.mxu0 %v2540
        %2561 = vmatprep.subr.mxu0 0.0
        %2562 = vmatpush1.msra.mxu0 %v2541
        %2563 = vmatprep.subr.mxu0 0.0
        %2564 = vmatpush1.msra.mxu0 %v2542
        %2565 = vmatprep.subr.mxu0 0.0
        %2566 = vmatpush1.msra.mxu0 %v2543
        %2567 = vmatprep.subr.mxu0 0.0
        %2568 = vmatpush1.msra.mxu0 %v2544
        %2569 = vmatprep.subr.mxu0 0.0
        %2570 = vmatpush1.msra.mxu0 0.0
        %2571 = vmatprep.subr.mxu0 0.0
        %2572 = vmatpush1.msra.mxu0 0.0
        %2573 = vmatprep.subr.mxu0 0.0
        %2574 = vmatpush1.msra.mxu0 0.0
        %2575 = vmatprep.subr.mxu0 0.0
        %2576 = vmatpush1.msra.mxu0 0.0
        %2577 = vmatprep.subr.mxu0 0.0
        %2578 = vmatpush1.msra.mxu0 0.0
        %2579 = vmatprep.subr.mxu0 0.0
        %2580 = vmatpush1.msra.mxu0 0.0
        %2581 = vmatprep.subr.mxu0 0.0
        %2582 = vmatpush1.msra.mxu0 0.0
        %2583 = vmatprep.subr.mxu0 0.0
        %2584 = vmatpush1.msra.mxu0 0.0
        %2585 = vmatprep.subr.mxu0 0.0
        %2586 = vmatpush1.msra.mxu0 0.0
        %2587 = vmatprep.subr.mxu0 0.0
        %2588 = vmatpush1.msra.mxu0 0.0
        %2589 = vmatprep.subr.mxu0 0.0
        %2590 = vmatpush1.msra.mxu0 0.0
        %2591 = vmatprep.subr.mxu0 0.0
        %2592 = vmatpush1.msra.mxu0 0.0
        %2593 = vmatprep.subr.mxu0 0.0
        %2594 = vmatpush1.msra.mxu0 0.0
        %2595 = vmatprep.subr.mxu0 0.0
        %2596 = vmatpush1.msra.mxu0 0.0
        %2597 = vmatprep.subr.mxu0 0.0
        %2598 = vmatpush1.msra.mxu0 0.0
        %2599 = vmatprep.subr.mxu0 0.0
        %2600 = vmatpush1.msra.mxu0 0.0
        %2601 = vmatprep.subr.mxu0 0.0
        %2602 = vmatpush1.msra.mxu0 0.0
        %2603 = vmatprep.subr.mxu0 0.0
        %2604 = vmatpush1.msra.mxu0 0.0
        %2605 = vmatprep.subr.mxu0 0.0
        %2606 = vmatpush1.msra.mxu0 0.0
        %2607 = vmatprep.subr.mxu0 0.0
        %2608 = vmatpush1.msra.mxu0 0.0
        %2609 = vmatprep.subr.mxu0 0.0
        %2610 = vmatpush1.msra.mxu0 0.0
        %2611 = vmatprep.subr.mxu0 0.0
        %2612 = vmatpush1.msra.mxu0 0.0
        %2613 = vmatprep.mubr.f32.mxu0 0.0
        %2614 = vmatmul.mubr.f32.gmra.mrb[0].mxu0 %v2547
        %v2615 = vpop.f32.mrb[0].mxu0
        %v2616 = vadd.f32 0.0, %v2615
        %v2617 = vpop.f32.mrb[0].mxu0
        %2618 = vdwg.mxu0
        %v2619 = vadd.f32 %v2533, %v2616
        %v2620 = vld [vmem:[#allocation3 + $0x1] sm:$0x1]
        %s2621 = scalar_lea.vmem %s9, 80
        %v2622 = vld [vmem:[%s2621] sm:$0xff]
        %v2623 = vld [vmem:[%s2621 + $0x8] sm:$0xff]
        %v2624 = vld [vmem:[%s2621 + $0x10] sm:$0xff]
        %v2625 = vld [vmem:[%s2621 + $0x18] sm:$0xff]
        %v2626 = vld [vmem:[%s2621 + $0x20] sm:$0xff]
        %v2627 = vld [vmem:[%s2621 + $0x28] sm:$0xff]
        %v2628 = vld [vmem:[%s2621 + $0x30] sm:$0xff]
        %v2629 = vld [vmem:[%s2621 + $0x38] sm:$0xff]
        %v2630 = vld [vmem:[%s2621 + $0x40] sm:$0xff]
        %v2631 = vld [vmem:[%s2621 + $0x48] sm:$0xff]
        %v2633 = vsel %vm2545, %v2620, 0
        %2635 = vmatprep.subr.mxu0 0.0
        %2636 = vmatpush1.msra.mxu0 %v2622
        %2637 = vmatprep.subr.mxu0 0.0
        %2638 = vmatpush1.msra.mxu0 %v2623
        %2639 = vmatprep.subr.mxu0 0.0
        %2640 = vmatpush1.msra.mxu0 %v2624
        %2641 = vmatprep.subr.mxu0 0.0
        %2642 = vmatpush1.msra.mxu0 %v2625
        %2643 = vmatprep.subr.mxu0 0.0
        %2644 = vmatpush1.msra.mxu0 %v2626
        %2645 = vmatprep.subr.mxu0 0.0
        %2646 = vmatpush1.msra.mxu0 %v2627
        %2647 = vmatprep.subr.mxu0 0.0
        %2648 = vmatpush1.msra.mxu0 %v2628
        %2649 = vmatprep.subr.mxu0 0.0
        %2650 = vmatpush1.msra.mxu0 %v2629
        %2651 = vmatprep.subr.mxu0 0.0
        %2652 = vmatpush1.msra.mxu0 %v2630
        %2653 = vmatprep.subr.mxu0 0.0
        %2654 = vmatpush1.msra.mxu0 %v2631
        %2655 = vmatprep.subr.mxu0 0.0
        %2656 = vmatpush1.msra.mxu0 0.0
        %2657 = vmatprep.subr.mxu0 0.0
        %2658 = vmatpush1.msra.mxu0 0.0
        %2659 = vmatprep.subr.mxu0 0.0
        %2660 = vmatpush1.msra.mxu0 0.0
        %2661 = vmatprep.subr.mxu0 0.0
        %2662 = vmatpush1.msra.mxu0 0.0
        %2663 = vmatprep.subr.mxu0 0.0
        %2664 = vmatpush1.msra.mxu0 0.0
        %2665 = vmatprep.subr.mxu0 0.0
        %2666 = vmatpush1.msra.mxu0 0.0
        %2667 = vmatprep.subr.mxu0 0.0
        %2668 = vmatpush1.msra.mxu0 0.0
        %2669 = vmatprep.subr.mxu0 0.0
        %2670 = vmatpush1.msra.mxu0 0.0
        %2671 = vmatprep.subr.mxu0 0.0
        %2672 = vmatpush1.msra.mxu0 0.0
        %2673 = vmatprep.subr.mxu0 0.0
        %2674 = vmatpush1.msra.mxu0 0.0
        %2675 = vmatprep.subr.mxu0 0.0
        %2676 = vmatpush1.msra.mxu0 0.0
        %2677 = vmatprep.subr.mxu0 0.0
        %2678 = vmatpush1.msra.mxu0 0.0
        %2679 = vmatprep.subr.mxu0 0.0
        %2680 = vmatpush1.msra.mxu0 0.0
        %2681 = vmatprep.subr.mxu0 0.0
        %2682 = vmatpush1.msra.mxu0 0.0
        %2683 = vmatprep.subr.mxu0 0.0
        %2684 = vmatpush1.msra.mxu0 0.0
        %2685 = vmatprep.subr.mxu0 0.0
        %2686 = vmatpush1.msra.mxu0 0.0
        %2687 = vmatprep.subr.mxu0 0.0
        %2688 = vmatpush1.msra.mxu0 0.0
        %2689 = vmatprep.subr.mxu0 0.0
        %2690 = vmatpush1.msra.mxu0 0.0
        %2691 = vmatprep.subr.mxu0 0.0
        %2692 = vmatpush1.msra.mxu0 0.0
        %2693 = vmatprep.subr.mxu0 0.0
        %2694 = vmatpush1.msra.mxu0 0.0
        %2695 = vmatprep.subr.mxu0 0.0
        %2696 = vmatpush1.msra.mxu0 0.0
        %2697 = vmatprep.subr.mxu0 0.0
        %2698 = vmatpush1.msra.mxu0 0.0
        %2699 = vmatprep.mubr.f32.mxu0 0.0
        %2700 = vmatmul.mubr.f32.gmra.mrb[0].mxu0 %v2633
        %v2701 = vpop.f32.mrb[0].mxu0
        %v2702 = vadd.f32 0.0, %v2701
        %v2703 = vpop.f32.mrb[0].mxu0
        %2704 = vdwg.mxu0
        %v2705 = vadd.f32 %v2619, %v2702
        %v2706 = vld [vmem:[#allocation3 + $0x2] sm:$0x1]
        %s2707 = scalar_lea.vmem %s9, 160
        %v2708 = vld [vmem:[%s2707] sm:$0xff]
        %v2709 = vld [vmem:[%s2707 + $0x8] sm:$0xff]
        %v2710 = vld [vmem:[%s2707 + $0x10] sm:$0xff]
        %v2711 = vld [vmem:[%s2707 + $0x18] sm:$0xff]
        %v2712 = vld [vmem:[%s2707 + $0x20] sm:$0xff]
        %v2713 = vld [vmem:[%s2707 + $0x28] sm:$0xff]
        %v2714 = vld [vmem:[%s2707 + $0x30] sm:$0xff]
        %v2715 = vld [vmem:[%s2707 + $0x38] sm:$0xff]
        %v2716 = vld [vmem:[%s2707 + $0x40] sm:$0xff]
        %v2717 = vld [vmem:[%s2707 + $0x48] sm:$0xff]
        %v2719 = vsel %vm2545, %v2706, 0
        %2721 = vmatprep.subr.mxu0 0.0
        %2722 = vmatpush1.msra.mxu0 %v2708
        %2723 = vmatprep.subr.mxu0 0.0
        %2724 = vmatpush1.msra.mxu0 %v2709
        %2725 = vmatprep.subr.mxu0 0.0
        %2726 = vmatpush1.msra.mxu0 %v2710
        %2727 = vmatprep.subr.mxu0 0.0
        %2728 = vmatpush1.msra.mxu0 %v2711
        %2729 = vmatprep.subr.mxu0 0.0
        %2730 = vmatpush1.msra.mxu0 %v2712
        %2731 = vmatprep.subr.mxu0 0.0
        %2732 = vmatpush1.msra.mxu0 %v2713
        %2733 = vmatprep.subr.mxu0 0.0
        %2734 = vmatpush1.msra.mxu0 %v2714
        %2735 = vmatprep.subr.mxu0 0.0
        %2736 = vmatpush1.msra.mxu0 %v2715
        %2737 = vmatprep.subr.mxu0 0.0
        %2738 = vmatpush1.msra.mxu0 %v2716
        %2739 = vmatprep.subr.mxu0 0.0
        %2740 = vmatpush1.msra.mxu0 %v2717
        %2741 = vmatprep.subr.mxu0 0.0
        %2742 = vmatpush1.msra.mxu0 0.0
        %2743 = vmatprep.subr.mxu0 0.0
        %2744 = vmatpush1.msra.mxu0 0.0
        %2745 = vmatprep.subr.mxu0 0.0
        %2746 = vmatpush1.msra.mxu0 0.0
        %2747 = vmatprep.subr.mxu0 0.0
        %2748 = vmatpush1.msra.mxu0 0.0
        %2749 = vmatprep.subr.mxu0 0.0
        %2750 = vmatpush1.msra.mxu0 0.0
        %2751 = vmatprep.subr.mxu0 0.0
        %2752 = vmatpush1.msra.mxu0 0.0
        %2753 = vmatprep.subr.mxu0 0.0
        %2754 = vmatpush1.msra.mxu0 0.0
        %2755 = vmatprep.subr.mxu0 0.0
        %2756 = vmatpush1.msra.mxu0 0.0
        %2757 = vmatprep.subr.mxu0 0.0
        %2758 = vmatpush1.msra.mxu0 0.0
        %2759 = vmatprep.subr.mxu0 0.0
        %2760 = vmatpush1.msra.mxu0 0.0
        %2761 = vmatprep.subr.mxu0 0.0
        %2762 = vmatpush1.msra.mxu0 0.0
        %2763 = vmatprep.subr.mxu0 0.0
        %2764 = vmatpush1.msra.mxu0 0.0
        %2765 = vmatprep.subr.mxu0 0.0
        %2766 = vmatpush1.msra.mxu0 0.0
        %2767 = vmatprep.subr.mxu0 0.0
        %2768 = vmatpush1.msra.mxu0 0.0
        %2769 = vmatprep.subr.mxu0 0.0
        %2770 = vmatpush1.msra.mxu0 0.0
        %2771 = vmatprep.subr.mxu0 0.0
        %2772 = vmatpush1.msra.mxu0 0.0
        %2773 = vmatprep.subr.mxu0 0.0
        %2774 = vmatpush1.msra.mxu0 0.0
        %2775 = vmatprep.subr.mxu0 0.0
        %2776 = vmatpush1.msra.mxu0 0.0
        %2777 = vmatprep.subr.mxu0 0.0
        %2778 = vmatpush1.msra.mxu0 0.0
        %2779 = vmatprep.subr.mxu0 0.0
        %2780 = vmatpush1.msra.mxu0 0.0
        %2781 = vmatprep.subr.mxu0 0.0
        %2782 = vmatpush1.msra.mxu0 0.0
        %2783 = vmatprep.subr.mxu0 0.0
        %2784 = vmatpush1.msra.mxu0 0.0
        %2785 = vmatprep.mubr.f32.mxu0 0.0
        %2786 = vmatmul.mubr.f32.gmra.mrb[0].mxu0 %v2719
        %v2787 = vpop.f32.mrb[0].mxu0
        %v2788 = vadd.f32 0.0, %v2787
        %v2789 = vpop.f32.mrb[0].mxu0
        %2790 = vdwg.mxu0
        %v2791 = vadd.f32 %v2705, %v2788
        %v2792 = vld [vmem:[#allocation3 + $0x3] sm:$0x1]
        %s2793 = scalar_lea.vmem %s9, 240
        %v2794 = vld [vmem:[%s2793] sm:$0xff]
        %v2795 = vld [vmem:[%s2793 + $0x8] sm:$0xff]
        %v2796 = vld [vmem:[%s2793 + $0x10] sm:$0xff]
        %v2797 = vld [vmem:[%s2793 + $0x18] sm:$0xff]
        %v2798 = vld [vmem:[%s2793 + $0x20] sm:$0xff]
        %v2799 = vld [vmem:[%s2793 + $0x28] sm:$0xff]
        %v2800 = vld [vmem:[%s2793 + $0x30] sm:$0xff]
        %v2801 = vld [vmem:[%s2793 + $0x38] sm:$0xff]
        %v2802 = vld [vmem:[%s2793 + $0x40] sm:$0xff]
        %v2803 = vld [vmem:[%s2793 + $0x48] sm:$0xff]
        %v2805 = vsel %vm2545, %v2792, 0
        %2807 = vmatprep.subr.mxu0 0.0
        %2808 = vmatpush1.msra.mxu0 %v2794
        %2809 = vmatprep.subr.mxu0 0.0
        %2810 = vmatpush1.msra.mxu0 %v2795
        %2811 = vmatprep.subr.mxu0 0.0
        %2812 = vmatpush1.msra.mxu0 %v2796
        %2813 = vmatprep.subr.mxu0 0.0
        %2814 = vmatpush1.msra.mxu0 %v2797
        %2815 = vmatprep.subr.mxu0 0.0
        %2816 = vmatpush1.msra.mxu0 %v2798
        %2817 = vmatprep.subr.mxu0 0.0
        %2818 = vmatpush1.msra.mxu0 %v2799
        %2819 = vmatprep.subr.mxu0 0.0
        %2820 = vmatpush1.msra.mxu0 %v2800
        %2821 = vmatprep.subr.mxu0 0.0
        %2822 = vmatpush1.msra.mxu0 %v2801
        %2823 = vmatprep.subr.mxu0 0.0
        %2824 = vmatpush1.msra.mxu0 %v2802
        %2825 = vmatprep.subr.mxu0 0.0
        %2826 = vmatpush1.msra.mxu0 %v2803
        %2827 = vmatprep.subr.mxu0 0.0
        %2828 = vmatpush1.msra.mxu0 0.0
        %2829 = vmatprep.subr.mxu0 0.0
        %2830 = vmatpush1.msra.mxu0 0.0
        %2831 = vmatprep.subr.mxu0 0.0
        %2832 = vmatpush1.msra.mxu0 0.0
        %2833 = vmatprep.subr.mxu0 0.0
        %2834 = vmatpush1.msra.mxu0 0.0
        %2835 = vmatprep.subr.mxu0 0.0
        %2836 = vmatpush1.msra.mxu0 0.0
        %2837 = vmatprep.subr.mxu0 0.0
        %2838 = vmatpush1.msra.mxu0 0.0
        %2839 = vmatprep.subr.mxu0 0.0
        %2840 = vmatpush1.msra.mxu0 0.0
        %2841 = vmatprep.subr.mxu0 0.0
        %2842 = vmatpush1.msra.mxu0 0.0
        %2843 = vmatprep.subr.mxu0 0.0
        %2844 = vmatpush1.msra.mxu0 0.0
        %2845 = vmatprep.subr.mxu0 0.0
        %2846 = vmatpush1.msra.mxu0 0.0
        %2847 = vmatprep.subr.mxu0 0.0
        %2848 = vmatpush1.msra.mxu0 0.0
        %2849 = vmatprep.subr.mxu0 0.0
        %2850 = vmatpush1.msra.mxu0 0.0
        %2851 = vmatprep.subr.mxu0 0.0
        %2852 = vmatpush1.msra.mxu0 0.0
        %2853 = vmatprep.subr.mxu0 0.0
        %2854 = vmatpush1.msra.mxu0 0.0
        %2855 = vmatprep.subr.mxu0 0.0
        %2856 = vmatpush1.msra.mxu0 0.0
        %2857 = vmatprep.subr.mxu0 0.0
        %2858 = vmatpush1.msra.mxu0 0.0
        %2859 = vmatprep.subr.mxu0 0.0
        %2860 = vmatpush1.msra.mxu0 0.0
        %2861 = vmatprep.subr.mxu0 0.0
        %2862 = vmatpush1.msra.mxu0 0.0
        %2863 = vmatprep.subr.mxu0 0.0
        %2864 = vmatpush1.msra.mxu0 0.0
        %2865 = vmatprep.subr.mxu0 0.0
        %2866 = vmatpush1.msra.mxu0 0.0
        %2867 = vmatprep.subr.mxu0 0.0
        %2868 = vmatpush1.msra.mxu0 0.0
        %2869 = vmatprep.subr.mxu0 0.0
        %2870 = vmatpush1.msra.mxu0 0.0
        %2871 = vmatprep.mubr.f32.mxu0 0.0
        %2872 = vmatmul.mubr.f32.gmra.mrb[0].mxu0 %v2805
        %v2873 = vpop.f32.mrb[0].mxu0
        %v2874 = vadd.f32 0.0, %v2873
        %v2875 = vpop.f32.mrb[0].mxu0
        %2876 = vdwg.mxu0
        %v2877 = vadd.f32 %v2791, %v2874
        %v2878 = vld [vmem:[#allocation3 + $0x4] sm:$0x1]
        %s2879 = scalar_lea.vmem %s9, 320
        %v2880 = vld [vmem:[%s2879] sm:$0xff]
        %v2881 = vld [vmem:[%s2879 + $0x8] sm:$0xff]
        %v2882 = vld [vmem:[%s2879 + $0x10] sm:$0xff]
        %v2883 = vld [vmem:[%s2879 + $0x18] sm:$0xff]
        %v2884 = vld [vmem:[%s2879 + $0x20] sm:$0xff]
        %v2885 = vld [vmem:[%s2879 + $0x28] sm:$0xff]
        %v2886 = vld [vmem:[%s2879 + $0x30] sm:$0xff]
        %v2887 = vld [vmem:[%s2879 + $0x38] sm:$0xff]
        %v2888 = vld [vmem:[%s2879 + $0x40] sm:$0xff]
        %v2889 = vld [vmem:[%s2879 + $0x48] sm:$0xff]
        %v2891 = vsel %vm2545, %v2878, 0
        %2893 = vmatprep.subr.mxu0 0.0
        %2894 = vmatpush1.msra.mxu0 %v2880
        %2895 = vmatprep.subr.mxu0 0.0
        %2896 = vmatpush1.msra.mxu0 %v2881
        %2897 = vmatprep.subr.mxu0 0.0
        %2898 = vmatpush1.msra.mxu0 %v2882
        %2899 = vmatprep.subr.mxu0 0.0
        %2900 = vmatpush1.msra.mxu0 %v2883
        %2901 = vmatprep.subr.mxu0 0.0
        %2902 = vmatpush1.msra.mxu0 %v2884
        %2903 = vmatprep.subr.mxu0 0.0
        %2904 = vmatpush1.msra.mxu0 %v2885
        %2905 = vmatprep.subr.mxu0 0.0
        %2906 = vmatpush1.msra.mxu0 %v2886
        %2907 = vmatprep.subr.mxu0 0.0
        %2908 = vmatpush1.msra.mxu0 %v2887
        %2909 = vmatprep.subr.mxu0 0.0
        %2910 = vmatpush1.msra.mxu0 %v2888
        %2911 = vmatprep.subr.mxu0 0.0
        %2912 = vmatpush1.msra.mxu0 %v2889
        %2913 = vmatprep.subr.mxu0 0.0
        %2914 = vmatpush1.msra.mxu0 0.0
        %2915 = vmatprep.subr.mxu0 0.0
        %2916 = vmatpush1.msra.mxu0 0.0
        %2917 = vmatprep.subr.mxu0 0.0
        %2918 = vmatpush1.msra.mxu0 0.0
        %2919 = vmatprep.subr.mxu0 0.0
        %2920 = vmatpush1.msra.mxu0 0.0
        %2921 = vmatprep.subr.mxu0 0.0
        %2922 = vmatpush1.msra.mxu0 0.0
        %2923 = vmatprep.subr.mxu0 0.0
        %2924 = vmatpush1.msra.mxu0 0.0
        %2925 = vmatprep.subr.mxu0 0.0
        %2926 = vmatpush1.msra.mxu0 0.0
        %2927 = vmatprep.subr.mxu0 0.0
        %2928 = vmatpush1.msra.mxu0 0.0
        %2929 = vmatprep.subr.mxu0 0.0
        %2930 = vmatpush1.msra.mxu0 0.0
        %2931 = vmatprep.subr.mxu0 0.0
        %2932 = vmatpush1.msra.mxu0 0.0
        %2933 = vmatprep.subr.mxu0 0.0
        %2934 = vmatpush1.msra.mxu0 0.0
        %2935 = vmatprep.subr.mxu0 0.0
        %2936 = vmatpush1.msra.mxu0 0.0
        %2937 = vmatprep.subr.mxu0 0.0
        %2938 = vmatpush1.msra.mxu0 0.0
        %2939 = vmatprep.subr.mxu0 0.0
        %2940 = vmatpush1.msra.mxu0 0.0
        %2941 = vmatprep.subr.mxu0 0.0
        %2942 = vmatpush1.msra.mxu0 0.0
        %2943 = vmatprep.subr.mxu0 0.0
        %2944 = vmatpush1.msra.mxu0 0.0
        %2945 = vmatprep.subr.mxu0 0.0
        %2946 = vmatpush1.msra.mxu0 0.0
        %2947 = vmatprep.subr.mxu0 0.0
        %2948 = vmatpush1.msra.mxu0 0.0
        %2949 = vmatprep.subr.mxu0 0.0
        %2950 = vmatpush1.msra.mxu0 0.0
        %2951 = vmatprep.subr.mxu0 0.0
        %2952 = vmatpush1.msra.mxu0 0.0
        %2953 = vmatprep.subr.mxu0 0.0
        %2954 = vmatpush1.msra.mxu0 0.0
        %2955 = vmatprep.subr.mxu0 0.0
        %2956 = vmatpush1.msra.mxu0 0.0
        %2957 = vmatprep.mubr.f32.mxu0 0.0
        %2958 = vmatmul.mubr.f32.gmra.mrb[0].mxu0 %v2891
        %v2959 = vpop.f32.mrb[0].mxu0
        %v2960 = vadd.f32 0.0, %v2959
        %v2961 = vpop.f32.mrb[0].mxu0
        %2962 = vdwg.mxu0
        %v2963 = vadd.f32 %v2877, %v2960
        %v2964 = vmax.f32 %v2963, 0.0
        %v2965 = vld [vmem:[%s11] sm:$0xff]
        %v2966 = vld [vmem:[%s11 + $0x8] sm:$0xff]
        %v2967 = vld [vmem:[%s11 + $0x10] sm:$0xff]
        %v2968 = vld [vmem:[%s11 + $0x18] sm:$0xff]
        %v2969 = vld [vmem:[%s11 + $0x20] sm:$0xff]
        %v2970 = vld [vmem:[%s11 + $0x28] sm:$0xff]
        %v2971 = vld [vmem:[%s11 + $0x30] sm:$0xff]
        %v2972 = vld [vmem:[%s11 + $0x38] sm:$0xff]
        %v2973 = vld [vmem:[%s11 + $0x40] sm:$0xff]
        %v2974 = vld [vmem:[%s11 + $0x48] sm:$0xff]
        %v2975 = vld [vmem:[%s11 + $0x50] sm:$0xff]
        %v2976 = vld [vmem:[%s11 + $0x58] sm:$0xff]
        %v2977 = vld [vmem:[%s11 + $0x60] sm:$0xff]
        %v2978 = vld [vmem:[%s11 + $0x68] sm:$0xff]
        %v2979 = vld [vmem:[%s11 + $0x70] sm:$0xff]
        %v2980 = vld [vmem:[%s12] sm:$0x1]
        %vm2981 = vcmask 982016
        %v2983 = vsel %vm2981, %v2964, 0
        %2985 = vmatprep.subr.mxu0 0.0
        %2986 = vmatpush1.msra.mxu0 %v2965
        %2987 = vmatprep.subr.mxu0 0.0
        %2988 = vmatpush1.msra.mxu0 %v2966
        %2989 = vmatprep.subr.mxu0 0.0
        %2990 = vmatpush1.msra.mxu0 %v2967
        %2991 = vmatprep.subr.mxu0 0.0
        %2992 = vmatpush1.msra.mxu0 %v2968
        %2993 = vmatprep.subr.mxu0 0.0
        %2994 = vmatpush1.msra.mxu0 %v2969
        %2995 = vmatprep.subr.mxu0 0.0
        %2996 = vmatpush1.msra.mxu0 %v2970
        %2997 = vmatprep.subr.mxu0 0.0
        %2998 = vmatpush1.msra.mxu0 %v2971
        %2999 = vmatprep.subr.mxu0 0.0
        %3000 = vmatpush1.msra.mxu0 %v2972
        %3001 = vmatprep.subr.mxu0 0.0
        %3002 = vmatpush1.msra.mxu0 %v2973
        %3003 = vmatprep.subr.mxu0 0.0
        %3004 = vmatpush1.msra.mxu0 %v2974
        %3005 = vmatprep.subr.mxu0 0.0
        %3006 = vmatpush1.msra.mxu0 %v2975
        %3007 = vmatprep.subr.mxu0 0.0
        %3008 = vmatpush1.msra.mxu0 %v2976
        %3009 = vmatprep.subr.mxu0 0.0
        %3010 = vmatpush1.msra.mxu0 %v2977
        %3011 = vmatprep.subr.mxu0 0.0
        %3012 = vmatpush1.msra.mxu0 %v2978
        %3013 = vmatprep.subr.mxu0 0.0
        %3014 = vmatpush1.msra.mxu0 %v2979
        %3015 = vmatprep.subr.mxu0 0.0
        %3016 = vmatpush1.msra.mxu0 0.0
        %3017 = vmatprep.subr.mxu0 0.0
        %3018 = vmatpush1.msra.mxu0 0.0
        %3019 = vmatprep.subr.mxu0 0.0
        %3020 = vmatpush1.msra.mxu0 0.0
        %3021 = vmatprep.subr.mxu0 0.0
        %3022 = vmatpush1.msra.mxu0 0.0
        %3023 = vmatprep.subr.mxu0 0.0
        %3024 = vmatpush1.msra.mxu0 0.0
        %3025 = vmatprep.subr.mxu0 0.0
        %3026 = vmatpush1.msra.mxu0 0.0
        %3027 = vmatprep.subr.mxu0 0.0
        %3028 = vmatpush1.msra.mxu0 0.0
        %3029 = vmatprep.subr.mxu0 0.0
        %3030 = vmatpush1.msra.mxu0 0.0
        %3031 = vmatprep.subr.mxu0 0.0
        %3032 = vmatpush1.msra.mxu0 0.0
        %3033 = vmatprep.subr.mxu0 0.0
        %3034 = vmatpush1.msra.mxu0 0.0
        %3035 = vmatprep.subr.mxu0 0.0
        %3036 = vmatpush1.msra.mxu0 0.0
        %3037 = vmatprep.subr.mxu0 0.0
        %3038 = vmatpush1.msra.mxu0 0.0
        %3039 = vmatprep.subr.mxu0 0.0
        %3040 = vmatpush1.msra.mxu0 0.0
        %3041 = vmatprep.subr.mxu0 0.0
        %3042 = vmatpush1.msra.mxu0 0.0
        %3043 = vmatprep.subr.mxu0 0.0
        %3044 = vmatpush1.msra.mxu0 0.0
        %3045 = vmatprep.subr.mxu0 0.0
        %3046 = vmatpush1.msra.mxu0 0.0
        %3047 = vmatprep.subr.mxu0 0.0
        %3048 = vmatpush1.msra.mxu0 0.0
        %3049 = vmatprep.mubr.f32.mxu0 0.0
        %3050 = vmatmul.mubr.f32.gmra.mrb[0].mxu0 %v2983
        %v3051 = vpop.f32.mrb[0].mxu0
        %v3052 = vadd.f32 %v2980, %v3051
        %v3053 = vpop.f32.mrb[0].mxu0
        %3054 = vdwg.mxu0
        %v3055 = vmax.f32 %v3052, 0.0
        %v3056 = vld [vmem:[%s13] sm:$0xff]
        %v3057 = vld [vmem:[%s13 + $0x8] sm:$0xff]
        %v3058 = vld [vmem:[%s13 + $0x10] sm:$0xff]
        %v3059 = vld [vmem:[%s13 + $0x18] sm:$0xff]
        %v3060 = vld [vmem:[%s13 + $0x20] sm:$0xff]
        %v3061 = vld [vmem:[%s13 + $0x28] sm:$0xff]
        %v3062 = vld [vmem:[%s13 + $0x30] sm:$0xff]
        %v3063 = vld [vmem:[%s13 + $0x38] sm:$0xff]
        %v3064 = vld [vmem:[%s13 + $0x40] sm:$0xff]
        %v3065 = vld [vmem:[%s13 + $0x48] sm:$0xff]
        %v3066 = vld [vmem:[%s13 + $0x50] sm:$0xf]
        %v3067 = vld [vmem:[%s14] sm:$0x1]
        %v3069 = vsel %vm1579, %v3055, 0
        %v3072 = vsel %vm1203, %v3066, 0
        %3074 = vmatprep.subr.mxu0 0.0
        %3075 = vmatpush1.msra.mxu0 %v3056
        %3076 = vmatprep.subr.mxu0 0.0
        %3077 = vmatpush1.msra.mxu0 %v3057
        %3078 = vmatprep.subr.mxu0 0.0
        %3079 = vmatpush1.msra.mxu0 %v3058
        %3080 = vmatprep.subr.mxu0 0.0
        %3081 = vmatpush1.msra.mxu0 %v3059
        %3082 = vmatprep.subr.mxu0 0.0
        %3083 = vmatpush1.msra.mxu0 %v3060
        %3084 = vmatprep.subr.mxu0 0.0
        %3085 = vmatpush1.msra.mxu0 %v3061
        %3086 = vmatprep.subr.mxu0 0.0
        %3087 = vmatpush1.msra.mxu0 %v3062
        %3088 = vmatprep.subr.mxu0 0.0
        %3089 = vmatpush1.msra.mxu0 %v3063
        %3090 = vmatprep.subr.mxu0 0.0
        %3091 = vmatpush1.msra.mxu0 %v3064
        %3092 = vmatprep.subr.mxu0 0.0
        %3093 = vmatpush1.msra.mxu0 %v3065
        %3094 = vmatprep.subr.mxu0 0.0
        %3095 = vmatpush1.msra.mxu0 %v3072
        %3096 = vmatprep.subr.mxu0 0.0
        %3097 = vmatpush1.msra.mxu0 0.0
        %3098 = vmatprep.subr.mxu0 0.0
        %3099 = vmatpush1.msra.mxu0 0.0
        %3100 = vmatprep.subr.mxu0 0.0
        %3101 = vmatpush1.msra.mxu0 0.0
        %3102 = vmatprep.subr.mxu0 0.0
        %3103 = vmatpush1.msra.mxu0 0.0
        %3104 = vmatprep.subr.mxu0 0.0
        %3105 = vmatpush1.msra.mxu0 0.0
        %3106 = vmatprep.subr.mxu0 0.0
        %3107 = vmatpush1.msra.mxu0 0.0
        %3108 = vmatprep.subr.mxu0 0.0
        %3109 = vmatpush1.msra.mxu0 0.0
        %3110 = vmatprep.subr.mxu0 0.0
        %3111 = vmatpush1.msra.mxu0 0.0
        %3112 = vmatprep.subr.mxu0 0.0
        %3113 = vmatpush1.msra.mxu0 0.0
        %3114 = vmatprep.subr.mxu0 0.0
        %3115 = vmatpush1.msra.mxu0 0.0
        %3116 = vmatprep.subr.mxu0 0.0
        %3117 = vmatpush1.msra.mxu0 0.0
        %3118 = vmatprep.subr.mxu0 0.0
        %3119 = vmatpush1.msra.mxu0 0.0
        %3120 = vmatprep.subr.mxu0 0.0
        %3121 = vmatpush1.msra.mxu0 0.0
        %3122 = vmatprep.subr.mxu0 0.0
        %3123 = vmatpush1.msra.mxu0 0.0
        %3124 = vmatprep.subr.mxu0 0.0
        %3125 = vmatpush1.msra.mxu0 0.0
        %3126 = vmatprep.subr.mxu0 0.0
        %3127 = vmatpush1.msra.mxu0 0.0
        %3128 = vmatprep.subr.mxu0 0.0
        %3129 = vmatpush1.msra.mxu0 0.0
        %3130 = vmatprep.subr.mxu0 0.0
        %3131 = vmatpush1.msra.mxu0 0.0
        %3132 = vmatprep.subr.mxu0 0.0
        %3133 = vmatpush1.msra.mxu0 0.0
        %3134 = vmatprep.subr.mxu0 0.0
        %3135 = vmatpush1.msra.mxu0 0.0
        %3136 = vmatprep.subr.mxu0 0.0
        %3137 = vmatpush1.msra.mxu0 0.0
        %3138 = vmatprep.mubr.f32.mxu0 0.0
        %3139 = vmatmul.mubr.f32.gmra.mrb[0].mxu0 %v3069
        %v3140 = vpop.f32.mrb[0].mxu0
        %v3141 = vadd.f32 %v3067, %v3140
        %v3142 = vpop.f32.mrb[0].mxu0
        %3143 = vdwg.mxu0
        %vm3144 = vcmask 8192
        %3145 = vst.msk [vmem:[%s486] sm:$0x1] %vm3144, %v3141
        %s3146 = sand.u32 %s357, 1
        %s3147 = scalar_lea.sflag [#allocation5], %s3146
        %s3148 = sand.u32 %s357, 1
        %s3149 = scalar_lea.vmem [#allocation4], %s3148
        // Predicated region
        $region81: #{cnet_forward.1} parent=79 // pred_check
          %p3150 = pneg %p367
        $region82: #{cnet_forward.1} parent=79 // pred_check_branch
          %3152 = sbr.rel (%p3150) target = $region84
        $region83: #{cnet_forward.1} parent=79 // pred_region
          %s3154 = ssub.s32 16, 16
          %3155 = vsyncadd %s3147, %s3154
          %s3156 = smul.addr %s29, 16
          %s3157 = scalar_lea.hbm %s15, %s3156
          %s3159 = sshll.u32 %s3149, 4
          %s3160 = int_to_ptr.vmem [resolvable:$true] %s3159
          %3162 = dma.vmem_to_hbm [thread:$0]  %s3160, 16, %s3157, %s3147
        $region84: #{cnet_forward.1} parent=79 // pred_fallthru
          _
      $region80: #{cnet_forward.1} parent=5 // pred_fallthru
        _
      %p3163 = scmp.le.s32.totalorder 2, %s24
      // Predicated region
      $region85: #{cnet_forward.1} parent=5 // pred_check
        %p3164 = pneg %p3163
      $region86: #{cnet_forward.1} parent=5 // pred_check_branch
        %3166 = sbr.rel (%p3164) target = $region88
      $region87: #{cnet_forward.1} parent=5 // pred_region
        %s3167 = ssub.s32 %s24, 2
        // Predicated region
        $region89: #{cnet_forward.1} parent=87 // pred_check
          %p3168 = pneg %p373
        $region90: #{cnet_forward.1} parent=87 // pred_check_branch
          %3170 = sbr.rel (%p3168) target = $region92
        $region91: #{cnet_forward.1} parent=87 // pred_region
          %s3171 = sand.u32 %s358, 1
          %s3172 = scalar_lea.sflag [#allocation5], %s3171
          %s3173 = sand.u32 %s358, 1
          %s3174 = scalar_lea.vmem [#allocation4], %s3173
          %3175 = dma.done %s3172, 16
        $region92: #{cnet_forward.1} parent=87 // pred_fallthru
          _
      $region88: #{cnet_forward.1} parent=5 // pred_fallthru
        _
    $region6: #{cnet_forward.1} parent=1 // loop_footer
      %s28 = sadd.s32 1, %s24
    $region7: #{cnet_forward.1} parent=1 // loop_footer_branch
      %23 = sbr.rel target = $region3
    $region8: #{cnet_forward.1} parent=1 // loop_exit
      _
    %3176 = vsyncpa [#allocation5], 1
    %s3177 = scalar_lea.sflag [#allocation5], 1
    %3178 = vsyncpa %s3177, 1

</llo_original>
